<compile_context>
chip_gen: v6e
topology: v6e:2x2x1
jax: 0.10.0
libtpu: 0.0.40
codegen_flags: <defaults>
</compile_context>

<pallas_src>
import jax
import jax.numpy as jnp
from jax.experimental import pallas as pl
from jax.experimental.pallas import tpu as pltpu


C_GELU = 0.7978845608028654  # sqrt(2/pi)
EPS_LN = 1e-6
EPS_RMS = 1e-6


def _largest_tile(total, target, quantum=128):
    """Largest multiple of `quantum` dividing `total` that is <= target (or `total` itself)."""
    if total <= target:
        return total
    t = (target // quantum) * quantum
    while t >= quantum:
        if total % t == 0:
            return t
        t -= quantum
    return total


# ----------------------------- kernel 1: projection ----------------------------------
def _make_proj_kernel(TL, C, D, tile_n, NQ, NQKV, NT):
    nh = tile_n // D  # heads per column tile

    def kernel(x_ref, shift_ref, scale_ref, w1_ref, b1_ref, qw_ref, kw_ref,
               cos_ref, sin_ref, perm_ref, w2m_ref, b2_ref,
               qkv_ref, part_ref, xmod_scr, pacc_scr):
        n = pl.program_id(2)

        # LayerNorm (no affine) + modulate, once per (b, L-tile); kept in VMEM scratch.
        @pl.when(n == 0)
        def _():
            x = x_ref[0]                                          # (TL, C) f32
            mu = jnp.mean(x, axis=-1, keepdims=True)
            xc = x - mu
            var = jnp.mean(xc * xc, axis=-1, keepdims=True)
            xm = xc * jax.lax.rsqrt(var + EPS_LN) * (1.0 + scale_ref[0]) + shift_ref[0]
            xmod_scr[...] = xm.astype(jnp.bfloat16)

        # One output-column tile of linear1 (bf16 MXU, f32 accumulation).
        y = jnp.dot(xmod_scr[...], w1_ref[...],
                    preferred_element_type=jnp.float32) + b1_ref[...]      # (TL, tile_n)

        # ---- q / k tiles: per-head RMS norm + RoPE, written head-major ---------------
        @pl.when(n < 2 * NQ)
        def _():
            w = jnp.where(n < NQ, qw_ref[...], kw_ref[...])                 # (1, D)
            cos = cos_ref[...]
            sin = sin_ref[...]
            perm = perm_ref[...]
            for hh in range(nh):                                            # static unroll
                t = y[:, hh * D:(hh + 1) * D]                               # (TL, D) f32
                inv = jax.lax.rsqrt(jnp.mean(t * t, axis=-1, keepdims=True) + EPS_RMS)
                t = t * inv * w
                # rot[2i] = -t[2i+1], rot[2i+1] = t[2i]  (pair-swap permutation matmul)
                rot = jnp.dot(t, perm, preferred_element_type=jnp.float32)
                qkv_ref[0, hh] = (t * cos + rot * sin).astype(jnp.bfloat16)

        # ---- v tiles: raw write, head-major ------------------------------------------
        @pl.when(jnp.logical_and(n >= 2 * NQ, n < NQKV))
        def _():
            for hh in range(nh):
                qkv_ref[0, hh] = y[:, hh * D:(hh + 1) * D].astype(jnp.bfloat16)

        # ---- mlp tiles: gelu_tanh, folded into the mlp half of linear2 ----------------
        @pl.when(n == NQKV)
        def _():
            pacc_scr[...] = jnp.zeros((TL, C), jnp.float32) + b2_ref[...]

        @pl.when(n >= NQKV)
        def _():
            act = 0.5 * y * (1.0 + jnp.tanh(C_GELU * (y + 0.044715 * y * y * y)))
            pacc_scr[...] += jnp.dot(act.astype(jnp.bfloat16), w2m_ref[...],
                                     preferred_element_type=jnp.float32)

        @pl.when(n == NT - 1)
        def _():
            part_ref[0] = pacc_scr[...].astype(jnp.bfloat16)

    return kernel


# ------------------- kernel 2: flash attention + linear2(attn) + residual ------------
def _make_attn_kernel(scale_attn):
    def kernel(q_ref, k_ref, v_ref, w2a_ref, x_ref, part_ref, gate_ref,
               o_ref, m_scr, l_scr, acc_scr, oacc_scr):
        h_idx = pl.program_id(2)
        j_idx = pl.program_id(3)
        last_h = pl.num_programs(2) - 1
        last_j = pl.num_programs(3) - 1

        @pl.when(jnp.logical_and(h_idx == 0, j_idx == 0))
        def _():
            oacc_scr[...] = jnp.zeros_like(oacc_scr)

        @pl.when(j_idx == 0)
        def _():
            m_scr[...] = jnp.full_like(m_scr, -1e30)
            l_scr[...] = jnp.zeros_like(l_scr)
            acc_scr[...] = jnp.zeros_like(acc_scr)

        # ---- one K/V tile of flash attention for head h (q/k already normed + roped) --
        s = jax.lax.dot_general(q_ref[0, 0], k_ref[0, 0], (((1,), (1,)), ((), ())),
                                preferred_element_type=jnp.float32) * scale_attn
        m_prev = m_scr[...]
        m_new = jnp.maximum(m_prev, jnp.max(s, axis=-1, keepdims=True))
        alpha = jnp.exp(m_prev - m_new)
        p = jnp.exp(s - m_new)
        l_scr[...] = alpha * l_scr[...] + jnp.sum(p, axis=-1, keepdims=True)
        acc_scr[...] = alpha * acc_scr[...] + jnp.dot(
            p.astype(jnp.bfloat16), v_ref[0, 0], preferred_element_type=jnp.float32)
        m_scr[...] = m_new

        # ---- head epilogue: fold this head into the attn half of linear2 ---------------
        @pl.when(j_idx == last_j)
        def _():
            attn_h = acc_scr[...] / l_scr[...]                             # exact normalize
            oacc_scr[...] += jnp.dot(attn_h.astype(jnp.bfloat16), w2a_ref[...],
                                     preferred_element_type=jnp.float32)

        # ---- final epilogue: gated residual --------------------------------------------
        @pl.when(jnp.logical_and(h_idx == last_h, j_idx == last_j))
        def _():
            o_ref[0] = x_ref[0] + gate_ref[0] * (oacc_scr[...] +
                                                 part_ref[0].astype(jnp.float32))

    return kernel


# --------------------------------- wrapper -------------------------------------------
def mm_single_stream_block(x, vec, params, cos_img, sin_img, *, heads_num, txt_len,
                           tile_l=None, tile_n=None, tile_q=None, tile_kv=None,
                           vmem_limit_bytes=None):
    B, L, C = x.shape
    H = heads_num
    D = C // H
    M = params["w1"].shape[1] - 3 * C
    f32, bf16 = jnp.float32, jnp.bfloat16

    assert C == H * D and C % 128 == 0
    assert D % 128 == 0, "head_dim must be a multiple of 128 for per-head BlockSpecs"
    assert cos_img.shape == (L - txt_len, D) and sin_img.shape == (L - txt_len, D)

    # ---- generation-aware tile / VMEM budget (v5e/v6e: 128 MiB, v7x: 64 MiB per TC) ----
    try:
        info = pltpu.get_tpu_info()
        vmem_cap = int(getattr(info, "vmem_capacity_bytes", 128 * 1024 * 1024))
    except Exception:
        vmem_cap = 128 * 1024 * 1024
    small_vmem = vmem_cap <= 64 * 1024 * 1024
    if vmem_limit_bytes is None:
        vmem_limit_bytes = int(min(vmem_cap * 3 // 4, 100 * 1024 * 1024))
    if tile_l is None:
        tile_l = _largest_tile(L, 384 if small_vmem else 512)
    if tile_q is None:
        tile_q = _largest_tile(L, 256 if small_vmem else 384)
    if tile_kv is None:
        tile_kv = _largest_tile(L, 512)
    if tile_n is None:
        tile_n = 2 * D if (C % (2 * D) == 0 and M % (2 * D) == 0) else D

    assert L % tile_l == 0 and L % tile_q == 0 and L % tile_kv == 0
    assert tile_n % D == 0 and C % tile_n == 0 and M % tile_n == 0

    # ---- modulation hoisted out of the kernels (tiny matmul, poor MXU utilization) -----
    v_silu = vec * jax.nn.sigmoid(vec)
    mod = jnp.dot(v_silu, params["wmod"]) + params["bmod"]                 # (B, 3C) f32
    shift = mod[:, None, 0:C]
    scale = mod[:, None, C:2 * C]
    gate = mod[:, None, 2 * C:3 * C]

    # ---- weights: bf16 for the MXU, f32 biases ------------------------------------------
    w1 = params["w1"].astype(bf16)                    # (C, 3C + M)
    b1 = params["b1"].astype(f32)                     # (1, 3C + M)
    w2a = params["w2"][:C, :].astype(bf16)            # (C, C)  attn half of linear2
    w2m = params["w2"][C:, :].astype(bf16)            # (M, C)  mlp  half of linear2
    b2 = params["b2"].astype(f32)                     # (1, C)
    qw = params["qw"].reshape(1, D).astype(f32)
    kw = params["kw"].reshape(1, D).astype(f32)

    # ---- RoPE tables padded to full L (identity rotation on the txt rows) ---------------
    cos_full = jnp.concatenate([cos_img.astype(f32), jnp.ones((txt_len, D), f32)], axis=0)
    sin_full = jnp.concatenate([sin_img.astype(f32), jnp.zeros((txt_len, D), f32)], axis=0)
    # Pair-swap-with-sign permutation: rot = t @ P  with rot[2i] = -t[2i+1], rot[2i+1] = t[2i].
    col = jnp.arange(D)
    rope_perm = jnp.zeros((D, D), f32).at[col ^ 1, col].set(
        jnp.where(col % 2 == 0, -1.0, 1.0).astype(f32))

    # ============================ kernel 1: projection ===================================
    NI = L // tile_l
    NQ = C // tile_n
    NQKV = 3 * NQ
    NT = NQKV + M // tile_n
    nh = tile_n // D

    proj = pl.pallas_call(
        _make_proj_kernel(tile_l, C, D, tile_n, NQ, NQKV, NT),
        out_shape=(jax.ShapeDtypeStruct((B, 3 * H, L, D), bf16),  # q|k|v head-major, normed+roped
                   jax.ShapeDtypeStruct((B, L, C), bf16)),        # b2 + gelu(mlp) @ W2[C:]
        grid_spec=pltpu.PrefetchScalarGridSpec(
            num_scalar_prefetch=0,
            grid=(B, NI, NT),
            in_specs=[
                pl.BlockSpec((1, tile_l, C), lambda b, i, n: (b, i, 0)),        # x
                pl.BlockSpec((1, 1, C), lambda b, i, n: (b, 0, 0)),             # shift
                pl.BlockSpec((1, 1, C), lambda b, i, n: (b, 0, 0)),             # scale
                pl.BlockSpec((C, tile_n), lambda b, i, n: (0, n)),              # W1 col tile
                pl.BlockSpec((1, tile_n), lambda b, i, n: (0, n)),              # b1 col tile
                pl.BlockSpec((1, D), lambda b, i, n: (0, 0)),                   # q_norm weight
                pl.BlockSpec((1, D), lambda b, i, n: (0, 0)),                   # k_norm weight
                pl.BlockSpec((tile_l, D), lambda b, i, n: (i, 0)),              # cos rows
                pl.BlockSpec((tile_l, D), lambda b, i, n: (i, 0)),              # sin rows
                pl.BlockSpec((D, D), lambda b, i, n: (0, 0)),                   # RoPE pair-swap
                pl.BlockSpec((tile_n, C),
                             lambda b, i, n: (jnp.maximum(n - NQKV, 0), 0)),    # W2 mlp rows
                pl.BlockSpec((1, C), lambda b, i, n: (0, 0)),                   # b2
            ],
            out_specs=[
                pl.BlockSpec((1, nh, tile_l, D),
                             lambda b, i, n: (b, jnp.minimum(n, NQKV - 1), i, 0)),
                pl.BlockSpec((1, tile_l, C), lambda b, i, n: (b, i, 0)),
            ],
            scratch_shapes=[pltpu.VMEM((tile_l, C), bf16),     # modulated x (bf16)
                            pltpu.VMEM((tile_l, C), f32)],     # mlp-half accumulator
        ),
        compiler_params=pltpu.CompilerParams(
            dimension_semantics=("parallel", "parallel", "arbitrary"),
            vmem_limit_bytes=vmem_limit_bytes),
    )
    qkv, part = proj(x, shift, scale, w1, b1, qw, kw, cos_full, sin_full, rope_perm, w2m, b2)

    # ================== kernel 2: flash attention + linear2(attn) + residual ==============
    NIQ = L // tile_q
    NJ = L // tile_kv

    attn_call = pl.pallas_call(
        _make_attn_kernel(float(D) ** -0.5),
        out_shape=jax.ShapeDtypeStruct((B, L, C), f32),
        grid_spec=pltpu.PrefetchScalarGridSpec(
            num_scalar_prefetch=0,
            grid=(B, NIQ, H, NJ),
            in_specs=[
                pl.BlockSpec((1, 1, tile_q, D), lambda b, i, h, j: (b, h, i, 0)),           # q
                pl.BlockSpec((1, 1, tile_kv, D), lambda b, i, h, j: (b, H + h, j, 0)),      # k
                pl.BlockSpec((1, 1, tile_kv, D), lambda b, i, h, j: (b, 2 * H + h, j, 0)),  # v
                pl.BlockSpec((D, C), lambda b, i, h, j: (h, 0)),                 # W2 attn rows
                pl.BlockSpec((1, tile_q, C), lambda b, i, h, j: (b, i, 0)),      # x residual
                pl.BlockSpec((1, tile_q, C), lambda b, i, h, j: (b, i, 0)),      # part (mlp half)
                pl.BlockSpec((1, 1, C), lambda b, i, h, j: (b, 0, 0)),           # gate
            ],
            out_specs=pl.BlockSpec((1, tile_q, C), lambda b, i, h, j: (b, i, 0)),
            scratch_shapes=[
                pltpu.VMEM((tile_q, 1), f32),    # running max
                pltpu.VMEM((tile_q, 1), f32),    # running sum
                pltpu.VMEM((tile_q, D), f32),    # running weighted V
                pltpu.VMEM((tile_q, C), f32),    # attn half of linear2
            ],
        ),
        compiler_params=pltpu.CompilerParams(
            dimension_semantics=("parallel", "parallel", "arbitrary", "arbitrary"),
            vmem_limit_bytes=vmem_limit_bytes),
    )
    return attn_call(qkv, qkv, qkv, w2a, x, part, gate)


# ----------------------------- pure-JAX reference ------------------------------------
# Mirrors the module math in f32, with bf16 casts at the same matmul operands as the
# kernels (bf16 MXU inputs, f32 accumulation), so a tight tolerance stays meaningful.
def ref_forward(x, vec, params, cos_img, sin_img, *, heads_num, txt_len):
    B, L, C = x.shape
    H = heads_num
    D = C // H
    f32, bf = jnp.float32, jnp.bfloat16

    def mm(a, b):
        return jnp.dot(a.astype(bf), b.astype(bf), preferred_element_type=f32)

    v_silu = vec * jax.nn.sigmoid(vec)
    mod = jnp.dot(v_silu, params["wmod"]) + params["bmod"]
    shift, scale, gate = mod[:, :C], mod[:, C:2 * C], mod[:, 2 * C:]

    mu = jnp.mean(x, axis=-1, keepdims=True)
    var = jnp.mean((x - mu) ** 2, axis=-1, keepdims=True)
    xm = (x - mu) * jax.lax.rsqrt(var + EPS_LN) * (1.0 + scale[:, None, :]) + shift[:, None, :]

    y = mm(xm, params["w1"]) + params["b1"][0]
    q = y[..., :C]
    k = y[..., C:2 * C]
    v4 = y[..., 2 * C:3 * C].astype(bf).reshape(B, L, H, D)     # v stored bf16 (as in kernel)
    mlp = y[..., 3 * C:]

    def rms(t, w):                                   # per-head RMS norm, shared weight (1, D)
        t4 = t.reshape(B, L, H, D)
        inv = jax.lax.rsqrt(jnp.mean(t4 * t4, axis=-1, keepdims=True) + EPS_RMS)
        return t4 * inv * w[0]

    q4 = rms(q, params["qw"])
    k4 = rms(k, params["kw"])

    cos_full = jnp.concatenate([cos_img, jnp.ones((txt_len, D), f32)], axis=0)
    sin_full = jnp.concatenate([sin_img, jnp.zeros((txt_len, D), f32)], axis=0)

    def rope(t4):                                    # interleaved pairs, img rows only
        tp = t4.reshape(B, L, H, D // 2, 2)
        rot = jnp.stack([-tp[..., 1], tp[..., 0]], axis=-1).reshape(B, L, H, D)
        return t4 * cos_full[None, :, None, :] + rot * sin_full[None, :, None, :]

    q4 = rope(q4).astype(bf)
    k4 = rope(k4).astype(bf)

    s = jnp.einsum("blhd,bmhd->bhlm", q4, k4,
                   preferred_element_type=f32) * (float(D) ** -0.5)
    p = jax.nn.softmax(s, axis=-1)
    attn = jnp.einsum("bhlm,bmhd->blhd", p.astype(bf), v4,
                      preferred_element_type=f32).reshape(B, L, C)

    mlp_act = 0.5 * mlp * (1.0 + jnp.tanh(C_GELU * (mlp + 0.044715 * mlp ** 3)))
    part = (params["b2"][0] + mm(mlp_act, params["w2"][C:, :])).astype(bf).astype(f32)
    out2 = mm(attn, params["w2"][:C, :]) + part
    return x + gate[:, None, :] * out2


# --------------------------------------- main -----------------------------------------
if __name__ == "__main__":
    # Small shapes, but with head_dim=128 / C a multiple of 128 so the per-head BlockSpecs
    # are lane-aligned (matches the real HunyuanVideo head_dim).
    B, L, C, H = 2, 256, 256, 2
    D = C // H                 # 128
    M = 4 * C                  # mlp_hidden_dim (mlp_width_ratio = 4.0)
    TXT = 64
    IMG = L - TXT

    key = jax.random.PRNGKey(0)
    ks = jax.random.split(key, 10)
    s = 0.05

    x = jax.random.normal(ks[0], (B, L, C), dtype=jnp.float32)
    vec = jax.random.normal(ks[1], (B, C), dtype=jnp.float32)

    params = {
        "wmod": s * jax.random.normal(ks[2], (C, 3 * C), dtype=jnp.float32),
        "bmod": s * jax.random.normal(ks[3], (1, 3 * C), dtype=jnp.float32),
        "w1":   s * jax.random.normal(ks[4], (C, 3 * C + M), dtype=jnp.float32),
        "b1":   s * jax.random.normal(ks[5], (1, 3 * C + M), dtype=jnp.float32),
        "w2":   s * jax.random.normal(ks[6], (C + M, C), dtype=jnp.float32),
        "b2":   s * jax.random.normal(ks[7], (1, C), dtype=jnp.float32),
        # q_norm / k_norm affine weights (head_dim,), shared across heads
        "qw": 1.0 + 0.1 * jax.random.normal(ks[8], (1, D), dtype=jnp.float32),
        "kw": 1.0 + 0.1 * jax.random.normal(ks[9], (1, D), dtype=jnp.float32),
    }

    # RoPE tables for the img tokens: interleaved-repeated cos/sin, shape (IMG, D)
    pos = jnp.arange(IMG, dtype=jnp.float32)[:, None]
    freqs = 1.0 / (10000.0 ** (jnp.arange(0, D, 2, dtype=jnp.float32) / D))
    ang = pos * freqs[None, :]
    cos_img = jnp.repeat(jnp.cos(ang), 2, axis=1)
    sin_img = jnp.repeat(jnp.sin(ang), 2, axis=1)

    out = mm_single_stream_block(x, vec, params, cos_img, sin_img,
                                 heads_num=H, txt_len=TXT)
    out = jax.block_until_ready(out)

    ref = ref_forward(x, vec, params, cos_img, sin_img, heads_num=H, txt_len=TXT)
    err = float(jnp.max(jnp.abs(out - ref)))
    assert out.shape == (B, L, C)
    assert err < 3e-2, f"max abs err {err}"
    print("KERNEL_OK")
</pallas_src>

<mosaic_0001>
module attributes {stable_mosaic.version = 11 : i64} {
  func.func @kernel(%arg0: i32, %arg1: i32, %arg2: i32, %arg3: memref<1x256x256xf32, #tpu.memory_space<vmem>>, %arg4: memref<1x1x256xf32, #tpu.memory_space<vmem>>, %arg5: memref<1x1x256xf32, #tpu.memory_space<vmem>>, %arg6: memref<256x256xbf16, #tpu.memory_space<vmem>>, %arg7: memref<1x256xf32, #tpu.memory_space<vmem>>, %arg8: memref<1x128xf32, #tpu.memory_space<vmem>>, %arg9: memref<1x128xf32, #tpu.memory_space<vmem>>, %arg10: memref<256x128xf32, #tpu.memory_space<vmem>>, %arg11: memref<256x128xf32, #tpu.memory_space<vmem>>, %arg12: memref<128x128xf32, #tpu.memory_space<vmem>>, %arg13: memref<256x256xbf16, #tpu.memory_space<vmem>>, %arg14: memref<1x256xf32, #tpu.memory_space<vmem>>, %arg15: memref<1x2x256x128xbf16, #tpu.memory_space<vmem>>, %arg16: memref<1x256x256xbf16, #tpu.memory_space<vmem>>, %arg17: memref<256x256xbf16, #tpu.memory_space<vmem>>, %arg18: memref<256x256xf32, #tpu.memory_space<vmem>>) attributes {dimension_semantics = [#tpu.dimension_semantics<parallel>, #tpu.dimension_semantics<parallel>, #tpu.dimension_semantics<arbitrary>], iteration_bounds = array<i64: 2, 1, 7>, scalar_prefetch = 0 : i64, scratch_operands = 2 : i64, tpu.core_type = #tpu.core_type<tc>, window_params = [{transform_indices = @transform_0, window_bounds = array<i64: 1, 256, 256>}, {transform_indices = @transform_1, window_bounds = array<i64: 1, 1, 256>}, {transform_indices = @transform_2, window_bounds = array<i64: 1, 1, 256>}, {transform_indices = @transform_3, window_bounds = array<i64: 256, 256>}, {transform_indices = @transform_4, window_bounds = array<i64: 1, 256>}, {pipeline_mode = #tpu.pipeline_mode<synchronous>, transform_indices = @transform_5, window_bounds = array<i64: 1, 128>}, {pipeline_mode = #tpu.pipeline_mode<synchronous>, transform_indices = @transform_6, window_bounds = array<i64: 1, 128>}, {transform_indices = @transform_7, window_bounds = array<i64: 256, 128>}, {transform_indices = @transform_8, window_bounds = array<i64: 256, 128>}, {pipeline_mode = #tpu.pipeline_mode<synchronous>, transform_indices = @transform_9, window_bounds = array<i64: 128, 128>}, {transform_indices = @transform_10, window_bounds = array<i64: 256, 256>}, {pipeline_mode = #tpu.pipeline_mode<synchronous>, transform_indices = @transform_11, window_bounds = array<i64: 1, 256>}, {transform_indices = @transform_12, window_bounds = array<i64: 1, 2, 256, 128>}, {transform_indices = @transform_13, window_bounds = array<i64: 1, 256, 256>}]} {
    %c0_i32 = arith.constant 0 : i32
    %0 = arith.cmpi eq, %arg2, %c0_i32 : i32
    %1 = arith.extui %0 : i1 to i32
    %c0_i32_0 = arith.constant 0 : i32
    %2 = arith.cmpi ne, %1, %c0_i32_0 : i32
    scf.if %2 {
      %c0_14 = arith.constant 0 : index
      %c0_15 = arith.constant 0 : index
      %c0_16 = arith.constant 0 : index
      %26 = vector.load %arg3[%c0_14, %c0_15, %c0_16] : memref<1x256x256xf32, #tpu.memory_space<vmem>>, vector<1x256x256xf32>
      %27 = vector.shape_cast %26 : vector<1x256x256xf32> to vector<256x256xf32>
      %cst_17 = arith.constant dense<0.000000e+00> : vector<256xf32>
      %28 = vector.multi_reduction <add>, %27, %cst_17 [1] : vector<256x256xf32> to vector<256xf32>
      %29 = vector.shape_cast %28 : vector<256xf32> to vector<256x1xf32>
      %cst_18 = arith.constant 2.560000e+02 : f32
      %30 = vector.broadcast %cst_18 : f32 to vector<256x1xf32>
      %31 = arith.divf %29, %30 : vector<256x1xf32>
      %32 = vector.broadcast %31 : vector<256x1xf32> to vector<256x256xf32>
      %33 = arith.subf %27, %32 : vector<256x256xf32>
      %34 = arith.mulf %33, %33 : vector<256x256xf32>
      %cst_19 = arith.constant dense<0.000000e+00> : vector<256xf32>
      %35 = vector.multi_reduction <add>, %34, %cst_19 [1] : vector<256x256xf32> to vector<256xf32>
      %36 = vector.shape_cast %35 : vector<256xf32> to vector<256x1xf32>
      %cst_20 = arith.constant 2.560000e+02 : f32
      %37 = vector.broadcast %cst_20 : f32 to vector<256x1xf32>
      %38 = arith.divf %36, %37 : vector<256x1xf32>
      %cst_21 = arith.constant 9.99999997E-7 : f32
      %39 = vector.broadcast %cst_21 : f32 to vector<256x1xf32>
      %40 = arith.addf %38, %39 : vector<256x1xf32>
      %41 = math.rsqrt %40 : vector<256x1xf32>
      %42 = vector.broadcast %41 : vector<256x1xf32> to vector<256x256xf32>
      %43 = arith.mulf %33, %42 : vector<256x256xf32>
      %c0_22 = arith.constant 0 : index
      %c0_23 = arith.constant 0 : index
      %c0_24 = arith.constant 0 : index
      %44 = vector.load %arg5[%c0_22, %c0_23, %c0_24] : memref<1x1x256xf32, #tpu.memory_space<vmem>>, vector<1x1x256xf32>
      %45 = vector.shape_cast %44 : vector<1x1x256xf32> to vector<1x256xf32>
      %cst_25 = arith.constant 1.000000e+00 : f32
      %46 = vector.broadcast %cst_25 : f32 to vector<1x256xf32>
      %47 = arith.addf %46, %45 : vector<1x256xf32>
      %48 = vector.broadcast %47 : vector<1x256xf32> to vector<256x256xf32>
      %49 = arith.mulf %43, %48 : vector<256x256xf32>
      %c0_26 = arith.constant 0 : index
      %c0_27 = arith.constant 0 : index
      %c0_28 = arith.constant 0 : index
      %50 = vector.load %arg4[%c0_26, %c0_27, %c0_28] : memref<1x1x256xf32, #tpu.memory_space<vmem>>, vector<1x1x256xf32>
      %51 = vector.shape_cast %50 : vector<1x1x256xf32> to vector<1x256xf32>
      %52 = vector.broadcast %51 : vector<1x256xf32> to vector<256x256xf32>
      %53 = arith.addf %49, %52 : vector<256x256xf32>
      %54 = arith.truncf %53 : vector<256x256xf32> to vector<256x256xbf16>
      %c0_29 = arith.constant 0 : index
      %c0_30 = arith.constant 0 : index
      %55 = vector.load %arg17[%c0_29, %c0_30] : memref<256x256xbf16, #tpu.memory_space<vmem>>, vector<256x256xbf16>
      tpu.vector_store %arg17[%c0_29, %c0_30], %54 {strides = array<i32>} : memref<256x256xbf16, #tpu.memory_space<vmem>>, vector<256x256xbf16>,
    } else {
    }
    %c0 = arith.constant 0 : index
    %c0_1 = arith.constant 0 : index
    %3 = vector.load %arg17[%c0, %c0_1] : memref<256x256xbf16, #tpu.memory_space<vmem>>, vector<256x256xbf16>
    %c0_2 = arith.constant 0 : index
    %c0_3 = arith.constant 0 : index
    %4 = vector.load %arg6[%c0_2, %c0_3] : memref<256x256xbf16, #tpu.memory_space<vmem>>, vector<256x256xbf16>
    %cst = arith.constant dense<0.000000e+00> : vector<256x256xf32>
    %5 = tpu.matmul %3, %4, %cst {dimension_numbers = #tpu.dot_dimension_numbers<[1], [0], [0], [1], [0, 0, 1, 1], [], []>} : vector<256x256xbf16>, vector<256x256xbf16>, vector<256x256xf32> -> vector<256x256xf32>
    %c0_4 = arith.constant 0 : index
    %c0_5 = arith.constant 0 : index
    %6 = vector.load %arg7[%c0_4, %c0_5] : memref<1x256xf32, #tpu.memory_space<vmem>>, vector<1x256xf32>
    %7 = vector.broadcast %6 : vector<1x256xf32> to vector<256x256xf32>
    %8 = arith.addf %5, %7 : vector<256x256xf32>
    %c2_i32 = arith.constant 2 : i32
    %9 = arith.cmpi slt, %arg2, %c2_i32 : i32
    %10 = arith.extui %9 : i1 to i32
    %c0_i32_6 = arith.constant 0 : i32
    %11 = arith.cmpi ne, %10, %c0_i32_6 : i32
    scf.if %11 {
      %c1_i32 = arith.constant 1 : i32
      %26 = arith.cmpi slt, %arg2, %c1_i32 : i32
      %c0_14 = arith.constant 0 : index
      %c0_15 = arith.constant 0 : index
      %27 = vector.load %arg8[%c0_14, %c0_15] : memref<1x128xf32, #tpu.memory_space<vmem>>, vector<1x128xf32>
      %c0_16 = arith.constant 0 : index
      %c0_17 = arith.constant 0 : index
      %28 = vector.load %arg9[%c0_16, %c0_17] : memref<1x128xf32, #tpu.memory_space<vmem>>, vector<1x128xf32>
      %29 = arith.select %26, %27, %28 : vector<1x128xf32>
      %c0_18 = arith.constant 0 : index
      %c0_19 = arith.constant 0 : index
      %30 = vector.load %arg10[%c0_18, %c0_19] : memref<256x128xf32, #tpu.memory_space<vmem>>, vector<256x128xf32>
      %c0_20 = arith.constant 0 : index
      %c0_21 = arith.constant 0 : index
      %31 = vector.load %arg11[%c0_20, %c0_21] : memref<256x128xf32, #tpu.memory_space<vmem>>, vector<256x128xf32>
      %c0_22 = arith.constant 0 : index
      %c0_23 = arith.constant 0 : index
      %32 = vector.load %arg12[%c0_22, %c0_23] : memref<128x128xf32, #tpu.memory_space<vmem>>, vector<128x128xf32>
      %33 = vector.extract_strided_slice %8 {offsets = [0, 0], sizes = [256, 128], strides = [1, 1]} : vector<256x256xf32> to vector<256x128xf32>
      %34 = arith.mulf %33, %33 : vector<256x128xf32>
      %cst_24 = arith.constant dense<0.000000e+00> : vector<256xf32>
      %35 = vector.multi_reduction <add>, %34, %cst_24 [1] : vector<256x128xf32> to vector<256xf32>
      %36 = vector.shape_cast %35 : vector<256xf32> to vector<256x1xf32>
      %cst_25 = arith.constant 1.280000e+02 : f32
      %37 = vector.broadcast %cst_25 : f32 to vector<256x1xf32>
      %38 = arith.divf %36, %37 : vector<256x1xf32>
      %cst_26 = arith.constant 9.99999997E-7 : f32
      %39 = vector.broadcast %cst_26 : f32 to vector<256x1xf32>
      %40 = arith.addf %38, %39 : vector<256x1xf32>
      %41 = math.rsqrt %40 : vector<256x1xf32>
      %42 = vector.broadcast %41 : vector<256x1xf32> to vector<256x128xf32>
      %43 = arith.mulf %33, %42 : vector<256x128xf32>
      %44 = vector.broadcast %29 : vector<1x128xf32> to vector<256x128xf32>
      %45 = arith.mulf %43, %44 : vector<256x128xf32>
      %cst_27 = arith.constant dense<0.000000e+00> : vector<256x128xf32>
      %46 = tpu.matmul %45, %32, %cst_27 {dimension_numbers = #tpu.dot_dimension_numbers<[1], [0], [0], [1], [0, 0, 1, 1], [], []>} : vector<256x128xf32>, vector<128x128xf32>, vector<256x128xf32> -> vector<256x128xf32>
      %47 = arith.mulf %45, %30 : vector<256x128xf32>
      %48 = arith.mulf %46, %31 : vector<256x128xf32>
      %49 = arith.addf %47, %48 : vector<256x128xf32>
      %50 = arith.truncf %49 : vector<256x128xf32> to vector<256x128xbf16>
      %c0_28 = arith.constant 0 : index
      %c0_29 = arith.constant 0 : index
      %c0_30 = arith.constant 0 : index
      %c0_31 = arith.constant 0 : index
      %51 = vector.load %arg15[%c0_28, %c0_29, %c0_30, %c0_31] : memref<1x2x256x128xbf16, #tpu.memory_space<vmem>>, vector<1x1x256x128xbf16>
      %52 = vector.shape_cast %51 : vector<1x1x256x128xbf16> to vector<256x128xbf16>
      %53 = vector.shape_cast %50 : vector<256x128xbf16> to vector<1x1x256x128xbf16>
      tpu.vector_store %arg15[%c0_28, %c0_29, %c0_30, %c0_31], %53 {strides = array<i32>} : memref<1x2x256x128xbf16, #tpu.memory_space<vmem>>, vector<1x1x256x128xbf16>,
      %54 = vector.extract_strided_slice %8 {offsets = [0, 128], sizes = [256, 128], strides = [1, 1]} : vector<256x256xf32> to vector<256x128xf32>
      %55 = arith.mulf %54, %54 : vector<256x128xf32>
      %cst_32 = arith.constant dense<0.000000e+00> : vector<256xf32>
      %56 = vector.multi_reduction <add>, %55, %cst_32 [1] : vector<256x128xf32> to vector<256xf32>
      %57 = vector.shape_cast %56 : vector<256xf32> to vector<256x1xf32>
      %cst_33 = arith.constant 1.280000e+02 : f32
      %58 = vector.broadcast %cst_33 : f32 to vector<256x1xf32>
      %59 = arith.divf %57, %58 : vector<256x1xf32>
      %cst_34 = arith.constant 9.99999997E-7 : f32
      %60 = vector.broadcast %cst_34 : f32 to vector<256x1xf32>
      %61 = arith.addf %59, %60 : vector<256x1xf32>
      %62 = math.rsqrt %61 : vector<256x1xf32>
      %63 = vector.broadcast %62 : vector<256x1xf32> to vector<256x128xf32>
      %64 = arith.mulf %54, %63 : vector<256x128xf32>
      %65 = vector.broadcast %29 : vector<1x128xf32> to vector<256x128xf32>
      %66 = arith.mulf %64, %65 : vector<256x128xf32>
      %cst_35 = arith.constant dense<0.000000e+00> : vector<256x128xf32>
      %67 = tpu.matmul %66, %32, %cst_35 {dimension_numbers = #tpu.dot_dimension_numbers<[1], [0], [0], [1], [0, 0, 1, 1], [], []>} : vector<256x128xf32>, vector<128x128xf32>, vector<256x128xf32> -> vector<256x128xf32>
      %68 = arith.mulf %66, %30 : vector<256x128xf32>
      %69 = arith.mulf %67, %31 : vector<256x128xf32>
      %70 = arith.addf %68, %69 : vector<256x128xf32>
      %71 = arith.truncf %70 : vector<256x128xf32> to vector<256x128xbf16>
      %c0_36 = arith.constant 0 : index
      %c1 = arith.constant 1 : index
      %c0_37 = arith.constant 0 : index
      %c0_38 = arith.constant 0 : index
      %72 = vector.load %arg15[%c0_36, %c1, %c0_37, %c0_38] : memref<1x2x256x128xbf16, #tpu.memory_space<vmem>>, vector<1x1x256x128xbf16>
      %73 = vector.shape_cast %72 : vector<1x1x256x128xbf16> to vector<256x128xbf16>
      %74 = vector.shape_cast %71 : vector<256x128xbf16> to vector<1x1x256x128xbf16>
      tpu.vector_store %arg15[%c0_36, %c1, %c0_37, %c0_38], %74 {strides = array<i32>} : memref<1x2x256x128xbf16, #tpu.memory_space<vmem>>, vector<1x1x256x128xbf16>,
    } else {
    }
    %c2_i32_7 = arith.constant 2 : i32
    %12 = arith.cmpi sge, %arg2, %c2_i32_7 : i32
    %c3_i32 = arith.constant 3 : i32
    %13 = arith.cmpi slt, %arg2, %c3_i32 : i32
    %14 = arith.andi %12, %13 : i1
    %15 = arith.extui %14 : i1 to i32
    %c0_i32_8 = arith.constant 0 : i32
    %16 = arith.cmpi ne, %15, %c0_i32_8 : i32
    scf.if %16 {
      %26 = vector.extract_strided_slice %8 {offsets = [0, 0], sizes = [256, 128], strides = [1, 1]} : vector<256x256xf32> to vector<256x128xf32>
      %27 = arith.truncf %26 : vector<256x128xf32> to vector<256x128xbf16>
      %c0_14 = arith.constant 0 : index
      %c0_15 = arith.constant 0 : index
      %c0_16 = arith.constant 0 : index
      %c0_17 = arith.constant 0 : index
      %28 = vector.load %arg15[%c0_14, %c0_15, %c0_16, %c0_17] : memref<1x2x256x128xbf16, #tpu.memory_space<vmem>>, vector<1x1x256x128xbf16>
      %29 = vector.shape_cast %28 : vector<1x1x256x128xbf16> to vector<256x128xbf16>
      %30 = vector.shape_cast %27 : vector<256x128xbf16> to vector<1x1x256x128xbf16>
      tpu.vector_store %arg15[%c0_14, %c0_15, %c0_16, %c0_17], %30 {strides = array<i32>} : memref<1x2x256x128xbf16, #tpu.memory_space<vmem>>, vector<1x1x256x128xbf16>,
      %31 = vector.extract_strided_slice %8 {offsets = [0, 128], sizes = [256, 128], strides = [1, 1]} : vector<256x256xf32> to vector<256x128xf32>
      %32 = arith.truncf %31 : vector<256x128xf32> to vector<256x128xbf16>
      %c0_18 = arith.constant 0 : index
      %c1 = arith.constant 1 : index
      %c0_19 = arith.constant 0 : index
      %c0_20 = arith.constant 0 : index
      %33 = vector.load %arg15[%c0_18, %c1, %c0_19, %c0_20] : memref<1x2x256x128xbf16, #tpu.memory_space<vmem>>, vector<1x1x256x128xbf16>
      %34 = vector.shape_cast %33 : vector<1x1x256x128xbf16> to vector<256x128xbf16>
      %35 = vector.shape_cast %32 : vector<256x128xbf16> to vector<1x1x256x128xbf16>
      tpu.vector_store %arg15[%c0_18, %c1, %c0_19, %c0_20], %35 {strides = array<i32>} : memref<1x2x256x128xbf16, #tpu.memory_space<vmem>>, vector<1x1x256x128xbf16>,
    } else {
    }
    %c3_i32_9 = arith.constant 3 : i32
    %17 = arith.cmpi eq, %arg2, %c3_i32_9 : i32
    %18 = arith.extui %17 : i1 to i32
    %c0_i32_10 = arith.constant 0 : i32
    %19 = arith.cmpi ne, %18, %c0_i32_10 : i32
    scf.if %19 {
      %cst_14 = arith.constant 0.000000e+00 : f32
      %26 = vector.broadcast %cst_14 : f32 to vector<256x256xf32>
      %c0_15 = arith.constant 0 : index
      %c0_16 = arith.constant 0 : index
      %27 = vector.load %arg14[%c0_15, %c0_16] : memref<1x256xf32, #tpu.memory_space<vmem>>, vector<1x256xf32>
      %28 = vector.broadcast %27 : vector<1x256xf32> to vector<256x256xf32>
      %29 = arith.addf %26, %28 : vector<256x256xf32>
      %c0_17 = arith.constant 0 : index
      %c0_18 = arith.constant 0 : index
      %30 = vector.load %arg18[%c0_17, %c0_18] : memref<256x256xf32, #tpu.memory_space<vmem>>, vector<256x256xf32>
      tpu.vector_store %arg18[%c0_17, %c0_18], %29 {strides = array<i32>} : memref<256x256xf32, #tpu.memory_space<vmem>>, vector<256x256xf32>,
    } else {
    }
    %c3_i32_11 = arith.constant 3 : i32
    %20 = arith.cmpi sge, %arg2, %c3_i32_11 : i32
    %21 = arith.extui %20 : i1 to i32
    %c0_i32_12 = arith.constant 0 : i32
    %22 = arith.cmpi ne, %21, %c0_i32_12 : i32
    scf.if %22 {
      %cst_14 = arith.constant 5.000000e-01 : f32
      %26 = vector.broadcast %cst_14 : f32 to vector<256x256xf32>
      %27 = arith.mulf %26, %8 : vector<256x256xf32>
      %cst_15 = arith.constant 4.471500e-02 : f32
      %28 = vector.broadcast %cst_15 : f32 to vector<256x256xf32>
      %29 = arith.mulf %28, %8 : vector<256x256xf32>
      %30 = arith.mulf %29, %8 : vector<256x256xf32>
      %31 = arith.mulf %30, %8 : vector<256x256xf32>
      %32 = arith.addf %8, %31 : vector<256x256xf32>
      %cst_16 = arith.constant 0.797884583 : f32
      %33 = vector.broadcast %cst_16 : f32 to vector<256x256xf32>
      %34 = arith.mulf %33, %32 : vector<256x256xf32>
      %35 = math.tanh %34 : vector<256x256xf32>
      %cst_17 = arith.constant 1.000000e+00 : f32
      %36 = vector.broadcast %cst_17 : f32 to vector<256x256xf32>
      %37 = arith.addf %36, %35 : vector<256x256xf32>
      %38 = arith.mulf %27, %37 : vector<256x256xf32>
      %c0_18 = arith.constant 0 : index
      %c0_19 = arith.constant 0 : index
      %39 = vector.load %arg18[%c0_18, %c0_19] : memref<256x256xf32, #tpu.memory_space<vmem>>, vector<256x256xf32>
      %40 = arith.truncf %38 : vector<256x256xf32> to vector<256x256xbf16>
      %c0_20 = arith.constant 0 : index
      %c0_21 = arith.constant 0 : index
      %41 = vector.load %arg13[%c0_20, %c0_21] : memref<256x256xbf16, #tpu.memory_space<vmem>>, vector<256x256xbf16>
      %cst_22 = arith.constant dense<0.000000e+00> : vector<256x256xf32>
      %42 = tpu.matmul %40, %41, %cst_22 {dimension_numbers = #tpu.dot_dimension_numbers<[1], [0], [0], [1], [0, 0, 1, 1], [], []>} : vector<256x256xbf16>, vector<256x256xbf16>, vector<256x256xf32> -> vector<256x256xf32>
      %43 = arith.addf %39, %42 : vector<256x256xf32>
      %c0_23 = arith.constant 0 : index
      %c0_24 = arith.constant 0 : index
      %44 = vector.load %arg18[%c0_23, %c0_24] : memref<256x256xf32, #tpu.memory_space<vmem>>, vector<256x256xf32>
      tpu.vector_store %arg18[%c0_23, %c0_24], %43 {strides = array<i32>} : memref<256x256xf32, #tpu.memory_space<vmem>>, vector<256x256xf32>,
    } else {
    }
    %c6_i32 = arith.constant 6 : i32
    %23 = arith.cmpi eq, %arg2, %c6_i32 : i32
    %24 = arith.extui %23 : i1 to i32
    %c0_i32_13 = arith.constant 0 : i32
    %25 = arith.cmpi ne, %24, %c0_i32_13 : i32
    scf.if %25 {
      %c0_14 = arith.constant 0 : index
      %c0_15 = arith.constant 0 : index
      %26 = vector.load %arg18[%c0_14, %c0_15] : memref<256x256xf32, #tpu.memory_space<vmem>>, vector<256x256xf32>
      %27 = arith.truncf %26 : vector<256x256xf32> to vector<256x256xbf16>
      %c0_16 = arith.constant 0 : index
      %c0_17 = arith.constant 0 : index
      %c0_18 = arith.constant 0 : index
      %28 = vector.load %arg16[%c0_16, %c0_17, %c0_18] : memref<1x256x256xbf16, #tpu.memory_space<vmem>>, vector<1x256x256xbf16>
      %29 = vector.shape_cast %28 : vector<1x256x256xbf16> to vector<256x256xbf16>
      %30 = vector.shape_cast %27 : vector<256x256xbf16> to vector<1x256x256xbf16>
      tpu.vector_store %arg16[%c0_16, %c0_17, %c0_18], %30 {strides = array<i32>} : memref<1x256x256xbf16, #tpu.memory_space<vmem>>, vector<1x256x256xbf16>,
    } else {
    }
    return
  }
  func.func @transform_0(%arg0: i32, %arg1: i32, %arg2: i32) -> (i32, i32, i32) {
    %c0_i32 = arith.constant 0 : i32
    %c0_i32_0 = arith.constant 0 : i32
    return %arg0, %arg1, %c0_i32 : i32, i32, i32
  }
  func.func @transform_1(%arg0: i32, %arg1: i32, %arg2: i32) -> (i32, i32, i32) {
    %c0_i32 = arith.constant 0 : i32
    %c0_i32_0 = arith.constant 0 : i32
    %c0_i32_1 = arith.constant 0 : i32
    return %arg0, %c0_i32, %c0_i32_0 : i32, i32, i32
  }
  func.func @transform_2(%arg0: i32, %arg1: i32, %arg2: i32) -> (i32, i32, i32) {
    %c0_i32 = arith.constant 0 : i32
    %c0_i32_0 = arith.constant 0 : i32
    %c0_i32_1 = arith.constant 0 : i32
    return %arg0, %c0_i32, %c0_i32_0 : i32, i32, i32
  }
  func.func @transform_3(%arg0: i32, %arg1: i32, %arg2: i32) -> (i32, i32) {
    %c0_i32 = arith.constant 0 : i32
    %c0_i32_0 = arith.constant 0 : i32
    return %c0_i32, %arg2 : i32, i32
  }
  func.func @transform_4(%arg0: i32, %arg1: i32, %arg2: i32) -> (i32, i32) {
    %c0_i32 = arith.constant 0 : i32
    %c0_i32_0 = arith.constant 0 : i32
    return %c0_i32, %arg2 : i32, i32
  }
  func.func @transform_5(%arg0: i32, %arg1: i32, %arg2: i32) -> (i32, i32) {
    %c0_i32 = arith.constant 0 : i32
    %c0_i32_0 = arith.constant 0 : i32
    %c0_i32_1 = arith.constant 0 : i32
    return %c0_i32, %c0_i32_0 : i32, i32
  }
  func.func @transform_6(%arg0: i32, %arg1: i32, %arg2: i32) -> (i32, i32) {
    %c0_i32 = arith.constant 0 : i32
    %c0_i32_0 = arith.constant 0 : i32
    %c0_i32_1 = arith.constant 0 : i32
    return %c0_i32, %c0_i32_0 : i32, i32
  }
  func.func @transform_7(%arg0: i32, %arg1: i32, %arg2: i32) -> (i32, i32) {
    %c0_i32 = arith.constant 0 : i32
    %c0_i32_0 = arith.constant 0 : i32
    return %arg1, %c0_i32 : i32, i32
  }
  func.func @transform_8(%arg0: i32, %arg1: i32, %arg2: i32) -> (i32, i32) {
    %c0_i32 = arith.constant 0 : i32
    %c0_i32_0 = arith.constant 0 : i32
    return %arg1, %c0_i32 : i32, i32
  }
  func.func @transform_9(%arg0: i32, %arg1: i32, %arg2: i32) -> (i32, i32) {
    %c0_i32 = arith.constant 0 : i32
    %c0_i32_0 = arith.constant 0 : i32
    %c0_i32_1 = arith.constant 0 : i32
    return %c0_i32, %c0_i32_0 : i32, i32
  }
  func.func @transform_10(%arg0: i32, %arg1: i32, %arg2: i32) -> (i32, i32) {
    %c3_i32 = arith.constant 3 : i32
    %0 = arith.subi %arg2, %c3_i32 : i32
    %c0_i32 = arith.constant 0 : i32
    %1 = arith.maxsi %0, %c0_i32 : i32
    %c0_i32_0 = arith.constant 0 : i32
    %c0_i32_1 = arith.constant 0 : i32
    return %1, %c0_i32_0 : i32, i32
  }
  func.func @transform_11(%arg0: i32, %arg1: i32, %arg2: i32) -> (i32, i32) {
    %c0_i32 = arith.constant 0 : i32
    %c0_i32_0 = arith.constant 0 : i32
    %c0_i32_1 = arith.constant 0 : i32
    return %c0_i32, %c0_i32_0 : i32, i32
  }
  func.func @transform_12(%arg0: i32, %arg1: i32, %arg2: i32) -> (i32, i32, i32, i32) {
    %c2_i32 = arith.constant 2 : i32
    %0 = arith.minsi %arg2, %c2_i32 : i32
    %c0_i32 = arith.constant 0 : i32
    %c0_i32_0 = arith.constant 0 : i32
    return %arg0, %0, %arg1, %c0_i32 : i32, i32, i32, i32
  }
  func.func @transform_13(%arg0: i32, %arg1: i32, %arg2: i32) -> (i32, i32, i32) {
    %c0_i32 = arith.constant 0 : i32
    %c0_i32_0 = arith.constant 0 : i32
    return %arg0, %arg1, %c0_i32 : i32, i32, i32
  }
}

</mosaic_0001>

<llo_original>
// kernel: tpu_custom_call.1
$region0: #{tpu_custom_call.1}
  #allocation0 [shape = 'u32[]', space=smem, size = 0x4, offset = 0x4, fixed_abs, tag = 'smem constant byte address 0x4 - core index']
  #allocation1 [shape = 'u32[144,128]{1,0:T(1,128)}', space=vmem, size = 0x12000, scoped, tag = 'internal scratch']
  #allocation2 [shape = 'bf16[256,256]{1,0:T(8,128)(2,1)}', space=vmem, size = 0x20000, scoped, tag = 'scratch operand']
  #allocation3 [shape = 'f32[256,256]{1,0:T(8,128)}', space=vmem, size = 0x40000, scoped, tag = 'scratch operand']
  %s0 = inlined_call_operand.hbm [shape: f32[2,256,256], index: 0, kind: input, shape index: {}]
  %s1 = inlined_call_operand.hbm [shape: f32[2,1,256], index: 1, kind: input, shape index: {}]
  %s2 = inlined_call_operand.hbm [shape: f32[2,1,256], index: 2, kind: input, shape index: {}]
  %s3 = inlined_call_operand.hbm [shape: bf16[256,1792], index: 3, kind: input, shape index: {}]
  %s4 = inlined_call_operand.hbm [shape: f32[1,1792], index: 4, kind: input, shape index: {}]
  %s5 = inlined_call_operand.vmem [shape: f32[1,128], index: 5, kind: input, shape index: {}]
  %s6 = inlined_call_operand.vmem [shape: f32[1,128], index: 6, kind: input, shape index: {}]
  %s7 = inlined_call_operand.hbm [shape: f32[256,128], index: 7, kind: input, shape index: {}]
  %s8 = inlined_call_operand.hbm [shape: f32[256,128], index: 8, kind: input, shape index: {}]
  %s9 = inlined_call_operand.hbm [shape: f32[128,128], index: 9, kind: input, shape index: {}]
  %s10 = inlined_call_operand.hbm [shape: bf16[1024,256], index: 10, kind: input, shape index: {}]
  %s11 = inlined_call_operand.vmem [shape: f32[1,256], index: 11, kind: input, shape index: {}]
  %s12 = inlined_call_operand.hbm [shape: bf16[2,6,256,128], index: 12, kind: output, shape index: {0}]
  %s13 = inlined_call_operand.hbm [shape: bf16[2,256,256], index: 13, kind: output, shape index: {1}]
  %14 = xla_tuple %s12, %s13
  %s15 = sld [smem:[#allocation0]]
  $region149: #{tpu_custom_call.1} parent=0
    _
  %s17 = ssub.s32 1, %s15
  %s18 = scalar_select 0, %s17, %s15
  $region1: #{tpu_custom_call.1} parent=0
    #allocation4 [shape = 'u8[524288]{0}', space=vmem, size = 0x80000, scoped, tag = 'input window, operand 0']
    #allocation5 [shape = 's32[2]{0}', space=sflag, size = 0x8, scoped, tag = 'scoped memory for tpu_custom_call.1']
    #allocation6 [shape = 's32[2]{0}', space=sflag, size = 0x8, scoped, tag = 'scoped memory for tpu_custom_call.1']
    #allocation7 [shape = 'u8[2048]{0}', space=vmem, size = 0x800, scoped, tag = 'input window, operand 1']
    #allocation8 [shape = 's32[2]{0}', space=sflag, size = 0x8, scoped, tag = 'scoped memory for tpu_custom_call.1']
    #allocation9 [shape = 'u8[2048]{0}', space=vmem, size = 0x800, scoped, tag = 'input window, operand 2']
    #allocation10 [shape = 'u8[262144]{0}', space=vmem, size = 0x40000, scoped, tag = 'input window, operand 3']
    #allocation11 [shape = 's32[2]{0}', space=sflag, size = 0x8, scoped, tag = 'scoped memory for tpu_custom_call.1']
    #allocation12 [shape = 'u8[2048]{0}', space=vmem, size = 0x800, scoped, tag = 'input window, operand 4']
    #allocation13 [shape = 'u8[131072]{0}', space=vmem, size = 0x20000, scoped, tag = 'input window, operand 7, single buffered']
    #allocation14 [shape = 's32[1]{0}', space=sflag, size = 0x4, scoped, tag = 'scoped memory for tpu_custom_call.1']
    #allocation15 [shape = 'u8[131072]{0}', space=vmem, size = 0x20000, scoped, tag = 'input window, operand 8, single buffered']
    #allocation16 [shape = 'u8[65536]{0}', space=vmem, size = 0x10000, scoped, tag = 'input window, operand 9, single buffered']
    #allocation17 [shape = 's32[1]{0}', space=sflag, size = 0x4, scoped, tag = 'scoped memory for tpu_custom_call.1']
    #allocation18 [shape = 'u8[262144]{0}', space=vmem, size = 0x40000, scoped, tag = 'input window, operand 10']
    #allocation19 [shape = 'u8[262144]{0}', space=vmem, size = 0x40000, scoped, tag = 'output window, operand 0']
    #allocation20 [shape = 'u8[262144]{0}', space=vmem, size = 0x40000, scoped, tag = 'output window, operand 1']
    #allocation21 [shape = 's32[2]{0}', space=sflag, size = 0x8, scoped, tag = 'scoped memory for tpu_custom_call.1']
    %19 = vsyncpa [#allocation5], 0
    %s20 = scalar_lea.sflag [#allocation5], 1
    %21 = vsyncpa %s20, 0
    %22 = vsyncpa [#allocation8], 0
    %s23 = scalar_lea.sflag [#allocation8], 1
    %24 = vsyncpa %s23, 0
    %25 = vsyncpa [#allocation11], 0
    %s26 = scalar_lea.sflag [#allocation11], 1
    %27 = vsyncpa %s26, 0
    %28 = vsyncpa [#allocation14], 0
    %29 = vsyncpa [#allocation17], 0
    %30 = vsyncpa [#allocation6], 0
    %s31 = scalar_lea.sflag [#allocation6], 1
    %32 = vsyncpa %s31, 0
    %33 = vsyncpa [#allocation21], 0
    %s34 = scalar_lea.sflag [#allocation21], 1
    %35 = vsyncpa %s34, 0
    loop: start=0, step=1, limit=16
    $region2: #{tpu_custom_call.1} parent=1 // loop_pre_header
      _
    $region3: #{tpu_custom_call.1} parent=1 // loop_header
      %s37 = sphi 0, %s41
      %p38 = scmp.ge.s32.totalorder %s37, 16
      %s44 = sphi 0, %s63
      %s45 = sphi 0, %s59
      %s46 = sphi 0, %s55
      %s47 = sphi 0, %s44
      %s48 = sphi 0, %s45
      %s49 = sphi 0, %s46
      %s50 = sphi 0, %s47
      %s51 = sphi 0, %s48
      %s52 = sphi 0, %s49
      %s68 = sphi 0, %s70
      %s71 = sphi 0, %s68
      %s72 = sphi 0, %s71
      %s88 = sphi 0, %s72
      %s94 = sphi 0, %s96
      %s97 = sphi 0, %s94
      %s98 = sphi 0, %s97
      %s114 = sphi 0, %s98
      %s120 = sphi 0, %s122
      %s123 = sphi 0, %s120
      %s124 = sphi 0, %s123
      %s140 = sphi 0, %s124
      %s146 = sphi 0, %s148
      %s149 = sphi 0, %s146
      %s150 = sphi 0, %s149
      %s166 = sphi 0, %s150
      %s172 = sphi 0, %s174
      %s175 = sphi 0, %s172
      %s176 = sphi 0, %s175
      %s192 = sphi 0, %s176
      %s196 = sphi 0, %s196
      %s198 = sphi 0, %s196
      %s199 = sphi 0, %s198
      %s213 = sphi 0, %s199
      %s217 = sphi 0, %s217
      %s219 = sphi 0, %s217
      %s220 = sphi 0, %s219
      %s234 = sphi 0, %s220
      %s240 = sphi 0, %s242
      %s243 = sphi 0, %s240
      %s244 = sphi 0, %s243
      %s260 = sphi 0, %s244
      %s266 = sphi 0, %s268
      %s269 = sphi 0, %s266
      %s270 = sphi 0, %s269
      %s286 = sphi 0, %s270
      %s290 = sphi 0, %s290
      %s292 = sphi 0, %s290
      %s293 = sphi 0, %s292
      %s307 = sphi 0, %s293
      %s319 = sphi 0, %s321
      %s322 = sphi 0, %s319
      %s323 = sphi 0, %s322
      %s339 = sphi 0, %s323
      %s343 = sphi 0, %s343
      %s345 = sphi 0, %s343
      %s346 = sphi 0, %s345
      %s360 = sphi 0, %s346
      %s374 = sphi 0, %s376
      %s377 = sphi 0, %s374
      %s378 = sphi 0, %s377
      %s394 = sphi 0, %s378
      %s402 = sphi 0, %s404
      %s405 = sphi 0, %s402
      %s406 = sphi 0, %s405
      %s422 = sphi 0, %s406
    $region4: #{tpu_custom_call.1} parent=1 // loop_header_branch
      %40 = sbr.rel (%p38) target = $region8
    $region5: #{tpu_custom_call.1} parent=1 // loop_body
      %s42 = ssub.s32 %s37, 1
      %s43 = ssub.s32 %s37, 2
      %s53 = sadd.s32 1, %s46
      %p54 = scmp.ge.s32.totalorder %s53, 7
      %s55 = scalar_select %p54, 0, %s53
      %s56 = sadd.s32 1, %s45
      %s57 = scalar_select %p54, %s56, %s45
      %p58 = scmp.ge.s32.totalorder %s57, 1
      %s59 = scalar_select %p58, 0, %s57
      %s60 = sadd.s32 1, %s44
      %s61 = scalar_select %p58, %s60, %s44
      %p62 = scmp.ge.s32.totalorder %s61, 2
      %s63 = scalar_select %p62, 0, %s61
      %s64 = ssub.s32 %s44, %s63
      %s65 = ssub.s32 %s45, %s59
      %s66 = sor.u32 %s64, %s65
      %p67 = scmp.eq.s32.totalorder %s66, 0
      %s69 = sadd.s32 %s68, 1
      %s70 = scalar_select %p67, %s68, %s69
      %p73 = pneg %p67
      %p74 = scmp.eq.s32.totalorder %s37, 13
      %p75 = por %p73, %p74
      %p76 = scmp.ne.s32.totalorder %s68, %s71
      %p77 = scmp.eq.s32.totalorder %s37, 0
      %p78 = por %p76, %p77
      %p79 = scmp.ne.s32.totalorder %s68, %s71
      %p80 = scmp.eq.s32.totalorder %s42, 13
      %p81 = por %p79, %p80
      %p82 = scmp.ne.s32.totalorder %s71, %s72
      %p83 = scmp.eq.s32.totalorder %s42, 0
      %p84 = por %p82, %p83
      %p85 = scmp.ne.s32.totalorder %s71, %s72
      %p86 = scmp.eq.s32.totalorder %s43, 13
      %p87 = por %p85, %p86
      %p89 = scmp.ne.s32.totalorder %s72, %s88
      %p90 = scmp.eq.s32.totalorder %s43, 0
      %p91 = por %p89, %p90
      %s92 = ssub.s32 %s44, %s63
      %p93 = scmp.eq.s32.totalorder %s92, 0
      %s95 = sadd.s32 %s94, 1
      %s96 = scalar_select %p93, %s94, %s95
      %p99 = pneg %p93
      %p100 = scmp.eq.s32.totalorder %s37, 13
      %p101 = por %p99, %p100
      %p102 = scmp.ne.s32.totalorder %s94, %s97
      %p103 = scmp.eq.s32.totalorder %s37, 0
      %p104 = por %p102, %p103
      %p105 = scmp.ne.s32.totalorder %s94, %s97
      %p106 = scmp.eq.s32.totalorder %s42, 13
      %p107 = por %p105, %p106
      %p108 = scmp.ne.s32.totalorder %s97, %s98
      %p109 = scmp.eq.s32.totalorder %s42, 0
      %p110 = por %p108, %p109
      %p111 = scmp.ne.s32.totalorder %s97, %s98
      %p112 = scmp.eq.s32.totalorder %s43, 13
      %p113 = por %p111, %p112
      %p115 = scmp.ne.s32.totalorder %s98, %s114
      %p116 = scmp.eq.s32.totalorder %s43, 0
      %p117 = por %p115, %p116
      %s118 = ssub.s32 %s44, %s63
      %p119 = scmp.eq.s32.totalorder %s118, 0
      %s121 = sadd.s32 %s120, 1
      %s122 = scalar_select %p119, %s120, %s121
      %p125 = pneg %p119
      %p126 = scmp.eq.s32.totalorder %s37, 13
      %p127 = por %p125, %p126
      %p128 = scmp.ne.s32.totalorder %s120, %s123
      %p129 = scmp.eq.s32.totalorder %s37, 0
      %p130 = por %p128, %p129
      %p131 = scmp.ne.s32.totalorder %s120, %s123
      %p132 = scmp.eq.s32.totalorder %s42, 13
      %p133 = por %p131, %p132
      %p134 = scmp.ne.s32.totalorder %s123, %s124
      %p135 = scmp.eq.s32.totalorder %s42, 0
      %p136 = por %p134, %p135
      %p137 = scmp.ne.s32.totalorder %s123, %s124
      %p138 = scmp.eq.s32.totalorder %s43, 13
      %p139 = por %p137, %p138
      %p141 = scmp.ne.s32.totalorder %s124, %s140
      %p142 = scmp.eq.s32.totalorder %s43, 0
      %p143 = por %p141, %p142
      %s144 = ssub.s32 %s46, %s55
      %p145 = scmp.eq.s32.totalorder %s144, 0
      %s147 = sadd.s32 %s146, 1
      %s148 = scalar_select %p145, %s146, %s147
      %p151 = pneg %p145
      %p152 = scmp.eq.s32.totalorder %s37, 13
      %p153 = por %p151, %p152
      %p154 = scmp.ne.s32.totalorder %s146, %s149
      %p155 = scmp.eq.s32.totalorder %s37, 0
      %p156 = por %p154, %p155
      %p157 = scmp.ne.s32.totalorder %s146, %s149
      %p158 = scmp.eq.s32.totalorder %s42, 13
      %p159 = por %p157, %p158
      %p160 = scmp.ne.s32.totalorder %s149, %s150
      %p161 = scmp.eq.s32.totalorder %s42, 0
      %p162 = por %p160, %p161
      %p163 = scmp.ne.s32.totalorder %s149, %s150
      %p164 = scmp.eq.s32.totalorder %s43, 13
      %p165 = por %p163, %p164
      %p167 = scmp.ne.s32.totalorder %s150, %s166
      %p168 = scmp.eq.s32.totalorder %s43, 0
      %p169 = por %p167, %p168
      %s170 = ssub.s32 %s46, %s55
      %p171 = scmp.eq.s32.totalorder %s170, 0
      %s173 = sadd.s32 %s172, 1
      %s174 = scalar_select %p171, %s172, %s173
      %p177 = pneg %p171
      %p178 = scmp.eq.s32.totalorder %s37, 13
      %p179 = por %p177, %p178
      %p180 = scmp.ne.s32.totalorder %s172, %s175
      %p181 = scmp.eq.s32.totalorder %s37, 0
      %p182 = por %p180, %p181
      %p183 = scmp.ne.s32.totalorder %s172, %s175
      %p184 = scmp.eq.s32.totalorder %s42, 13
      %p185 = por %p183, %p184
      %p186 = scmp.ne.s32.totalorder %s175, %s176
      %p187 = scmp.eq.s32.totalorder %s42, 0
      %p188 = por %p186, %p187
      %p189 = scmp.ne.s32.totalorder %s175, %s176
      %p190 = scmp.eq.s32.totalorder %s43, 13
      %p191 = por %p189, %p190
      %p193 = scmp.ne.s32.totalorder %s176, %s192
      %p194 = scmp.eq.s32.totalorder %s43, 0
      %p195 = por %p193, %p194
      %s197 = sadd.s32 %s196, 1
      %p200 = scmp.eq.s32.totalorder %s37, 13
      %p201 = scmp.ne.s32.totalorder %s196, %s198
      %p202 = scmp.eq.s32.totalorder %s37, 0
      %p203 = por %p201, %p202
      %p204 = scmp.ne.s32.totalorder %s196, %s198
      %p205 = scmp.eq.s32.totalorder %s42, 13
      %p206 = por %p204, %p205
      %p207 = scmp.ne.s32.totalorder %s198, %s199
      %p208 = scmp.eq.s32.totalorder %s42, 0
      %p209 = por %p207, %p208
      %p210 = scmp.ne.s32.totalorder %s198, %s199
      %p211 = scmp.eq.s32.totalorder %s43, 13
      %p212 = por %p210, %p211
      %p214 = scmp.ne.s32.totalorder %s199, %s213
      %p215 = scmp.eq.s32.totalorder %s43, 0
      %p216 = por %p214, %p215
      %s218 = sadd.s32 %s217, 1
      %p221 = scmp.eq.s32.totalorder %s37, 13
      %p222 = scmp.ne.s32.totalorder %s217, %s219
      %p223 = scmp.eq.s32.totalorder %s37, 0
      %p224 = por %p222, %p223
      %p225 = scmp.ne.s32.totalorder %s217, %s219
      %p226 = scmp.eq.s32.totalorder %s42, 13
      %p227 = por %p225, %p226
      %p228 = scmp.ne.s32.totalorder %s219, %s220
      %p229 = scmp.eq.s32.totalorder %s42, 0
      %p230 = por %p228, %p229
      %p231 = scmp.ne.s32.totalorder %s219, %s220
      %p232 = scmp.eq.s32.totalorder %s43, 13
      %p233 = por %p231, %p232
      %p235 = scmp.ne.s32.totalorder %s220, %s234
      %p236 = scmp.eq.s32.totalorder %s43, 0
      %p237 = por %p235, %p236
      %s238 = ssub.s32 %s45, %s59
      %p239 = scmp.eq.s32.totalorder %s238, 0
      %s241 = sadd.s32 %s240, 1
      %s242 = scalar_select %p239, %s240, %s241
      %p245 = pneg %p239
      %p246 = scmp.eq.s32.totalorder %s37, 13
      %p247 = por %p245, %p246
      %p248 = scmp.ne.s32.totalorder %s240, %s243
      %p249 = scmp.eq.s32.totalorder %s37, 0
      %p250 = por %p248, %p249
      %p251 = scmp.ne.s32.totalorder %s240, %s243
      %p252 = scmp.eq.s32.totalorder %s42, 13
      %p253 = por %p251, %p252
      %p254 = scmp.ne.s32.totalorder %s243, %s244
      %p255 = scmp.eq.s32.totalorder %s42, 0
      %p256 = por %p254, %p255
      %p257 = scmp.ne.s32.totalorder %s243, %s244
      %p258 = scmp.eq.s32.totalorder %s43, 13
      %p259 = por %p257, %p258
      %p261 = scmp.ne.s32.totalorder %s244, %s260
      %p262 = scmp.eq.s32.totalorder %s43, 0
      %p263 = por %p261, %p262
      %s264 = ssub.s32 %s45, %s59
      %p265 = scmp.eq.s32.totalorder %s264, 0
      %s267 = sadd.s32 %s266, 1
      %s268 = scalar_select %p265, %s266, %s267
      %p271 = pneg %p265
      %p272 = scmp.eq.s32.totalorder %s37, 13
      %p273 = por %p271, %p272
      %p274 = scmp.ne.s32.totalorder %s266, %s269
      %p275 = scmp.eq.s32.totalorder %s37, 0
      %p276 = por %p274, %p275
      %p277 = scmp.ne.s32.totalorder %s266, %s269
      %p278 = scmp.eq.s32.totalorder %s42, 13
      %p279 = por %p277, %p278
      %p280 = scmp.ne.s32.totalorder %s269, %s270
      %p281 = scmp.eq.s32.totalorder %s42, 0
      %p282 = por %p280, %p281
      %p283 = scmp.ne.s32.totalorder %s269, %s270
      %p284 = scmp.eq.s32.totalorder %s43, 13
      %p285 = por %p283, %p284
      %p287 = scmp.ne.s32.totalorder %s270, %s286
      %p288 = scmp.eq.s32.totalorder %s43, 0
      %p289 = por %p287, %p288
      %s291 = sadd.s32 %s290, 1
      %p294 = scmp.eq.s32.totalorder %s37, 13
      %p295 = scmp.ne.s32.totalorder %s290, %s292
      %p296 = scmp.eq.s32.totalorder %s37, 0
      %p297 = por %p295, %p296
      %p298 = scmp.ne.s32.totalorder %s290, %s292
      %p299 = scmp.eq.s32.totalorder %s42, 13
      %p300 = por %p298, %p299
      %p301 = scmp.ne.s32.totalorder %s292, %s293
      %p302 = scmp.eq.s32.totalorder %s42, 0
      %p303 = por %p301, %p302
      %p304 = scmp.ne.s32.totalorder %s292, %s293
      %p305 = scmp.eq.s32.totalorder %s43, 13
      %p306 = por %p304, %p305
      %p308 = scmp.ne.s32.totalorder %s293, %s307
      %p309 = scmp.eq.s32.totalorder %s43, 0
      %p310 = por %p308, %p309
      %s311 = ssub.s32 %s46, 3
      %p312 = scmp.gt.s32.totalorder %s311, 0
      %s313 = scalar_select %p312, %s311, 0
      %s314 = ssub.s32 %s55, 3
      %p315 = scmp.gt.s32.totalorder %s314, 0
      %s316 = scalar_select %p315, %s314, 0
      %s317 = ssub.s32 %s313, %s316
      %p318 = scmp.eq.s32.totalorder %s317, 0
      %s320 = sadd.s32 %s319, 1
      %s321 = scalar_select %p318, %s319, %s320
      %p324 = pneg %p318
      %p325 = scmp.eq.s32.totalorder %s37, 13
      %p326 = por %p324, %p325
      %p327 = scmp.ne.s32.totalorder %s319, %s322
      %p328 = scmp.eq.s32.totalorder %s37, 0
      %p329 = por %p327, %p328
      %p330 = scmp.ne.s32.totalorder %s319, %s322
      %p331 = scmp.eq.s32.totalorder %s42, 13
      %p332 = por %p330, %p331
      %p333 = scmp.ne.s32.totalorder %s322, %s323
      %p334 = scmp.eq.s32.totalorder %s42, 0
      %p335 = por %p333, %p334
      %p336 = scmp.ne.s32.totalorder %s322, %s323
      %p337 = scmp.eq.s32.totalorder %s43, 13
      %p338 = por %p336, %p337
      %p340 = scmp.ne.s32.totalorder %s323, %s339
      %p341 = scmp.eq.s32.totalorder %s43, 0
      %p342 = por %p340, %p341
      %s344 = sadd.s32 %s343, 1
      %p347 = scmp.eq.s32.totalorder %s37, 13
      %p348 = scmp.ne.s32.totalorder %s343, %s345
      %p349 = scmp.eq.s32.totalorder %s37, 0
      %p350 = por %p348, %p349
      %p351 = scmp.ne.s32.totalorder %s343, %s345
      %p352 = scmp.eq.s32.totalorder %s42, 13
      %p353 = por %p351, %p352
      %p354 = scmp.ne.s32.totalorder %s345, %s346
      %p355 = scmp.eq.s32.totalorder %s42, 0
      %p356 = por %p354, %p355
      %p357 = scmp.ne.s32.totalorder %s345, %s346
      %p358 = scmp.eq.s32.totalorder %s43, 13
      %p359 = por %p357, %p358
      %p361 = scmp.ne.s32.totalorder %s346, %s360
      %p362 = scmp.eq.s32.totalorder %s43, 0
      %p363 = por %p361, %p362
      %p364 = scmp.lt.s32.totalorder %s46, 2
      %s365 = scalar_select %p364, %s46, 2
      %p366 = scmp.lt.s32.totalorder %s55, 2
      %s367 = scalar_select %p366, %s55, 2
      %s368 = ssub.s32 %s44, %s63
      %s369 = ssub.s32 %s365, %s367
      %s370 = sor.u32 %s368, %s369
      %s371 = ssub.s32 %s45, %s59
      %s372 = sor.u32 %s370, %s371
      %p373 = scmp.eq.s32.totalorder %s372, 0
      %s375 = sadd.s32 %s374, 1
      %s376 = scalar_select %p373, %s374, %s375
      %p379 = pneg %p373
      %p380 = scmp.eq.s32.totalorder %s37, 13
      %p381 = por %p379, %p380
      %p382 = scmp.ne.s32.totalorder %s374, %s377
      %p383 = scmp.eq.s32.totalorder %s37, 0
      %p384 = por %p382, %p383
      %p385 = scmp.ne.s32.totalorder %s374, %s377
      %p386 = scmp.eq.s32.totalorder %s42, 13
      %p387 = por %p385, %p386
      %p388 = scmp.ne.s32.totalorder %s377, %s378
      %p389 = scmp.eq.s32.totalorder %s42, 0
      %p390 = por %p388, %p389
      %p391 = scmp.ne.s32.totalorder %s377, %s378
      %p392 = scmp.eq.s32.totalorder %s43, 13
      %p393 = por %p391, %p392
      %p395 = scmp.ne.s32.totalorder %s378, %s394
      %p396 = scmp.eq.s32.totalorder %s43, 0
      %p397 = por %p395, %p396
      %s398 = ssub.s32 %s44, %s63
      %s399 = ssub.s32 %s45, %s59
      %s400 = sor.u32 %s398, %s399
      %p401 = scmp.eq.s32.totalorder %s400, 0
      %s403 = sadd.s32 %s402, 1
      %s404 = scalar_select %p401, %s402, %s403
      %p407 = pneg %p401
      %p408 = scmp.eq.s32.totalorder %s37, 13
      %p409 = por %p407, %p408
      %p410 = scmp.ne.s32.totalorder %s402, %s405
      %p411 = scmp.eq.s32.totalorder %s37, 0
      %p412 = por %p410, %p411
      %p413 = scmp.ne.s32.totalorder %s402, %s405
      %p414 = scmp.eq.s32.totalorder %s42, 13
      %p415 = por %p413, %p414
      %p416 = scmp.ne.s32.totalorder %s405, %s406
      %p417 = scmp.eq.s32.totalorder %s42, 0
      %p418 = por %p416, %p417
      %p419 = scmp.ne.s32.totalorder %s405, %s406
      %p420 = scmp.eq.s32.totalorder %s43, 13
      %p421 = por %p419, %p420
      %p423 = scmp.ne.s32.totalorder %s406, %s422
      %p424 = scmp.eq.s32.totalorder %s43, 0
      %p425 = por %p423, %p424
      %p426 = scmp.le.s32.totalorder 1, %s37
      %p427 = scmp.lt.s32.totalorder %s37, 15
      %p428 = pnand %p426, %p427
      %p429 = pneg %p428
      // Predicated region
      $region9: #{tpu_custom_call.1} parent=5 // pred_check
        _
      $region10: #{tpu_custom_call.1} parent=5 // pred_check_branch
        %431 = sbr.rel (%p428) target = $region12
      $region11: #{tpu_custom_call.1} parent=5 // pred_region
        %s432 = ssub.s32 %s37, 1
        // Predicated region
        $region13: #{tpu_custom_call.1} parent=11 // pred_check
          %p433 = pneg %p209
        $region14: #{tpu_custom_call.1} parent=11 // pred_check_branch
          %435 = sbr.rel (%p433) target = $region16
        $region15: #{tpu_custom_call.1} parent=11 // pred_region
          _
        $region16: #{tpu_custom_call.1} parent=11 // pred_fallthru
          _
        // Predicated region
        $region17: #{tpu_custom_call.1} parent=11 // pred_check
          %p436 = pneg %p230
        $region18: #{tpu_custom_call.1} parent=11 // pred_check_branch
          %438 = sbr.rel (%p436) target = $region20
        $region19: #{tpu_custom_call.1} parent=11 // pred_region
          _
        $region20: #{tpu_custom_call.1} parent=11 // pred_fallthru
          _
        // Predicated region
        $region21: #{tpu_custom_call.1} parent=11 // pred_check
          %p439 = pneg %p256
        $region22: #{tpu_custom_call.1} parent=11 // pred_check_branch
          %441 = sbr.rel (%p439) target = $region24
        $region23: #{tpu_custom_call.1} parent=11 // pred_region
          %s442 = smul.u32 32, %s48
          %s444 = ssub.s32 4096, 4096
          %445 = vsyncadd [#allocation14], %s444
          %s446 = smul.addr %s442, 128
          %s447 = scalar_lea.hbm %s7, %s446
          %s448 = sshll.u32 [#allocation13], 4
          %s449 = int_to_ptr.vmem [resolvable:$true] %s448
          %454 = dma.hbm_to_vmem [thread:$0]  %s447, 4096, %s449, [#allocation14], 128, 128, 8
        $region24: #{tpu_custom_call.1} parent=11 // pred_fallthru
          _
        // Predicated region
        $region25: #{tpu_custom_call.1} parent=11 // pred_check
          %p455 = pneg %p282
        $region26: #{tpu_custom_call.1} parent=11 // pred_check_branch
          %457 = sbr.rel (%p455) target = $region28
        $region27: #{tpu_custom_call.1} parent=11 // pred_region
          %s458 = smul.u32 32, %s48
          %s460 = ssub.s32 4096, 4096
          %461 = vsyncadd [#allocation14], %s460
          %s462 = smul.addr %s458, 128
          %s463 = scalar_lea.hbm %s8, %s462
          %s464 = sshll.u32 [#allocation15], 4
          %s465 = int_to_ptr.vmem [resolvable:$true] %s464
          %470 = dma.hbm_to_vmem [thread:$0]  %s463, 4096, %s465, [#allocation14], 128, 128, 8
        $region28: #{tpu_custom_call.1} parent=11 // pred_fallthru
          _
        // Predicated region
        $region29: #{tpu_custom_call.1} parent=11 // pred_check
          %p471 = pneg %p303
        $region30: #{tpu_custom_call.1} parent=11 // pred_check_branch
          %473 = sbr.rel (%p471) target = $region32
        $region31: #{tpu_custom_call.1} parent=11 // pred_region
          %s475 = ssub.s32 2048, 2048
          %476 = vsyncadd [#allocation17], %s475
          %s477 = sshll.u32 [#allocation16], 4
          %s478 = int_to_ptr.vmem [resolvable:$true] %s477
          %483 = dma.hbm_to_vmem [thread:$0]  %s9, 2048, %s478, [#allocation17], 128, 128, 8
        $region32: #{tpu_custom_call.1} parent=11 // pred_fallthru
          _
        // Predicated region
        $region33: #{tpu_custom_call.1} parent=11 // pred_check
          %p484 = pneg %p356
        $region34: #{tpu_custom_call.1} parent=11 // pred_check_branch
          %486 = sbr.rel (%p484) target = $region36
        $region35: #{tpu_custom_call.1} parent=11 // pred_region
          _
        $region36: #{tpu_custom_call.1} parent=11 // pred_fallthru
          _
      $region12: #{tpu_custom_call.1} parent=5 // pred_fallthru
        _
      %p487 = scmp.lt.s32.totalorder %s37, 14
      // Predicated region
      $region37: #{tpu_custom_call.1} parent=5 // pred_check
        %p488 = pneg %p487
      $region38: #{tpu_custom_call.1} parent=5 // pred_check_branch
        %490 = sbr.rel (%p488) target = $region40
      $region39: #{tpu_custom_call.1} parent=5 // pred_region
        // Predicated region
        $region41: #{tpu_custom_call.1} parent=39 // pred_check
          %p491 = pneg %p78
        $region42: #{tpu_custom_call.1} parent=39 // pred_check_branch
          %493 = sbr.rel (%p491) target = $region44
        $region43: #{tpu_custom_call.1} parent=39 // pred_region
          %s494 = sand.u32 %s37, 1
          %s495 = scalar_lea.sflag [#allocation5], %s494
          %s496 = sand.u32 %s68, 1
          %s497 = smul.addr %s496, 512
          %s498 = scalar_lea.vmem [#allocation4], %s497
          %s499 = smul.u32 32, %s45
          %s501 = ssub.s32 8192, 8192
          %502 = vsyncadd %s495, %s501
          %s503 = smul.addr %s499, 2
          %s504 = smul.addr %s44, 64
          %s505 = sadd.s32 %s503, %s504
          %s506 = smul.addr %s505, 128
          %s507 = scalar_lea.hbm %s0, %s506
          %s508 = sshll.u32 %s498, 4
          %s509 = int_to_ptr.vmem [resolvable:$true] %s508
          %514 = dma.hbm_to_vmem [thread:$0]  %s507, 8192, %s509, %s495, 256, 256, 16
        $region44: #{tpu_custom_call.1} parent=39 // pred_fallthru
          _
        // Predicated region
        $region45: #{tpu_custom_call.1} parent=39 // pred_check
          %p515 = pneg %p104
        $region46: #{tpu_custom_call.1} parent=39 // pred_check_branch
          %517 = sbr.rel (%p515) target = $region48
        $region47: #{tpu_custom_call.1} parent=39 // pred_region
          %s518 = sand.u32 %s37, 1
          %s519 = scalar_lea.sflag [#allocation8], %s518
          %s520 = sand.u32 %s94, 1
          %s521 = smul.addr %s520, 2
          %s522 = scalar_lea.vmem [#allocation7], %s521
          %s524 = ssub.s32 32, 32
          %525 = vsyncadd %s519, %s524
          %s526 = smul.addr %s44, 2
          %s527 = smul.addr %s526, 16
          %s528 = scalar_lea.hbm %s1, %s527
          %s530 = sshll.u32 %s522, 4
          %s531 = int_to_ptr.vmem [resolvable:$true] %s530
          %533 = dma.hbm_to_vmem [thread:$0]  %s528, 32, %s531, %s519
        $region48: #{tpu_custom_call.1} parent=39 // pred_fallthru
          _
        // Predicated region
        $region49: #{tpu_custom_call.1} parent=39 // pred_check
          %p534 = pneg %p130
        $region50: #{tpu_custom_call.1} parent=39 // pred_check_branch
          %536 = sbr.rel (%p534) target = $region52
        $region51: #{tpu_custom_call.1} parent=39 // pred_region
          %s537 = sand.u32 %s37, 1
          %s538 = scalar_lea.sflag [#allocation8], %s537
          %s539 = sand.u32 %s120, 1
          %s540 = smul.addr %s539, 2
          %s541 = scalar_lea.vmem [#allocation9], %s540
          %s543 = ssub.s32 32, 32
          %544 = vsyncadd %s538, %s543
          %s545 = smul.addr %s44, 2
          %s546 = smul.addr %s545, 16
          %s547 = scalar_lea.hbm %s2, %s546
          %s549 = sshll.u32 %s541, 4
          %s550 = int_to_ptr.vmem [resolvable:$true] %s549
          %552 = dma.hbm_to_vmem [thread:$0]  %s547, 32, %s550, %s538
        $region52: #{tpu_custom_call.1} parent=39 // pred_fallthru
          _
        // Predicated region
        $region53: #{tpu_custom_call.1} parent=39 // pred_check
          %p553 = pneg %p156
        $region54: #{tpu_custom_call.1} parent=39 // pred_check_branch
          %555 = sbr.rel (%p553) target = $region56
        $region55: #{tpu_custom_call.1} parent=39 // pred_region
          %s556 = sand.u32 %s37, 1
          %s557 = scalar_lea.sflag [#allocation11], %s556
          %s558 = sand.u32 %s146, 1
          %s559 = smul.addr %s558, 256
          %s560 = scalar_lea.vmem [#allocation10], %s559
          %s561 = smul.u32 2, %s46
          %s563 = ssub.s32 4096, 4096
          %564 = vsyncadd %s557, %s563
          %s565 = smul.addr %s561, 64
          %s566 = scalar_lea.hbm %s3, %s565
          %s567 = sshll.u32 %s560, 4
          %s568 = int_to_ptr.vmem [resolvable:$true] %s567
          %573 = dma.hbm_to_vmem [thread:$0]  %s566, 4096, %s568, %s557, 896, 128, 8
        $region56: #{tpu_custom_call.1} parent=39 // pred_fallthru
          _
        // Predicated region
        $region57: #{tpu_custom_call.1} parent=39 // pred_check
          %p574 = pneg %p182
        $region58: #{tpu_custom_call.1} parent=39 // pred_check_branch
          %576 = sbr.rel (%p574) target = $region60
        $region59: #{tpu_custom_call.1} parent=39 // pred_region
          %s577 = sand.u32 %s37, 1
          %s578 = scalar_lea.sflag [#allocation11], %s577
          %s579 = sand.u32 %s172, 1
          %s580 = smul.addr %s579, 2
          %s581 = scalar_lea.vmem [#allocation12], %s580
          %s582 = smul.u32 2, %s46
          %s584 = ssub.s32 32, 32
          %585 = vsyncadd %s578, %s584
          %s586 = smul.addr %s582, 16
          %s587 = scalar_lea.hbm %s4, %s586
          %s589 = sshll.u32 %s581, 4
          %s590 = int_to_ptr.vmem [resolvable:$true] %s589
          %592 = dma.hbm_to_vmem [thread:$0]  %s587, 32, %s590, %s578
        $region60: #{tpu_custom_call.1} parent=39 // pred_fallthru
          _
        // Predicated region
        $region61: #{tpu_custom_call.1} parent=39 // pred_check
          %p593 = pneg %p329
        $region62: #{tpu_custom_call.1} parent=39 // pred_check_branch
          %595 = sbr.rel (%p593) target = $region64
        $region63: #{tpu_custom_call.1} parent=39 // pred_region
          %s596 = sand.u32 %s37, 1
          %s597 = scalar_lea.sflag [#allocation5], %s596
          %s598 = sand.u32 %s319, 1
          %s599 = smul.addr %s598, 256
          %s600 = scalar_lea.vmem [#allocation18], %s599
          %s601 = ssub.s32 %s46, 3
          %p602 = scmp.gt.s32.totalorder %s601, 0
          %s603 = scalar_select %p602, %s601, 0
          %s604 = smul.u32 32, %s603
          %s606 = ssub.s32 4096, 4096
          %607 = vsyncadd %s597, %s606
          %s608 = smul.addr %s604, 2
          %s609 = smul.addr %s608, 64
          %s610 = scalar_lea.hbm %s10, %s609
          %s611 = sshll.u32 %s600, 4
          %s612 = int_to_ptr.vmem [resolvable:$true] %s611
          %617 = dma.hbm_to_vmem [thread:$0]  %s610, 4096, %s612, %s597, 128, 128, 8
        $region64: #{tpu_custom_call.1} parent=39 // pred_fallthru
          _
      $region40: #{tpu_custom_call.1} parent=5 // pred_fallthru
        _
      %p618 = scmp.le.s32.totalorder 1, %s37
      %p619 = scmp.lt.s32.totalorder %s37, 15
      %p620 = pnand %p618, %p619
      %p621 = pneg %p620
      // Predicated region
      $region65: #{tpu_custom_call.1} parent=5 // pred_check
        _
      $region66: #{tpu_custom_call.1} parent=5 // pred_check_branch
        %623 = sbr.rel (%p620) target = $region68
      $region67: #{tpu_custom_call.1} parent=5 // pred_region
        %s624 = ssub.s32 %s37, 1
        %s625 = sand.u32 %s42, 1
        %s626 = scalar_lea.sflag [#allocation5], %s625
        %s627 = sand.u32 %s71, 1
        %s628 = smul.addr %s627, 512
        %s629 = scalar_lea.vmem [#allocation4], %s628
        // Predicated region
        $region69: #{tpu_custom_call.1} parent=67 // pred_check
          %p630 = pneg %p84
        $region70: #{tpu_custom_call.1} parent=67 // pred_check_branch
          %632 = sbr.rel (%p630) target = $region72
        $region71: #{tpu_custom_call.1} parent=67 // pred_region
          %633 = dma.done %s626, 8192
        $region72: #{tpu_custom_call.1} parent=67 // pred_fallthru
          _
        %s634 = sand.u32 %s42, 1
        %s635 = scalar_lea.sflag [#allocation8], %s634
        %s636 = sand.u32 %s97, 1
        %s637 = smul.addr %s636, 2
        %s638 = scalar_lea.vmem [#allocation7], %s637
        // Predicated region
        $region73: #{tpu_custom_call.1} parent=67 // pred_check
          %p639 = pneg %p110
        $region74: #{tpu_custom_call.1} parent=67 // pred_check_branch
          %641 = sbr.rel (%p639) target = $region76
        $region75: #{tpu_custom_call.1} parent=67 // pred_region
          %642 = dma.done %s635, 32
        $region76: #{tpu_custom_call.1} parent=67 // pred_fallthru
          _
        %s643 = sand.u32 %s42, 1
        %s644 = scalar_lea.sflag [#allocation8], %s643
        %s645 = sand.u32 %s123, 1
        %s646 = smul.addr %s645, 2
        %s647 = scalar_lea.vmem [#allocation9], %s646
        // Predicated region
        $region77: #{tpu_custom_call.1} parent=67 // pred_check
          %p648 = pneg %p136
        $region78: #{tpu_custom_call.1} parent=67 // pred_check_branch
          %650 = sbr.rel (%p648) target = $region80
        $region79: #{tpu_custom_call.1} parent=67 // pred_region
          %651 = dma.done %s644, 32
        $region80: #{tpu_custom_call.1} parent=67 // pred_fallthru
          _
        %s652 = sand.u32 %s42, 1
        %s653 = scalar_lea.sflag [#allocation11], %s652
        %s654 = sand.u32 %s149, 1
        %s655 = smul.addr %s654, 256
        %s656 = scalar_lea.vmem [#allocation10], %s655
        // Predicated region
        $region81: #{tpu_custom_call.1} parent=67 // pred_check
          %p657 = pneg %p162
        $region82: #{tpu_custom_call.1} parent=67 // pred_check_branch
          %659 = sbr.rel (%p657) target = $region84
        $region83: #{tpu_custom_call.1} parent=67 // pred_region
          %660 = dma.done %s653, 4096
        $region84: #{tpu_custom_call.1} parent=67 // pred_fallthru
          _
        %s661 = sand.u32 %s42, 1
        %s662 = scalar_lea.sflag [#allocation11], %s661
        %s663 = sand.u32 %s175, 1
        %s664 = smul.addr %s663, 2
        %s665 = scalar_lea.vmem [#allocation12], %s664
        // Predicated region
        $region85: #{tpu_custom_call.1} parent=67 // pred_check
          %p666 = pneg %p188
        $region86: #{tpu_custom_call.1} parent=67 // pred_check_branch
          %668 = sbr.rel (%p666) target = $region88
        $region87: #{tpu_custom_call.1} parent=67 // pred_region
          %669 = dma.done %s662, 32
        $region88: #{tpu_custom_call.1} parent=67 // pred_fallthru
          _
        // Predicated region
        $region89: #{tpu_custom_call.1} parent=67 // pred_check
          %p670 = pneg %p256
        $region90: #{tpu_custom_call.1} parent=67 // pred_check_branch
          %672 = sbr.rel (%p670) target = $region92
        $region91: #{tpu_custom_call.1} parent=67 // pred_region
          %673 = dma.done [#allocation14], 4096
        $region92: #{tpu_custom_call.1} parent=67 // pred_fallthru
          _
        // Predicated region
        $region93: #{tpu_custom_call.1} parent=67 // pred_check
          %p674 = pneg %p282
        $region94: #{tpu_custom_call.1} parent=67 // pred_check_branch
          %676 = sbr.rel (%p674) target = $region96
        $region95: #{tpu_custom_call.1} parent=67 // pred_region
          %677 = dma.done [#allocation14], 4096
        $region96: #{tpu_custom_call.1} parent=67 // pred_fallthru
          _
        // Predicated region
        $region97: #{tpu_custom_call.1} parent=67 // pred_check
          %p678 = pneg %p303
        $region98: #{tpu_custom_call.1} parent=67 // pred_check_branch
          %680 = sbr.rel (%p678) target = $region100
        $region99: #{tpu_custom_call.1} parent=67 // pred_region
          %681 = dma.done [#allocation17], 2048
        $region100: #{tpu_custom_call.1} parent=67 // pred_fallthru
          _
        %s682 = sand.u32 %s42, 1
        %s683 = scalar_lea.sflag [#allocation5], %s682
        %s684 = sand.u32 %s322, 1
        %s685 = smul.addr %s684, 256
        %s686 = scalar_lea.vmem [#allocation18], %s685
        // Predicated region
        $region101: #{tpu_custom_call.1} parent=67 // pred_check
          %p687 = pneg %p335
        $region102: #{tpu_custom_call.1} parent=67 // pred_check_branch
          %689 = sbr.rel (%p687) target = $region104
        $region103: #{tpu_custom_call.1} parent=67 // pred_region
          %690 = dma.done %s683, 4096
        $region104: #{tpu_custom_call.1} parent=67 // pred_fallthru
          _
        %s691 = sand.u32 %s42, 1
        %s692 = scalar_lea.sflag [#allocation5], %s691
        %s693 = sand.u32 %s71, 1
        %s694 = smul.addr %s693, 512
        %s695 = scalar_lea.vmem [#allocation4], %s694
        %p696 = pneg %p84
        %p697 = pneg %p81
        %s698 = sand.u32 %s42, 1
        %s699 = scalar_lea.sflag [#allocation8], %s698
        %s700 = sand.u32 %s97, 1
        %s701 = smul.addr %s700, 2
        %s702 = scalar_lea.vmem [#allocation7], %s701
        %p703 = pneg %p110
        %p704 = pneg %p107
        %s705 = sand.u32 %s42, 1
        %s706 = scalar_lea.sflag [#allocation8], %s705
        %s707 = sand.u32 %s123, 1
        %s708 = smul.addr %s707, 2
        %s709 = scalar_lea.vmem [#allocation9], %s708
        %p710 = pneg %p136
        %p711 = pneg %p133
        %s712 = sand.u32 %s42, 1
        %s713 = scalar_lea.sflag [#allocation11], %s712
        %s714 = sand.u32 %s149, 1
        %s715 = smul.addr %s714, 256
        %s716 = scalar_lea.vmem [#allocation10], %s715
        %p717 = pneg %p162
        %p718 = pneg %p159
        %s719 = sand.u32 %s42, 1
        %s720 = scalar_lea.sflag [#allocation11], %s719
        %s721 = sand.u32 %s175, 1
        %s722 = smul.addr %s721, 2
        %s723 = scalar_lea.vmem [#allocation12], %s722
        %p724 = pneg %p188
        %p725 = pneg %p185
        %p726 = pneg %p209
        %p727 = pneg %p206
        %p728 = pneg %p230
        %p729 = pneg %p227
        %p730 = pneg %p256
        %p731 = pneg %p253
        %p732 = pneg %p282
        %p733 = pneg %p279
        %p734 = pneg %p303
        %p735 = pneg %p300
        %s736 = sand.u32 %s42, 1
        %s737 = scalar_lea.sflag [#allocation5], %s736
        %s738 = sand.u32 %s322, 1
        %s739 = smul.addr %s738, 256
        %s740 = scalar_lea.vmem [#allocation18], %s739
        %p741 = pneg %p335
        %p742 = pneg %p332
        %p743 = pneg %p356
        %p744 = pneg %p353
        %p745 = pneg %p390
        %p746 = pneg %p387
        %s747 = sand.u32 %s377, 1
        %s748 = scalar_lea.sflag [#allocation6], %s747
        %s749 = sand.u32 %s377, 1
        %s750 = smul.addr %s749, 256
        %s751 = scalar_lea.vmem [#allocation19], %s750
        %p752 = pneg %p418
        %p753 = pneg %p415
        %s754 = sand.u32 %s405, 1
        %s755 = scalar_lea.sflag [#allocation21], %s754
        %s756 = sand.u32 %s405, 1
        %s757 = smul.addr %s756, 256
        %s758 = scalar_lea.vmem [#allocation20], %s757
        %s759 = smul.u32 32, %s48
        %s760 = smul.u32 2, %s49
        %s761 = smul.u32 2, %s49
        %s762 = smul.u32 32, %s48
        %s763 = smul.u32 32, %s48
        %s764 = ssub.s32 %s49, 3
        %p765 = scmp.gt.s32.totalorder %s764, 0
        %s766 = scalar_select %p765, %s764, 0
        %s767 = smul.u32 32, %s766
        %p768 = scmp.lt.s32.totalorder %s49, 2
        %s769 = scalar_select %p768, %s49, 2
        %s770 = smul.u32 2, %s769
        %s771 = smul.u32 32, %s48
        %s772 = smul.u32 32, %s48
        %p773 = scmp.eq.s32.totalorder %s49, 0
        // Predicated region
        $region105: #{tpu_custom_call.1} parent=67 // pred_check
          %p774 = pneg %p773
        $region106: #{tpu_custom_call.1} parent=67 // pred_check_branch
          %776 = sbr.rel (%p774) target = $region108
        $region107: #{tpu_custom_call.1} parent=67 // pred_region
          %v777 = vld [vmem:[%s629] sm:$0xff]
          %v778 = vld [vmem:[%s629 + $0x8] sm:$0xff]
          %v779 = vld [vmem:[%s629 + $0x10] sm:$0xff]
          %v780 = vld [vmem:[%s629 + $0x18] sm:$0xff]
          %v781 = vld [vmem:[%s629 + $0x20] sm:$0xff]
          %v782 = vld [vmem:[%s629 + $0x28] sm:$0xff]
          %v783 = vld [vmem:[%s629 + $0x30] sm:$0xff]
          %v784 = vld [vmem:[%s629 + $0x38] sm:$0xff]
          %v785 = vld [vmem:[%s629 + $0x40] sm:$0xff]
          %v786 = vld [vmem:[%s629 + $0x48] sm:$0xff]
          %v787 = vld [vmem:[%s629 + $0x50] sm:$0xff]
          %v788 = vld [vmem:[%s629 + $0x58] sm:$0xff]
          %v789 = vld [vmem:[%s629 + $0x60] sm:$0xff]
          %v790 = vld [vmem:[%s629 + $0x68] sm:$0xff]
          %v791 = vld [vmem:[%s629 + $0x70] sm:$0xff]
          %v792 = vld [vmem:[%s629 + $0x78] sm:$0xff]
          %v793 = vld [vmem:[%s629 + $0x80] sm:$0xff]
          %v794 = vld [vmem:[%s629 + $0x88] sm:$0xff]
          %v795 = vld [vmem:[%s629 + $0x90] sm:$0xff]
          %v796 = vld [vmem:[%s629 + $0x98] sm:$0xff]
          %v797 = vld [vmem:[%s629 + $0xa0] sm:$0xff]
          %v798 = vld [vmem:[%s629 + $0xa8] sm:$0xff]
          %v799 = vld [vmem:[%s629 + $0xb0] sm:$0xff]
          %v800 = vld [vmem:[%s629 + $0xb8] sm:$0xff]
          %v801 = vld [vmem:[%s629 + $0xc0] sm:$0xff]
          %v802 = vld [vmem:[%s629 + $0xc8] sm:$0xff]
          %v803 = vld [vmem:[%s629 + $0xd0] sm:$0xff]
          %v804 = vld [vmem:[%s629 + $0xd8] sm:$0xff]
          %v805 = vld [vmem:[%s629 + $0xe0] sm:$0xff]
          %v806 = vld [vmem:[%s629 + $0xe8] sm:$0xff]
          %v807 = vld [vmem:[%s629 + $0xf0] sm:$0xff]
          %v808 = vld [vmem:[%s629 + $0xf8] sm:$0xff]
          %v809 = vld [vmem:[%s629 + $0x100] sm:$0xff]
          %v810 = vld [vmem:[%s629 + $0x108] sm:$0xff]
          %v811 = vld [vmem:[%s629 + $0x110] sm:$0xff]
          %v812 = vld [vmem:[%s629 + $0x118] sm:$0xff]
          %v813 = vld [vmem:[%s629 + $0x120] sm:$0xff]
          %v814 = vld [vmem:[%s629 + $0x128] sm:$0xff]
          %v815 = vld [vmem:[%s629 + $0x130] sm:$0xff]
          %v816 = vld [vmem:[%s629 + $0x138] sm:$0xff]
          %v817 = vld [vmem:[%s629 + $0x140] sm:$0xff]
          %v818 = vld [vmem:[%s629 + $0x148] sm:$0xff]
          %v819 = vld [vmem:[%s629 + $0x150] sm:$0xff]
          %v820 = vld [vmem:[%s629 + $0x158] sm:$0xff]
          %v821 = vld [vmem:[%s629 + $0x160] sm:$0xff]
          %v822 = vld [vmem:[%s629 + $0x168] sm:$0xff]
          %v823 = vld [vmem:[%s629 + $0x170] sm:$0xff]
          %v824 = vld [vmem:[%s629 + $0x178] sm:$0xff]
          %v825 = vld [vmem:[%s629 + $0x180] sm:$0xff]
          %v826 = vld [vmem:[%s629 + $0x188] sm:$0xff]
          %v827 = vld [vmem:[%s629 + $0x190] sm:$0xff]
          %v828 = vld [vmem:[%s629 + $0x198] sm:$0xff]
          %v829 = vld [vmem:[%s629 + $0x1a0] sm:$0xff]
          %v830 = vld [vmem:[%s629 + $0x1a8] sm:$0xff]
          %v831 = vld [vmem:[%s629 + $0x1b0] sm:$0xff]
          %v832 = vld [vmem:[%s629 + $0x1b8] sm:$0xff]
          %v833 = vld [vmem:[%s629 + $0x1c0] sm:$0xff]
          %v834 = vld [vmem:[%s629 + $0x1c8] sm:$0xff]
          %v835 = vld [vmem:[%s629 + $0x1d0] sm:$0xff]
          %v836 = vld [vmem:[%s629 + $0x1d8] sm:$0xff]
          %v837 = vld [vmem:[%s629 + $0x1e0] sm:$0xff]
          %v838 = vld [vmem:[%s629 + $0x1e8] sm:$0xff]
          %v839 = vld [vmem:[%s629 + $0x1f0] sm:$0xff]
          %v840 = vld [vmem:[%s629 + $0x1f8] sm:$0xff]
          %v841 = vadd.f32 %v777, %v778
          %842 = vadd.xlane.f32.xlu0 %v841
          %v843 = vpop.xlane.xlu0 %842
          %v844 = vadd.f32 %v779, %v780
          %845 = vadd.xlane.f32.xlu0 %v844
          %v846 = vpop.xlane.xlu0 %845
          %v847 = vadd.f32 %v781, %v782
          %848 = vadd.xlane.f32.xlu0 %v847
          %v849 = vpop.xlane.xlu0 %848
          %v850 = vadd.f32 %v783, %v784
          %851 = vadd.xlane.f32.xlu0 %v850
          %v852 = vpop.xlane.xlu0 %851
          %v853 = vadd.f32 %v785, %v786
          %854 = vadd.xlane.f32.xlu0 %v853
          %v855 = vpop.xlane.xlu0 %854
          %v856 = vadd.f32 %v787, %v788
          %857 = vadd.xlane.f32.xlu0 %v856
          %v858 = vpop.xlane.xlu0 %857
          %v859 = vadd.f32 %v789, %v790
          %860 = vadd.xlane.f32.xlu0 %v859
          %v861 = vpop.xlane.xlu0 %860
          %v862 = vadd.f32 %v791, %v792
          %863 = vadd.xlane.f32.xlu0 %v862
          %v864 = vpop.xlane.xlu0 %863
          %v865 = vadd.f32 %v793, %v794
          %866 = vadd.xlane.f32.xlu0 %v865
          %v867 = vpop.xlane.xlu0 %866
          %v868 = vadd.f32 %v795, %v796
          %869 = vadd.xlane.f32.xlu0 %v868
          %v870 = vpop.xlane.xlu0 %869
          %v871 = vadd.f32 %v797, %v798
          %872 = vadd.xlane.f32.xlu0 %v871
          %v873 = vpop.xlane.xlu0 %872
          %v874 = vadd.f32 %v799, %v800
          %875 = vadd.xlane.f32.xlu0 %v874
          %v876 = vpop.xlane.xlu0 %875
          %v877 = vadd.f32 %v801, %v802
          %878 = vadd.xlane.f32.xlu0 %v877
          %v879 = vpop.xlane.xlu0 %878
          %v880 = vadd.f32 %v803, %v804
          %881 = vadd.xlane.f32.xlu0 %v880
          %v882 = vpop.xlane.xlu0 %881
          %v883 = vadd.f32 %v805, %v806
          %884 = vadd.xlane.f32.xlu0 %v883
          %v885 = vpop.xlane.xlu0 %884
          %v886 = vadd.f32 %v807, %v808
          %887 = vadd.xlane.f32.xlu0 %v886
          %v888 = vpop.xlane.xlu0 %887
          %v889 = vadd.f32 %v809, %v810
          %890 = vadd.xlane.f32.xlu0 %v889
          %v891 = vpop.xlane.xlu0 %890
          %v892 = vadd.f32 %v811, %v812
          %893 = vadd.xlane.f32.xlu0 %v892
          %v894 = vpop.xlane.xlu0 %893
          %v895 = vadd.f32 %v813, %v814
          %896 = vadd.xlane.f32.xlu0 %v895
          %v897 = vpop.xlane.xlu0 %896
          %v898 = vadd.f32 %v815, %v816
          %899 = vadd.xlane.f32.xlu0 %v898
          %v900 = vpop.xlane.xlu0 %899
          %v901 = vadd.f32 %v817, %v818
          %902 = vadd.xlane.f32.xlu0 %v901
          %v903 = vpop.xlane.xlu0 %902
          %v904 = vadd.f32 %v819, %v820
          %905 = vadd.xlane.f32.xlu0 %v904
          %v906 = vpop.xlane.xlu0 %905
          %v907 = vadd.f32 %v821, %v822
          %908 = vadd.xlane.f32.xlu0 %v907
          %v909 = vpop.xlane.xlu0 %908
          %v910 = vadd.f32 %v823, %v824
          %911 = vadd.xlane.f32.xlu0 %v910
          %v912 = vpop.xlane.xlu0 %911
          %v913 = vadd.f32 %v825, %v826
          %914 = vadd.xlane.f32.xlu0 %v913
          %v915 = vpop.xlane.xlu0 %914
          %v916 = vadd.f32 %v827, %v828
          %917 = vadd.xlane.f32.xlu0 %v916
          %v918 = vpop.xlane.xlu0 %917
          %v919 = vadd.f32 %v829, %v830
          %920 = vadd.xlane.f32.xlu0 %v919
          %v921 = vpop.xlane.xlu0 %920
          %v922 = vadd.f32 %v831, %v832
          %923 = vadd.xlane.f32.xlu0 %v922
          %v924 = vpop.xlane.xlu0 %923
          %v925 = vadd.f32 %v833, %v834
          %926 = vadd.xlane.f32.xlu0 %v925
          %v927 = vpop.xlane.xlu0 %926
          %v928 = vadd.f32 %v835, %v836
          %929 = vadd.xlane.f32.xlu0 %v928
          %v930 = vpop.xlane.xlu0 %929
          %v931 = vadd.f32 %v837, %v838
          %932 = vadd.xlane.f32.xlu0 %v931
          %v933 = vpop.xlane.xlu0 %932
          %v934 = vadd.f32 %v839, %v840
          %935 = vadd.xlane.f32.xlu0 %v934
          %v936 = vpop.xlane.xlu0 %935
          %v937 = vrcp.pop 256.0
          %v938 = vmul.f32 %v843, %v937
          %v939 = vmul.f32 %v846, %v937
          %v940 = vmul.f32 %v849, %v937
          %v941 = vmul.f32 %v852, %v937
          %v942 = vmul.f32 %v855, %v937
          %v943 = vmul.f32 %v858, %v937
          %v944 = vmul.f32 %v861, %v937
          %v945 = vmul.f32 %v864, %v937
          %v946 = vmul.f32 %v867, %v937
          %v947 = vmul.f32 %v870, %v937
          %v948 = vmul.f32 %v873, %v937
          %v949 = vmul.f32 %v876, %v937
          %v950 = vmul.f32 %v879, %v937
          %v951 = vmul.f32 %v882, %v937
          %v952 = vmul.f32 %v885, %v937
          %v953 = vmul.f32 %v888, %v937
          %v954 = vmul.f32 %v891, %v937
          %v955 = vmul.f32 %v894, %v937
          %v956 = vmul.f32 %v897, %v937
          %v957 = vmul.f32 %v900, %v937
          %v958 = vmul.f32 %v903, %v937
          %v959 = vmul.f32 %v906, %v937
          %v960 = vmul.f32 %v909, %v937
          %v961 = vmul.f32 %v912, %v937
          %v962 = vmul.f32 %v915, %v937
          %v963 = vmul.f32 %v918, %v937
          %v964 = vmul.f32 %v921, %v937
          %v965 = vmul.f32 %v924, %v937
          %v966 = vmul.f32 %v927, %v937
          %v967 = vmul.f32 %v930, %v937
          %v968 = vmul.f32 %v933, %v937
          %v969 = vmul.f32 %v936, %v937
          %v970 = vsub.f32 %v777, %v938
          %v971 = vsub.f32 %v778, %v938
          %v972 = vsub.f32 %v779, %v939
          %v973 = vsub.f32 %v780, %v939
          %v974 = vsub.f32 %v781, %v940
          %v975 = vsub.f32 %v782, %v940
          %v976 = vsub.f32 %v783, %v941
          %v977 = vsub.f32 %v784, %v941
          %v978 = vsub.f32 %v785, %v942
          %v979 = vsub.f32 %v786, %v942
          %v980 = vsub.f32 %v787, %v943
          %v981 = vsub.f32 %v788, %v943
          %v982 = vsub.f32 %v789, %v944
          %v983 = vsub.f32 %v790, %v944
          %v984 = vsub.f32 %v791, %v945
          %v985 = vsub.f32 %v792, %v945
          %v986 = vsub.f32 %v793, %v946
          %v987 = vsub.f32 %v794, %v946
          %v988 = vsub.f32 %v795, %v947
          %v989 = vsub.f32 %v796, %v947
          %v990 = vsub.f32 %v797, %v948
          %v991 = vsub.f32 %v798, %v948
          %v992 = vsub.f32 %v799, %v949
          %v993 = vsub.f32 %v800, %v949
          %v994 = vsub.f32 %v801, %v950
          %v995 = vsub.f32 %v802, %v950
          %v996 = vsub.f32 %v803, %v951
          %v997 = vsub.f32 %v804, %v951
          %v998 = vsub.f32 %v805, %v952
          %v999 = vsub.f32 %v806, %v952
          %v1000 = vsub.f32 %v807, %v953
          %v1001 = vsub.f32 %v808, %v953
          %v1002 = vsub.f32 %v809, %v954
          %v1003 = vsub.f32 %v810, %v954
          %v1004 = vsub.f32 %v811, %v955
          %v1005 = vsub.f32 %v812, %v955
          %v1006 = vsub.f32 %v813, %v956
          %v1007 = vsub.f32 %v814, %v956
          %v1008 = vsub.f32 %v815, %v957
          %v1009 = vsub.f32 %v816, %v957
          %v1010 = vsub.f32 %v817, %v958
          %v1011 = vsub.f32 %v818, %v958
          %v1012 = vsub.f32 %v819, %v959
          %v1013 = vsub.f32 %v820, %v959
          %v1014 = vsub.f32 %v821, %v960
          %v1015 = vsub.f32 %v822, %v960
          %v1016 = vsub.f32 %v823, %v961
          %v1017 = vsub.f32 %v824, %v961
          %v1018 = vsub.f32 %v825, %v962
          %v1019 = vsub.f32 %v826, %v962
          %v1020 = vsub.f32 %v827, %v963
          %v1021 = vsub.f32 %v828, %v963
          %v1022 = vsub.f32 %v829, %v964
          %v1023 = vsub.f32 %v830, %v964
          %v1024 = vsub.f32 %v831, %v965
          %v1025 = vsub.f32 %v832, %v965
          %v1026 = vsub.f32 %v833, %v966
          %v1027 = vsub.f32 %v834, %v966
          %v1028 = vsub.f32 %v835, %v967
          %v1029 = vsub.f32 %v836, %v967
          %v1030 = vsub.f32 %v837, %v968
          %v1031 = vsub.f32 %v838, %v968
          %v1032 = vsub.f32 %v839, %v969
          %v1033 = vsub.f32 %v840, %v969
          %v1034 = vmul.f32 %v970, %v970
          %v1035 = vmul.f32 %v971, %v971
          %v1036 = vmul.f32 %v972, %v972
          %v1037 = vmul.f32 %v973, %v973
          %v1038 = vmul.f32 %v974, %v974
          %v1039 = vmul.f32 %v975, %v975
          %v1040 = vmul.f32 %v976, %v976
          %v1041 = vmul.f32 %v977, %v977
          %v1042 = vmul.f32 %v978, %v978
          %v1043 = vmul.f32 %v979, %v979
          %v1044 = vmul.f32 %v980, %v980
          %v1045 = vmul.f32 %v981, %v981
          %v1046 = vmul.f32 %v982, %v982
          %v1047 = vmul.f32 %v983, %v983
          %v1048 = vmul.f32 %v984, %v984
          %v1049 = vmul.f32 %v985, %v985
          %v1050 = vmul.f32 %v986, %v986
          %v1051 = vmul.f32 %v987, %v987
          %v1052 = vmul.f32 %v988, %v988
          %v1053 = vmul.f32 %v989, %v989
          %v1054 = vmul.f32 %v990, %v990
          %v1055 = vmul.f32 %v991, %v991
          %v1056 = vmul.f32 %v992, %v992
          %v1057 = vmul.f32 %v993, %v993
          %v1058 = vmul.f32 %v994, %v994
          %v1059 = vmul.f32 %v995, %v995
          %v1060 = vmul.f32 %v996, %v996
          %v1061 = vmul.f32 %v997, %v997
          %v1062 = vmul.f32 %v998, %v998
          %v1063 = vmul.f32 %v999, %v999
          %v1064 = vmul.f32 %v1000, %v1000
          %v1065 = vmul.f32 %v1001, %v1001
          %v1066 = vmul.f32 %v1002, %v1002
          %v1067 = vmul.f32 %v1003, %v1003
          %v1068 = vmul.f32 %v1004, %v1004
          %v1069 = vmul.f32 %v1005, %v1005
          %v1070 = vmul.f32 %v1006, %v1006
          %v1071 = vmul.f32 %v1007, %v1007
          %v1072 = vmul.f32 %v1008, %v1008
          %v1073 = vmul.f32 %v1009, %v1009
          %v1074 = vmul.f32 %v1010, %v1010
          %v1075 = vmul.f32 %v1011, %v1011
          %v1076 = vmul.f32 %v1012, %v1012
          %v1077 = vmul.f32 %v1013, %v1013
          %v1078 = vmul.f32 %v1014, %v1014
          %v1079 = vmul.f32 %v1015, %v1015
          %v1080 = vmul.f32 %v1016, %v1016
          %v1081 = vmul.f32 %v1017, %v1017
          %v1082 = vmul.f32 %v1018, %v1018
          %v1083 = vmul.f32 %v1019, %v1019
          %v1084 = vmul.f32 %v1020, %v1020
          %v1085 = vmul.f32 %v1021, %v1021
          %v1086 = vmul.f32 %v1022, %v1022
          %v1087 = vmul.f32 %v1023, %v1023
          %v1088 = vmul.f32 %v1024, %v1024
          %v1089 = vmul.f32 %v1025, %v1025
          %v1090 = vmul.f32 %v1026, %v1026
          %v1091 = vmul.f32 %v1027, %v1027
          %v1092 = vmul.f32 %v1028, %v1028
          %v1093 = vmul.f32 %v1029, %v1029
          %v1094 = vmul.f32 %v1030, %v1030
          %v1095 = vmul.f32 %v1031, %v1031
          %v1096 = vmul.f32 %v1032, %v1032
          %v1097 = vmul.f32 %v1033, %v1033
          %v1098 = vadd.f32 %v1034, %v1035
          %1099 = vadd.xlane.f32.xlu0 %v1098
          %v1100 = vpop.xlane.xlu0 %1099
          %v1101 = vadd.f32 %v1036, %v1037
          %1102 = vadd.xlane.f32.xlu0 %v1101
          %v1103 = vpop.xlane.xlu0 %1102
          %v1104 = vadd.f32 %v1038, %v1039
          %1105 = vadd.xlane.f32.xlu0 %v1104
          %v1106 = vpop.xlane.xlu0 %1105
          %v1107 = vadd.f32 %v1040, %v1041
          %1108 = vadd.xlane.f32.xlu0 %v1107
          %v1109 = vpop.xlane.xlu0 %1108
          %v1110 = vadd.f32 %v1042, %v1043
          %1111 = vadd.xlane.f32.xlu0 %v1110
          %v1112 = vpop.xlane.xlu0 %1111
          %v1113 = vadd.f32 %v1044, %v1045
          %1114 = vadd.xlane.f32.xlu0 %v1113
          %v1115 = vpop.xlane.xlu0 %1114
          %v1116 = vadd.f32 %v1046, %v1047
          %1117 = vadd.xlane.f32.xlu0 %v1116
          %v1118 = vpop.xlane.xlu0 %1117
          %v1119 = vadd.f32 %v1048, %v1049
          %1120 = vadd.xlane.f32.xlu0 %v1119
          %v1121 = vpop.xlane.xlu0 %1120
          %v1122 = vadd.f32 %v1050, %v1051
          %1123 = vadd.xlane.f32.xlu0 %v1122
          %v1124 = vpop.xlane.xlu0 %1123
          %v1125 = vadd.f32 %v1052, %v1053
          %1126 = vadd.xlane.f32.xlu0 %v1125
          %v1127 = vpop.xlane.xlu0 %1126
          %v1128 = vadd.f32 %v1054, %v1055
          %1129 = vadd.xlane.f32.xlu0 %v1128
          %v1130 = vpop.xlane.xlu0 %1129
          %v1131 = vadd.f32 %v1056, %v1057
          %1132 = vadd.xlane.f32.xlu0 %v1131
          %v1133 = vpop.xlane.xlu0 %1132
          %v1134 = vadd.f32 %v1058, %v1059
          %1135 = vadd.xlane.f32.xlu0 %v1134
          %v1136 = vpop.xlane.xlu0 %1135
          %v1137 = vadd.f32 %v1060, %v1061
          %1138 = vadd.xlane.f32.xlu0 %v1137
          %v1139 = vpop.xlane.xlu0 %1138
          %v1140 = vadd.f32 %v1062, %v1063
          %1141 = vadd.xlane.f32.xlu0 %v1140
          %v1142 = vpop.xlane.xlu0 %1141
          %v1143 = vadd.f32 %v1064, %v1065
          %1144 = vadd.xlane.f32.xlu0 %v1143
          %v1145 = vpop.xlane.xlu0 %1144
          %v1146 = vadd.f32 %v1066, %v1067
          %1147 = vadd.xlane.f32.xlu0 %v1146
          %v1148 = vpop.xlane.xlu0 %1147
          %v1149 = vadd.f32 %v1068, %v1069
          %1150 = vadd.xlane.f32.xlu0 %v1149
          %v1151 = vpop.xlane.xlu0 %1150
          %v1152 = vadd.f32 %v1070, %v1071
          %1153 = vadd.xlane.f32.xlu0 %v1152
          %v1154 = vpop.xlane.xlu0 %1153
          %v1155 = vadd.f32 %v1072, %v1073
          %1156 = vadd.xlane.f32.xlu0 %v1155
          %v1157 = vpop.xlane.xlu0 %1156
          %v1158 = vadd.f32 %v1074, %v1075
          %1159 = vadd.xlane.f32.xlu0 %v1158
          %v1160 = vpop.xlane.xlu0 %1159
          %v1161 = vadd.f32 %v1076, %v1077
          %1162 = vadd.xlane.f32.xlu0 %v1161
          %v1163 = vpop.xlane.xlu0 %1162
          %v1164 = vadd.f32 %v1078, %v1079
          %1165 = vadd.xlane.f32.xlu0 %v1164
          %v1166 = vpop.xlane.xlu0 %1165
          %v1167 = vadd.f32 %v1080, %v1081
          %1168 = vadd.xlane.f32.xlu0 %v1167
          %v1169 = vpop.xlane.xlu0 %1168
          %v1170 = vadd.f32 %v1082, %v1083
          %1171 = vadd.xlane.f32.xlu0 %v1170
          %v1172 = vpop.xlane.xlu0 %1171
          %v1173 = vadd.f32 %v1084, %v1085
          %1174 = vadd.xlane.f32.xlu0 %v1173
          %v1175 = vpop.xlane.xlu0 %1174
          %v1176 = vadd.f32 %v1086, %v1087
          %1177 = vadd.xlane.f32.xlu0 %v1176
          %v1178 = vpop.xlane.xlu0 %1177
          %v1179 = vadd.f32 %v1088, %v1089
          %1180 = vadd.xlane.f32.xlu0 %v1179
          %v1181 = vpop.xlane.xlu0 %1180
          %v1182 = vadd.f32 %v1090, %v1091
          %1183 = vadd.xlane.f32.xlu0 %v1182
          %v1184 = vpop.xlane.xlu0 %1183
          %v1185 = vadd.f32 %v1092, %v1093
          %1186 = vadd.xlane.f32.xlu0 %v1185
          %v1187 = vpop.xlane.xlu0 %1186
          %v1188 = vadd.f32 %v1094, %v1095
          %1189 = vadd.xlane.f32.xlu0 %v1188
          %v1190 = vpop.xlane.xlu0 %1189
          %v1191 = vadd.f32 %v1096, %v1097
          %1192 = vadd.xlane.f32.xlu0 %v1191
          %v1193 = vpop.xlane.xlu0 %1192
          %v1194 = vmul.f32 %v1100, %v937
          %v1195 = vmul.f32 %v1103, %v937
          %v1196 = vmul.f32 %v1106, %v937
          %v1197 = vmul.f32 %v1109, %v937
          %v1198 = vmul.f32 %v1112, %v937
          %v1199 = vmul.f32 %v1115, %v937
          %v1200 = vmul.f32 %v1118, %v937
          %v1201 = vmul.f32 %v1121, %v937
          %v1202 = vmul.f32 %v1124, %v937
          %v1203 = vmul.f32 %v1127, %v937
          %v1204 = vmul.f32 %v1130, %v937
          %v1205 = vmul.f32 %v1133, %v937
          %v1206 = vmul.f32 %v1136, %v937
          %v1207 = vmul.f32 %v1139, %v937
          %v1208 = vmul.f32 %v1142, %v937
          %v1209 = vmul.f32 %v1145, %v937
          %v1210 = vmul.f32 %v1148, %v937
          %v1211 = vmul.f32 %v1151, %v937
          %v1212 = vmul.f32 %v1154, %v937
          %v1213 = vmul.f32 %v1157, %v937
          %v1214 = vmul.f32 %v1160, %v937
          %v1215 = vmul.f32 %v1163, %v937
          %v1216 = vmul.f32 %v1166, %v937
          %v1217 = vmul.f32 %v1169, %v937
          %v1218 = vmul.f32 %v1172, %v937
          %v1219 = vmul.f32 %v1175, %v937
          %v1220 = vmul.f32 %v1178, %v937
          %v1221 = vmul.f32 %v1181, %v937
          %v1222 = vmul.f32 %v1184, %v937
          %v1223 = vmul.f32 %v1187, %v937
          %v1224 = vmul.f32 %v1190, %v937
          %v1225 = vmul.f32 %v1193, %v937
          %v1226 = vadd.f32 %v1194, 1e-06
          %v1227 = vadd.f32 %v1195, 1e-06
          %v1228 = vadd.f32 %v1196, 1e-06
          %v1229 = vadd.f32 %v1197, 1e-06
          %v1230 = vadd.f32 %v1198, 1e-06
          %v1231 = vadd.f32 %v1199, 1e-06
          %v1232 = vadd.f32 %v1200, 1e-06
          %v1233 = vadd.f32 %v1201, 1e-06
          %v1234 = vadd.f32 %v1202, 1e-06
          %v1235 = vadd.f32 %v1203, 1e-06
          %v1236 = vadd.f32 %v1204, 1e-06
          %v1237 = vadd.f32 %v1205, 1e-06
          %v1238 = vadd.f32 %v1206, 1e-06
          %v1239 = vadd.f32 %v1207, 1e-06
          %v1240 = vadd.f32 %v1208, 1e-06
          %v1241 = vadd.f32 %v1209, 1e-06
          %v1242 = vadd.f32 %v1210, 1e-06
          %v1243 = vadd.f32 %v1211, 1e-06
          %v1244 = vadd.f32 %v1212, 1e-06
          %v1245 = vadd.f32 %v1213, 1e-06
          %v1246 = vadd.f32 %v1214, 1e-06
          %v1247 = vadd.f32 %v1215, 1e-06
          %v1248 = vadd.f32 %v1216, 1e-06
          %v1249 = vadd.f32 %v1217, 1e-06
          %v1250 = vadd.f32 %v1218, 1e-06
          %v1251 = vadd.f32 %v1219, 1e-06
          %v1252 = vadd.f32 %v1220, 1e-06
          %v1253 = vadd.f32 %v1221, 1e-06
          %v1254 = vadd.f32 %v1222, 1e-06
          %v1255 = vadd.f32 %v1223, 1e-06
          %v1256 = vadd.f32 %v1224, 1e-06
          %v1257 = vadd.f32 %v1225, 1e-06
          %v1258 = vrsqrt.pop %v1226
          %v1259 = vrsqrt.pop %v1227
          %v1260 = vrsqrt.pop %v1228
          %v1261 = vrsqrt.pop %v1229
          %v1262 = vrsqrt.pop %v1230
          %v1263 = vrsqrt.pop %v1231
          %v1264 = vrsqrt.pop %v1232
          %v1265 = vrsqrt.pop %v1233
          %v1266 = vrsqrt.pop %v1234
          %v1267 = vrsqrt.pop %v1235
          %v1268 = vrsqrt.pop %v1236
          %v1269 = vrsqrt.pop %v1237
          %v1270 = vrsqrt.pop %v1238
          %v1271 = vrsqrt.pop %v1239
          %v1272 = vrsqrt.pop %v1240
          %v1273 = vrsqrt.pop %v1241
          %v1274 = vrsqrt.pop %v1242
          %v1275 = vrsqrt.pop %v1243
          %v1276 = vrsqrt.pop %v1244
          %v1277 = vrsqrt.pop %v1245
          %v1278 = vrsqrt.pop %v1246
          %v1279 = vrsqrt.pop %v1247
          %v1280 = vrsqrt.pop %v1248
          %v1281 = vrsqrt.pop %v1249
          %v1282 = vrsqrt.pop %v1250
          %v1283 = vrsqrt.pop %v1251
          %v1284 = vrsqrt.pop %v1252
          %v1285 = vrsqrt.pop %v1253
          %v1286 = vrsqrt.pop %v1254
          %v1287 = vrsqrt.pop %v1255
          %v1288 = vrsqrt.pop %v1256
          %v1289 = vrsqrt.pop %v1257
          %v1290 = vmul.f32 %v970, %v1258
          %v1291 = vmul.f32 %v971, %v1258
          %v1292 = vmul.f32 %v972, %v1259
          %v1293 = vmul.f32 %v973, %v1259
          %v1294 = vmul.f32 %v974, %v1260
          %v1295 = vmul.f32 %v975, %v1260
          %v1296 = vmul.f32 %v976, %v1261
          %v1297 = vmul.f32 %v977, %v1261
          %v1298 = vmul.f32 %v978, %v1262
          %v1299 = vmul.f32 %v979, %v1262
          %v1300 = vmul.f32 %v980, %v1263
          %v1301 = vmul.f32 %v981, %v1263
          %v1302 = vmul.f32 %v982, %v1264
          %v1303 = vmul.f32 %v983, %v1264
          %v1304 = vmul.f32 %v984, %v1265
          %v1305 = vmul.f32 %v985, %v1265
          %v1306 = vmul.f32 %v986, %v1266
          %v1307 = vmul.f32 %v987, %v1266
          %v1308 = vmul.f32 %v988, %v1267
          %v1309 = vmul.f32 %v989, %v1267
          %v1310 = vmul.f32 %v990, %v1268
          %v1311 = vmul.f32 %v991, %v1268
          %v1312 = vmul.f32 %v992, %v1269
          %v1313 = vmul.f32 %v993, %v1269
          %v1314 = vmul.f32 %v994, %v1270
          %v1315 = vmul.f32 %v995, %v1270
          %v1316 = vmul.f32 %v996, %v1271
          %v1317 = vmul.f32 %v997, %v1271
          %v1318 = vmul.f32 %v998, %v1272
          %v1319 = vmul.f32 %v999, %v1272
          %v1320 = vmul.f32 %v1000, %v1273
          %v1321 = vmul.f32 %v1001, %v1273
          %v1322 = vmul.f32 %v1002, %v1274
          %v1323 = vmul.f32 %v1003, %v1274
          %v1324 = vmul.f32 %v1004, %v1275
          %v1325 = vmul.f32 %v1005, %v1275
          %v1326 = vmul.f32 %v1006, %v1276
          %v1327 = vmul.f32 %v1007, %v1276
          %v1328 = vmul.f32 %v1008, %v1277
          %v1329 = vmul.f32 %v1009, %v1277
          %v1330 = vmul.f32 %v1010, %v1278
          %v1331 = vmul.f32 %v1011, %v1278
          %v1332 = vmul.f32 %v1012, %v1279
          %v1333 = vmul.f32 %v1013, %v1279
          %v1334 = vmul.f32 %v1014, %v1280
          %v1335 = vmul.f32 %v1015, %v1280
          %v1336 = vmul.f32 %v1016, %v1281
          %v1337 = vmul.f32 %v1017, %v1281
          %v1338 = vmul.f32 %v1018, %v1282
          %v1339 = vmul.f32 %v1019, %v1282
          %v1340 = vmul.f32 %v1020, %v1283
          %v1341 = vmul.f32 %v1021, %v1283
          %v1342 = vmul.f32 %v1022, %v1284
          %v1343 = vmul.f32 %v1023, %v1284
          %v1344 = vmul.f32 %v1024, %v1285
          %v1345 = vmul.f32 %v1025, %v1285
          %v1346 = vmul.f32 %v1026, %v1286
          %v1347 = vmul.f32 %v1027, %v1286
          %v1348 = vmul.f32 %v1028, %v1287
          %v1349 = vmul.f32 %v1029, %v1287
          %v1350 = vmul.f32 %v1030, %v1288
          %v1351 = vmul.f32 %v1031, %v1288
          %v1352 = vmul.f32 %v1032, %v1289
          %v1353 = vmul.f32 %v1033, %v1289
          %v1354 = vld [vmem:[%s647] sm:$0x3]
          %v1355 = vadd.f32 %v1354, 1.0
          %v1357 = vlaneseq
          %v1358 = vshrl.u32 %v1357, 7
          %v1359 = vsub.s32 0, %v1358
          %v1360 = vrot.slane %v1355, %v1359
          %v1361 = vlaneseq
          %v1362 = vshrl.u32 %v1361, 7
          %v1363 = vsub.s32 1, %v1362
          %v1364 = vrot.slane %v1355, %v1363
          %v1367 = vmul.f32 %v1290, %v1360
          %v1368 = vmul.f32 %v1291, %v1364
          %v1369 = vmul.f32 %v1292, %v1360
          %v1370 = vmul.f32 %v1293, %v1364
          %v1371 = vmul.f32 %v1294, %v1360
          %v1372 = vmul.f32 %v1295, %v1364
          %v1373 = vmul.f32 %v1296, %v1360
          %v1374 = vmul.f32 %v1297, %v1364
          %v1375 = vmul.f32 %v1298, %v1360
          %v1376 = vmul.f32 %v1299, %v1364
          %v1377 = vmul.f32 %v1300, %v1360
          %v1378 = vmul.f32 %v1301, %v1364
          %v1379 = vmul.f32 %v1302, %v1360
          %v1380 = vmul.f32 %v1303, %v1364
          %v1381 = vmul.f32 %v1304, %v1360
          %v1382 = vmul.f32 %v1305, %v1364
          %v1383 = vmul.f32 %v1306, %v1360
          %v1384 = vmul.f32 %v1307, %v1364
          %v1385 = vmul.f32 %v1308, %v1360
          %v1386 = vmul.f32 %v1309, %v1364
          %v1387 = vmul.f32 %v1310, %v1360
          %v1388 = vmul.f32 %v1311, %v1364
          %v1389 = vmul.f32 %v1312, %v1360
          %v1390 = vmul.f32 %v1313, %v1364
          %v1391 = vmul.f32 %v1314, %v1360
          %v1392 = vmul.f32 %v1315, %v1364
          %v1393 = vmul.f32 %v1316, %v1360
          %v1394 = vmul.f32 %v1317, %v1364
          %v1395 = vmul.f32 %v1318, %v1360
          %v1396 = vmul.f32 %v1319, %v1364
          %v1397 = vmul.f32 %v1320, %v1360
          %v1398 = vmul.f32 %v1321, %v1364
          %v1399 = vmul.f32 %v1322, %v1360
          %v1400 = vmul.f32 %v1323, %v1364
          %v1401 = vmul.f32 %v1324, %v1360
          %v1402 = vmul.f32 %v1325, %v1364
          %v1403 = vmul.f32 %v1326, %v1360
          %v1404 = vmul.f32 %v1327, %v1364
          %v1405 = vmul.f32 %v1328, %v1360
          %v1406 = vmul.f32 %v1329, %v1364
          %v1407 = vmul.f32 %v1330, %v1360
          %v1408 = vmul.f32 %v1331, %v1364
          %v1409 = vmul.f32 %v1332, %v1360
          %v1410 = vmul.f32 %v1333, %v1364
          %v1411 = vmul.f32 %v1334, %v1360
          %v1412 = vmul.f32 %v1335, %v1364
          %v1413 = vmul.f32 %v1336, %v1360
          %v1414 = vmul.f32 %v1337, %v1364
          %v1415 = vmul.f32 %v1338, %v1360
          %v1416 = vmul.f32 %v1339, %v1364
          %v1417 = vmul.f32 %v1340, %v1360
          %v1418 = vmul.f32 %v1341, %v1364
          %v1419 = vmul.f32 %v1342, %v1360
          %v1420 = vmul.f32 %v1343, %v1364
          %v1421 = vmul.f32 %v1344, %v1360
          %v1422 = vmul.f32 %v1345, %v1364
          %v1423 = vmul.f32 %v1346, %v1360
          %v1424 = vmul.f32 %v1347, %v1364
          %v1425 = vmul.f32 %v1348, %v1360
          %v1426 = vmul.f32 %v1349, %v1364
          %v1427 = vmul.f32 %v1350, %v1360
          %v1428 = vmul.f32 %v1351, %v1364
          %v1429 = vmul.f32 %v1352, %v1360
          %v1430 = vmul.f32 %v1353, %v1364
          %v1431 = vld [vmem:[%s638] sm:$0x3]
          %v1433 = vlaneseq
          %v1434 = vshrl.u32 %v1433, 7
          %v1435 = vsub.s32 0, %v1434
          %v1436 = vrot.slane %v1431, %v1435
          %v1437 = vlaneseq
          %v1438 = vshrl.u32 %v1437, 7
          %v1439 = vsub.s32 1, %v1438
          %v1440 = vrot.slane %v1431, %v1439
          %v1443 = vadd.f32 %v1367, %v1436
          %v1444 = vadd.f32 %v1368, %v1440
          %v1445 = vadd.f32 %v1369, %v1436
          %v1446 = vadd.f32 %v1370, %v1440
          %v1447 = vadd.f32 %v1371, %v1436
          %v1448 = vadd.f32 %v1372, %v1440
          %v1449 = vadd.f32 %v1373, %v1436
          %v1450 = vadd.f32 %v1374, %v1440
          %v1451 = vadd.f32 %v1375, %v1436
          %v1452 = vadd.f32 %v1376, %v1440
          %v1453 = vadd.f32 %v1377, %v1436
          %v1454 = vadd.f32 %v1378, %v1440
          %v1455 = vadd.f32 %v1379, %v1436
          %v1456 = vadd.f32 %v1380, %v1440
          %v1457 = vadd.f32 %v1381, %v1436
          %v1458 = vadd.f32 %v1382, %v1440
          %v1459 = vadd.f32 %v1383, %v1436
          %v1460 = vadd.f32 %v1384, %v1440
          %v1461 = vadd.f32 %v1385, %v1436
          %v1462 = vadd.f32 %v1386, %v1440
          %v1463 = vadd.f32 %v1387, %v1436
          %v1464 = vadd.f32 %v1388, %v1440
          %v1465 = vadd.f32 %v1389, %v1436
          %v1466 = vadd.f32 %v1390, %v1440
          %v1467 = vadd.f32 %v1391, %v1436
          %v1468 = vadd.f32 %v1392, %v1440
          %v1469 = vadd.f32 %v1393, %v1436
          %v1470 = vadd.f32 %v1394, %v1440
          %v1471 = vadd.f32 %v1395, %v1436
          %v1472 = vadd.f32 %v1396, %v1440
          %v1473 = vadd.f32 %v1397, %v1436
          %v1474 = vadd.f32 %v1398, %v1440
          %v1475 = vadd.f32 %v1399, %v1436
          %v1476 = vadd.f32 %v1400, %v1440
          %v1477 = vadd.f32 %v1401, %v1436
          %v1478 = vadd.f32 %v1402, %v1440
          %v1479 = vadd.f32 %v1403, %v1436
          %v1480 = vadd.f32 %v1404, %v1440
          %v1481 = vadd.f32 %v1405, %v1436
          %v1482 = vadd.f32 %v1406, %v1440
          %v1483 = vadd.f32 %v1407, %v1436
          %v1484 = vadd.f32 %v1408, %v1440
          %v1485 = vadd.f32 %v1409, %v1436
          %v1486 = vadd.f32 %v1410, %v1440
          %v1487 = vadd.f32 %v1411, %v1436
          %v1488 = vadd.f32 %v1412, %v1440
          %v1489 = vadd.f32 %v1413, %v1436
          %v1490 = vadd.f32 %v1414, %v1440
          %v1491 = vadd.f32 %v1415, %v1436
          %v1492 = vadd.f32 %v1416, %v1440
          %v1493 = vadd.f32 %v1417, %v1436
          %v1494 = vadd.f32 %v1418, %v1440
          %v1495 = vadd.f32 %v1419, %v1436
          %v1496 = vadd.f32 %v1420, %v1440
          %v1497 = vadd.f32 %v1421, %v1436
          %v1498 = vadd.f32 %v1422, %v1440
          %v1499 = vadd.f32 %v1423, %v1436
          %v1500 = vadd.f32 %v1424, %v1440
          %v1501 = vadd.f32 %v1425, %v1436
          %v1502 = vadd.f32 %v1426, %v1440
          %v1503 = vadd.f32 %v1427, %v1436
          %v1504 = vadd.f32 %v1428, %v1440
          %v1505 = vadd.f32 %v1429, %v1436
          %v1506 = vadd.f32 %v1430, %v1440
          %v1507 = vpack.c.bf16 %v1445, %v1443
          %v1508 = vpack.c.bf16 %v1446, %v1444
          %v1509 = vpack.c.bf16 %v1449, %v1447
          %v1510 = vpack.c.bf16 %v1450, %v1448
          %v1511 = vpack.c.bf16 %v1453, %v1451
          %v1512 = vpack.c.bf16 %v1454, %v1452
          %v1513 = vpack.c.bf16 %v1457, %v1455
          %v1514 = vpack.c.bf16 %v1458, %v1456
          %v1515 = vpack.c.bf16 %v1461, %v1459
          %v1516 = vpack.c.bf16 %v1462, %v1460
          %v1517 = vpack.c.bf16 %v1465, %v1463
          %v1518 = vpack.c.bf16 %v1466, %v1464
          %v1519 = vpack.c.bf16 %v1469, %v1467
          %v1520 = vpack.c.bf16 %v1470, %v1468
          %v1521 = vpack.c.bf16 %v1473, %v1471
          %v1522 = vpack.c.bf16 %v1474, %v1472
          %v1523 = vpack.c.bf16 %v1477, %v1475
          %v1524 = vpack.c.bf16 %v1478, %v1476
          %v1525 = vpack.c.bf16 %v1481, %v1479
          %v1526 = vpack.c.bf16 %v1482, %v1480
          %v1527 = vpack.c.bf16 %v1485, %v1483
          %v1528 = vpack.c.bf16 %v1486, %v1484
          %v1529 = vpack.c.bf16 %v1489, %v1487
          %v1530 = vpack.c.bf16 %v1490, %v1488
          %v1531 = vpack.c.bf16 %v1493, %v1491
          %v1532 = vpack.c.bf16 %v1494, %v1492
          %v1533 = vpack.c.bf16 %v1497, %v1495
          %v1534 = vpack.c.bf16 %v1498, %v1496
          %v1535 = vpack.c.bf16 %v1501, %v1499
          %v1536 = vpack.c.bf16 %v1502, %v1500
          %v1537 = vpack.c.bf16 %v1505, %v1503
          %v1538 = vpack.c.bf16 %v1506, %v1504
          %v1571 = vunpack.c.l.b16 %v1507
          %v1572 = vunpack.c.l.b16 %v1508
          %v1573 = vunpack.c.h.b16 %v1507
          %v1574 = vunpack.c.h.b16 %v1508
          %v1575 = vunpack.c.l.b16 %v1509
          %v1576 = vunpack.c.l.b16 %v1510
          %v1577 = vunpack.c.h.b16 %v1509
          %v1578 = vunpack.c.h.b16 %v1510
          %v1579 = vunpack.c.l.b16 %v1511
          %v1580 = vunpack.c.l.b16 %v1512
          %v1581 = vunpack.c.h.b16 %v1511
          %v1582 = vunpack.c.h.b16 %v1512
          %v1583 = vunpack.c.l.b16 %v1513
          %v1584 = vunpack.c.l.b16 %v1514
          %v1585 = vunpack.c.h.b16 %v1513
          %v1586 = vunpack.c.h.b16 %v1514
          %v1587 = vunpack.c.l.b16 %v1515
          %v1588 = vunpack.c.l.b16 %v1516
          %v1589 = vunpack.c.h.b16 %v1515
          %v1590 = vunpack.c.h.b16 %v1516
          %v1591 = vunpack.c.l.b16 %v1517
          %v1592 = vunpack.c.l.b16 %v1518
          %v1593 = vunpack.c.h.b16 %v1517
          %v1594 = vunpack.c.h.b16 %v1518
          %v1595 = vunpack.c.l.b16 %v1519
          %v1596 = vunpack.c.l.b16 %v1520
          %v1597 = vunpack.c.h.b16 %v1519
          %v1598 = vunpack.c.h.b16 %v1520
          %v1599 = vunpack.c.l.b16 %v1521
          %v1600 = vunpack.c.l.b16 %v1522
          %v1601 = vunpack.c.h.b16 %v1521
          %v1602 = vunpack.c.h.b16 %v1522
          %v1603 = vunpack.c.l.b16 %v1523
          %v1604 = vunpack.c.l.b16 %v1524
          %v1605 = vunpack.c.h.b16 %v1523
          %v1606 = vunpack.c.h.b16 %v1524
          %v1607 = vunpack.c.l.b16 %v1525
          %v1608 = vunpack.c.l.b16 %v1526
          %v1609 = vunpack.c.h.b16 %v1525
          %v1610 = vunpack.c.h.b16 %v1526
          %v1611 = vunpack.c.l.b16 %v1527
          %v1612 = vunpack.c.l.b16 %v1528
          %v1613 = vunpack.c.h.b16 %v1527
          %v1614 = vunpack.c.h.b16 %v1528
          %v1615 = vunpack.c.l.b16 %v1529
          %v1616 = vunpack.c.l.b16 %v1530
          %v1617 = vunpack.c.h.b16 %v1529
          %v1618 = vunpack.c.h.b16 %v1530
          %v1619 = vunpack.c.l.b16 %v1531
          %v1620 = vunpack.c.l.b16 %v1532
          %v1621 = vunpack.c.h.b16 %v1531
          %v1622 = vunpack.c.h.b16 %v1532
          %v1623 = vunpack.c.l.b16 %v1533
          %v1624 = vunpack.c.l.b16 %v1534
          %v1625 = vunpack.c.h.b16 %v1533
          %v1626 = vunpack.c.h.b16 %v1534
          %v1627 = vunpack.c.l.b16 %v1535
          %v1628 = vunpack.c.l.b16 %v1536
          %v1629 = vunpack.c.h.b16 %v1535
          %v1630 = vunpack.c.h.b16 %v1536
          %v1631 = vunpack.c.l.b16 %v1537
          %v1632 = vunpack.c.l.b16 %v1538
          %v1633 = vunpack.c.h.b16 %v1537
          %v1634 = vunpack.c.h.b16 %v1538
          %v1635 = vpack.c.b16 %v1572, %v1571
          %v1636 = vpack.c.b16 %v1574, %v1573
          %v1637 = vpack.c.b16 %v1576, %v1575
          %v1638 = vpack.c.b16 %v1578, %v1577
          %v1639 = vpack.c.b16 %v1580, %v1579
          %v1640 = vpack.c.b16 %v1582, %v1581
          %v1641 = vpack.c.b16 %v1584, %v1583
          %v1642 = vpack.c.b16 %v1586, %v1585
          %v1643 = vpack.c.b16 %v1588, %v1587
          %v1644 = vpack.c.b16 %v1590, %v1589
          %v1645 = vpack.c.b16 %v1592, %v1591
          %v1646 = vpack.c.b16 %v1594, %v1593
          %v1647 = vpack.c.b16 %v1596, %v1595
          %v1648 = vpack.c.b16 %v1598, %v1597
          %v1649 = vpack.c.b16 %v1600, %v1599
          %v1650 = vpack.c.b16 %v1602, %v1601
          %v1651 = vpack.c.b16 %v1604, %v1603
          %v1652 = vpack.c.b16 %v1606, %v1605
          %v1653 = vpack.c.b16 %v1608, %v1607
          %v1654 = vpack.c.b16 %v1610, %v1609
          %v1655 = vpack.c.b16 %v1612, %v1611
          %v1656 = vpack.c.b16 %v1614, %v1613
          %v1657 = vpack.c.b16 %v1616, %v1615
          %v1658 = vpack.c.b16 %v1618, %v1617
          %v1659 = vpack.c.b16 %v1620, %v1619
          %v1660 = vpack.c.b16 %v1622, %v1621
          %v1661 = vpack.c.b16 %v1624, %v1623
          %v1662 = vpack.c.b16 %v1626, %v1625
          %v1663 = vpack.c.b16 %v1628, %v1627
          %v1664 = vpack.c.b16 %v1630, %v1629
          %v1665 = vpack.c.b16 %v1632, %v1631
          %v1666 = vpack.c.b16 %v1634, %v1633
          %1699 = vst [vmem:[#allocation2] sm:$0xff] %v1635
          %1700 = vst [vmem:[#allocation2 + $0x8] sm:$0xff] %v1636
          %1701 = vst [vmem:[#allocation2 + $0x10] sm:$0xff] %v1637
          %1702 = vst [vmem:[#allocation2 + $0x18] sm:$0xff] %v1638
          %1703 = vst [vmem:[#allocation2 + $0x20] sm:$0xff] %v1639
          %1704 = vst [vmem:[#allocation2 + $0x28] sm:$0xff] %v1640
          %1705 = vst [vmem:[#allocation2 + $0x30] sm:$0xff] %v1641
          %1706 = vst [vmem:[#allocation2 + $0x38] sm:$0xff] %v1642
          %1707 = vst [vmem:[#allocation2 + $0x40] sm:$0xff] %v1643
          %1708 = vst [vmem:[#allocation2 + $0x48] sm:$0xff] %v1644
          %1709 = vst [vmem:[#allocation2 + $0x50] sm:$0xff] %v1645
          %1710 = vst [vmem:[#allocation2 + $0x58] sm:$0xff] %v1646
          %1711 = vst [vmem:[#allocation2 + $0x60] sm:$0xff] %v1647
          %1712 = vst [vmem:[#allocation2 + $0x68] sm:$0xff] %v1648
          %1713 = vst [vmem:[#allocation2 + $0x70] sm:$0xff] %v1649
          %1714 = vst [vmem:[#allocation2 + $0x78] sm:$0xff] %v1650
          %1715 = vst [vmem:[#allocation2 + $0x80] sm:$0xff] %v1651
          %1716 = vst [vmem:[#allocation2 + $0x88] sm:$0xff] %v1652
          %1717 = vst [vmem:[#allocation2 + $0x90] sm:$0xff] %v1653
          %1718 = vst [vmem:[#allocation2 + $0x98] sm:$0xff] %v1654
          %1719 = vst [vmem:[#allocation2 + $0xa0] sm:$0xff] %v1655
          %1720 = vst [vmem:[#allocation2 + $0xa8] sm:$0xff] %v1656
          %1721 = vst [vmem:[#allocation2 + $0xb0] sm:$0xff] %v1657
          %1722 = vst [vmem:[#allocation2 + $0xb8] sm:$0xff] %v1658
          %1723 = vst [vmem:[#allocation2 + $0xc0] sm:$0xff] %v1659
          %1724 = vst [vmem:[#allocation2 + $0xc8] sm:$0xff] %v1660
          %1725 = vst [vmem:[#allocation2 + $0xd0] sm:$0xff] %v1661
          %1726 = vst [vmem:[#allocation2 + $0xd8] sm:$0xff] %v1662
          %1727 = vst [vmem:[#allocation2 + $0xe0] sm:$0xff] %v1663
          %1728 = vst [vmem:[#allocation2 + $0xe8] sm:$0xff] %v1664
          %1729 = vst [vmem:[#allocation2 + $0xf0] sm:$0xff] %v1665
          %1730 = vst [vmem:[#allocation2 + $0xf8] sm:$0xff] %v1666
        $region108: #{tpu_custom_call.1} parent=67 // pred_fallthru
          _
        %v1731 = vld [vmem:[#allocation2] sm:$0xff]
        %v1732 = vld [vmem:[#allocation2 + $0x8] sm:$0xff]
        %v1733 = vld [vmem:[#allocation2 + $0x10] sm:$0xff]
        %v1734 = vld [vmem:[#allocation2 + $0x18] sm:$0xff]
        %v1735 = vld [vmem:[#allocation2 + $0x20] sm:$0xff]
        %v1736 = vld [vmem:[#allocation2 + $0x28] sm:$0xff]
        %v1737 = vld [vmem:[#allocation2 + $0x30] sm:$0xff]
        %v1738 = vld [vmem:[#allocation2 + $0x38] sm:$0xff]
        %v1739 = vld [vmem:[#allocation2 + $0x40] sm:$0xff]
        %v1740 = vld [vmem:[#allocation2 + $0x48] sm:$0xff]
        %v1741 = vld [vmem:[#allocation2 + $0x50] sm:$0xff]
        %v1742 = vld [vmem:[#allocation2 + $0x58] sm:$0xff]
        %v1743 = vld [vmem:[#allocation2 + $0x60] sm:$0xff]
        %v1744 = vld [vmem:[#allocation2 + $0x68] sm:$0xff]
        %v1745 = vld [vmem:[#allocation2 + $0x70] sm:$0xff]
        %v1746 = vld [vmem:[#allocation2 + $0x78] sm:$0xff]
        %v1747 = vld [vmem:[#allocation2 + $0x80] sm:$0xff]
        %v1748 = vld [vmem:[#allocation2 + $0x88] sm:$0xff]
        %v1749 = vld [vmem:[#allocation2 + $0x90] sm:$0xff]
        %v1750 = vld [vmem:[#allocation2 + $0x98] sm:$0xff]
        %v1751 = vld [vmem:[#allocation2 + $0xa0] sm:$0xff]
        %v1752 = vld [vmem:[#allocation2 + $0xa8] sm:$0xff]
        %v1753 = vld [vmem:[#allocation2 + $0xb0] sm:$0xff]
        %v1754 = vld [vmem:[#allocation2 + $0xb8] sm:$0xff]
        %v1755 = vld [vmem:[#allocation2 + $0xc0] sm:$0xff]
        %v1756 = vld [vmem:[#allocation2 + $0xc8] sm:$0xff]
        %v1757 = vld [vmem:[#allocation2 + $0xd0] sm:$0xff]
        %v1758 = vld [vmem:[#allocation2 + $0xd8] sm:$0xff]
        %v1759 = vld [vmem:[#allocation2 + $0xe0] sm:$0xff]
        %v1760 = vld [vmem:[#allocation2 + $0xe8] sm:$0xff]
        %v1761 = vld [vmem:[#allocation2 + $0xf0] sm:$0xff]
        %v1762 = vld [vmem:[#allocation2 + $0xf8] sm:$0xff]
        %v1763 = vld [vmem:[%s656] sm:$0xff]
        %v1764 = vld [vmem:[%s656 + $0x8] sm:$0xff]
        %v1765 = vld [vmem:[%s656 + $0x10] sm:$0xff]
        %v1766 = vld [vmem:[%s656 + $0x18] sm:$0xff]
        %v1767 = vld [vmem:[%s656 + $0x20] sm:$0xff]
        %v1768 = vld [vmem:[%s656 + $0x28] sm:$0xff]
        %v1769 = vld [vmem:[%s656 + $0x30] sm:$0xff]
        %v1770 = vld [vmem:[%s656 + $0x38] sm:$0xff]
        %v1771 = vld [vmem:[%s656 + $0x40] sm:$0xff]
        %v1772 = vld [vmem:[%s656 + $0x48] sm:$0xff]
        %v1773 = vld [vmem:[%s656 + $0x50] sm:$0xff]
        %v1774 = vld [vmem:[%s656 + $0x58] sm:$0xff]
        %v1775 = vld [vmem:[%s656 + $0x60] sm:$0xff]
        %v1776 = vld [vmem:[%s656 + $0x68] sm:$0xff]
        %v1777 = vld [vmem:[%s656 + $0x70] sm:$0xff]
        %v1778 = vld [vmem:[%s656 + $0x78] sm:$0xff]
        %v1779 = vld [vmem:[%s656 + $0x80] sm:$0xff]
        %v1780 = vld [vmem:[%s656 + $0x88] sm:$0xff]
        %v1781 = vld [vmem:[%s656 + $0x90] sm:$0xff]
        %v1782 = vld [vmem:[%s656 + $0x98] sm:$0xff]
        %v1783 = vld [vmem:[%s656 + $0xa0] sm:$0xff]
        %v1784 = vld [vmem:[%s656 + $0xa8] sm:$0xff]
        %v1785 = vld [vmem:[%s656 + $0xb0] sm:$0xff]
        %v1786 = vld [vmem:[%s656 + $0xb8] sm:$0xff]
        %v1787 = vld [vmem:[%s656 + $0xc0] sm:$0xff]
        %v1788 = vld [vmem:[%s656 + $0xc8] sm:$0xff]
        %v1789 = vld [vmem:[%s656 + $0xd0] sm:$0xff]
        %v1790 = vld [vmem:[%s656 + $0xd8] sm:$0xff]
        %v1791 = vld [vmem:[%s656 + $0xe0] sm:$0xff]
        %v1792 = vld [vmem:[%s656 + $0xe8] sm:$0xff]
        %v1793 = vld [vmem:[%s656 + $0xf0] sm:$0xff]
        %v1794 = vld [vmem:[%s656 + $0xf8] sm:$0xff]
        %v1795 = vld [vmem:[%s665] sm:$0x3]
        %v1797 = vlaneseq
        %v1798 = vshrl.u32 %v1797, 7
        %v1799 = vsub.s32 0, %v1798
        %v1800 = vrot.slane %v1795, %v1799
        %v1801 = vlaneseq
        %v1802 = vshrl.u32 %v1801, 7
        %v1803 = vsub.s32 1, %v1802
        %v1804 = vrot.slane %v1795, %v1803
        %v1839 = vunpack.c.l.b16 %v1731
        %v1840 = vunpack.c.h.b16 %v1731
        %v1841 = vunpack.c.l.b16 %v1732
        %v1842 = vunpack.c.h.b16 %v1732
        %v1843 = vunpack.c.l.b16 %v1733
        %v1844 = vunpack.c.h.b16 %v1733
        %v1845 = vunpack.c.l.b16 %v1734
        %v1846 = vunpack.c.h.b16 %v1734
        %v1847 = vunpack.c.l.b16 %v1735
        %v1848 = vunpack.c.h.b16 %v1735
        %v1849 = vunpack.c.l.b16 %v1736
        %v1850 = vunpack.c.h.b16 %v1736
        %v1851 = vunpack.c.l.b16 %v1737
        %v1852 = vunpack.c.h.b16 %v1737
        %v1853 = vunpack.c.l.b16 %v1738
        %v1854 = vunpack.c.h.b16 %v1738
        %v1855 = vunpack.c.l.b16 %v1739
        %v1856 = vunpack.c.h.b16 %v1739
        %v1857 = vunpack.c.l.b16 %v1740
        %v1858 = vunpack.c.h.b16 %v1740
        %v1859 = vunpack.c.l.b16 %v1741
        %v1860 = vunpack.c.h.b16 %v1741
        %v1861 = vunpack.c.l.b16 %v1742
        %v1862 = vunpack.c.h.b16 %v1742
        %v1863 = vunpack.c.l.b16 %v1743
        %v1864 = vunpack.c.h.b16 %v1743
        %v1865 = vunpack.c.l.b16 %v1744
        %v1866 = vunpack.c.h.b16 %v1744
        %v1867 = vunpack.c.l.b16 %v1745
        %v1868 = vunpack.c.h.b16 %v1745
        %v1869 = vunpack.c.l.b16 %v1746
        %v1870 = vunpack.c.h.b16 %v1746
        %v1871 = vunpack.c.l.b16 %v1747
        %v1872 = vunpack.c.h.b16 %v1747
        %v1873 = vunpack.c.l.b16 %v1748
        %v1874 = vunpack.c.h.b16 %v1748
        %v1875 = vunpack.c.l.b16 %v1749
        %v1876 = vunpack.c.h.b16 %v1749
        %v1877 = vunpack.c.l.b16 %v1750
        %v1878 = vunpack.c.h.b16 %v1750
        %v1879 = vunpack.c.l.b16 %v1751
        %v1880 = vunpack.c.h.b16 %v1751
        %v1881 = vunpack.c.l.b16 %v1752
        %v1882 = vunpack.c.h.b16 %v1752
        %v1883 = vunpack.c.l.b16 %v1753
        %v1884 = vunpack.c.h.b16 %v1753
        %v1885 = vunpack.c.l.b16 %v1754
        %v1886 = vunpack.c.h.b16 %v1754
        %v1887 = vunpack.c.l.b16 %v1755
        %v1888 = vunpack.c.h.b16 %v1755
        %v1889 = vunpack.c.l.b16 %v1756
        %v1890 = vunpack.c.h.b16 %v1756
        %v1891 = vunpack.c.l.b16 %v1757
        %v1892 = vunpack.c.h.b16 %v1757
        %v1893 = vunpack.c.l.b16 %v1758
        %v1894 = vunpack.c.h.b16 %v1758
        %v1895 = vunpack.c.l.b16 %v1759
        %v1896 = vunpack.c.h.b16 %v1759
        %v1897 = vunpack.c.l.b16 %v1760
        %v1898 = vunpack.c.h.b16 %v1760
        %v1899 = vunpack.c.l.b16 %v1761
        %v1900 = vunpack.c.h.b16 %v1761
        %v1901 = vunpack.c.l.b16 %v1762
        %v1902 = vunpack.c.h.b16 %v1762
        %v1903 = vpack.c.b16 %v1841, %v1839
        %v1904 = vpack.c.b16 %v1842, %v1840
        %v1905 = vpack.c.b16 %v1845, %v1843
        %v1906 = vpack.c.b16 %v1846, %v1844
        %v1907 = vpack.c.b16 %v1849, %v1847
        %v1908 = vpack.c.b16 %v1850, %v1848
        %v1909 = vpack.c.b16 %v1853, %v1851
        %v1910 = vpack.c.b16 %v1854, %v1852
        %v1911 = vpack.c.b16 %v1857, %v1855
        %v1912 = vpack.c.b16 %v1858, %v1856
        %v1913 = vpack.c.b16 %v1861, %v1859
        %v1914 = vpack.c.b16 %v1862, %v1860
        %v1915 = vpack.c.b16 %v1865, %v1863
        %v1916 = vpack.c.b16 %v1866, %v1864
        %v1917 = vpack.c.b16 %v1869, %v1867
        %v1918 = vpack.c.b16 %v1870, %v1868
        %v1919 = vpack.c.b16 %v1873, %v1871
        %v1920 = vpack.c.b16 %v1874, %v1872
        %v1921 = vpack.c.b16 %v1877, %v1875
        %v1922 = vpack.c.b16 %v1878, %v1876
        %v1923 = vpack.c.b16 %v1881, %v1879
        %v1924 = vpack.c.b16 %v1882, %v1880
        %v1925 = vpack.c.b16 %v1885, %v1883
        %v1926 = vpack.c.b16 %v1886, %v1884
        %v1927 = vpack.c.b16 %v1889, %v1887
        %v1928 = vpack.c.b16 %v1890, %v1888
        %v1929 = vpack.c.b16 %v1893, %v1891
        %v1930 = vpack.c.b16 %v1894, %v1892
        %v1931 = vpack.c.b16 %v1897, %v1895
        %v1932 = vpack.c.b16 %v1898, %v1896
        %v1933 = vpack.c.b16 %v1901, %v1899
        %v1934 = vpack.c.b16 %v1902, %v1900
        %v1999 = vunpack.c.l.b16 %v1763
        %v2000 = vunpack.c.h.b16 %v1763
        %v2001 = vunpack.c.l.b16 %v1764
        %v2002 = vunpack.c.h.b16 %v1764
        %v2003 = vunpack.c.l.b16 %v1765
        %v2004 = vunpack.c.h.b16 %v1765
        %v2005 = vunpack.c.l.b16 %v1766
        %v2006 = vunpack.c.h.b16 %v1766
        %v2007 = vunpack.c.l.b16 %v1767
        %v2008 = vunpack.c.h.b16 %v1767
        %v2009 = vunpack.c.l.b16 %v1768
        %v2010 = vunpack.c.h.b16 %v1768
        %v2011 = vunpack.c.l.b16 %v1769
        %v2012 = vunpack.c.h.b16 %v1769
        %v2013 = vunpack.c.l.b16 %v1770
        %v2014 = vunpack.c.h.b16 %v1770
        %v2015 = vunpack.c.l.b16 %v1771
        %v2016 = vunpack.c.h.b16 %v1771
        %v2017 = vunpack.c.l.b16 %v1772
        %v2018 = vunpack.c.h.b16 %v1772
        %v2019 = vunpack.c.l.b16 %v1773
        %v2020 = vunpack.c.h.b16 %v1773
        %v2021 = vunpack.c.l.b16 %v1774
        %v2022 = vunpack.c.h.b16 %v1774
        %v2023 = vunpack.c.l.b16 %v1775
        %v2024 = vunpack.c.h.b16 %v1775
        %v2025 = vunpack.c.l.b16 %v1776
        %v2026 = vunpack.c.h.b16 %v1776
        %v2027 = vunpack.c.l.b16 %v1777
        %v2028 = vunpack.c.h.b16 %v1777
        %v2029 = vunpack.c.l.b16 %v1778
        %v2030 = vunpack.c.h.b16 %v1778
        %v2031 = vunpack.c.l.b16 %v1779
        %v2032 = vunpack.c.h.b16 %v1779
        %v2033 = vunpack.c.l.b16 %v1780
        %v2034 = vunpack.c.h.b16 %v1780
        %v2035 = vunpack.c.l.b16 %v1781
        %v2036 = vunpack.c.h.b16 %v1781
        %v2037 = vunpack.c.l.b16 %v1782
        %v2038 = vunpack.c.h.b16 %v1782
        %v2039 = vunpack.c.l.b16 %v1783
        %v2040 = vunpack.c.h.b16 %v1783
        %v2041 = vunpack.c.l.b16 %v1784
        %v2042 = vunpack.c.h.b16 %v1784
        %v2043 = vunpack.c.l.b16 %v1785
        %v2044 = vunpack.c.h.b16 %v1785
        %v2045 = vunpack.c.l.b16 %v1786
        %v2046 = vunpack.c.h.b16 %v1786
        %v2047 = vunpack.c.l.b16 %v1787
        %v2048 = vunpack.c.h.b16 %v1787
        %v2049 = vunpack.c.l.b16 %v1788
        %v2050 = vunpack.c.h.b16 %v1788
        %v2051 = vunpack.c.l.b16 %v1789
        %v2052 = vunpack.c.h.b16 %v1789
        %v2053 = vunpack.c.l.b16 %v1790
        %v2054 = vunpack.c.h.b16 %v1790
        %v2055 = vunpack.c.l.b16 %v1791
        %v2056 = vunpack.c.h.b16 %v1791
        %v2057 = vunpack.c.l.b16 %v1792
        %v2058 = vunpack.c.h.b16 %v1792
        %v2059 = vunpack.c.l.b16 %v1793
        %v2060 = vunpack.c.h.b16 %v1793
        %v2061 = vunpack.c.l.b16 %v1794
        %v2062 = vunpack.c.h.b16 %v1794
        %v2063 = vpack.c.b16 %v2001, %v1999
        %v2064 = vpack.c.b16 %v2002, %v2000
        %v2065 = vpack.c.b16 %v2005, %v2003
        %v2066 = vpack.c.b16 %v2006, %v2004
        %v2067 = vpack.c.b16 %v2009, %v2007
        %v2068 = vpack.c.b16 %v2010, %v2008
        %v2069 = vpack.c.b16 %v2013, %v2011
        %v2070 = vpack.c.b16 %v2014, %v2012
        %v2071 = vpack.c.b16 %v2017, %v2015
        %v2072 = vpack.c.b16 %v2018, %v2016
        %v2073 = vpack.c.b16 %v2021, %v2019
        %v2074 = vpack.c.b16 %v2022, %v2020
        %v2075 = vpack.c.b16 %v2025, %v2023
        %v2076 = vpack.c.b16 %v2026, %v2024
        %v2077 = vpack.c.b16 %v2029, %v2027
        %v2078 = vpack.c.b16 %v2030, %v2028
        %v2079 = vpack.c.b16 %v2033, %v2031
        %v2080 = vpack.c.b16 %v2034, %v2032
        %v2081 = vpack.c.b16 %v2037, %v2035
        %v2082 = vpack.c.b16 %v2038, %v2036
        %v2083 = vpack.c.b16 %v2041, %v2039
        %v2084 = vpack.c.b16 %v2042, %v2040
        %v2085 = vpack.c.b16 %v2045, %v2043
        %v2086 = vpack.c.b16 %v2046, %v2044
        %v2087 = vpack.c.b16 %v2049, %v2047
        %v2088 = vpack.c.b16 %v2050, %v2048
        %v2089 = vpack.c.b16 %v2053, %v2051
        %v2090 = vpack.c.b16 %v2054, %v2052
        %v2091 = vpack.c.b16 %v2057, %v2055
        %v2092 = vpack.c.b16 %v2058, %v2056
        %v2093 = vpack.c.b16 %v2061, %v2059
        %v2094 = vpack.c.b16 %v2062, %v2060
        %2127 = vmatprep.subr.bf16.mxu0 %v2078
        %2128 = vmatpush1.bf16.msra.mxu0 %v2077
        %2129 = vmatprep.subr.bf16.mxu0 %v2076
        %2130 = vmatpush1.bf16.msra.mxu0 %v2075
        %2131 = vmatprep.subr.bf16.mxu0 %v2074
        %2132 = vmatpush1.bf16.msra.mxu0 %v2073
        %2133 = vmatprep.subr.bf16.mxu0 %v2072
        %2134 = vmatpush1.bf16.msra.mxu0 %v2071
        %2135 = vmatprep.subr.bf16.mxu0 %v2070
        %2136 = vmatpush1.bf16.msra.mxu0 %v2069
        %2137 = vmatprep.subr.bf16.mxu0 %v2068
        %2138 = vmatpush1.bf16.msra.mxu0 %v2067
        %2139 = vmatprep.subr.bf16.mxu0 %v2066
        %2140 = vmatpush1.bf16.msra.mxu0 %v2065
        %2141 = vmatprep.subr.bf16.mxu0 %v2064
        %2142 = vmatpush1.bf16.msra.mxu0 %v2063
        %2143 = vmatprep.subr.bf16.mxu0 %v2094
        %2144 = vmatpush2.bf16.msra.mxu0 %v2093
        %2145 = vmatprep.subr.bf16.mxu0 %v2092
        %2146 = vmatpush2.bf16.msra.mxu0 %v2091
        %2147 = vmatprep.subr.bf16.mxu0 %v2090
        %2148 = vmatpush2.bf16.msra.mxu0 %v2089
        %2149 = vmatprep.subr.bf16.mxu0 %v2088
        %2150 = vmatpush2.bf16.msra.mxu0 %v2087
        %2151 = vmatprep.subr.bf16.mxu0 %v2086
        %2152 = vmatpush2.bf16.msra.mxu0 %v2085
        %2153 = vmatprep.subr.bf16.mxu0 %v2084
        %2154 = vmatpush2.bf16.msra.mxu0 %v2083
        %2155 = vmatprep.subr.bf16.mxu0 %v2082
        %2156 = vmatpush2.bf16.msra.mxu0 %v2081
        %2157 = vmatprep.subr.bf16.mxu0 %v2080
        %2158 = vmatpush2.bf16.msra.mxu0 %v2079
        %2159 = vmatprep.mubr.bf16.mxu0 %v1904
        %2160 = vmatmul.mubr.bf16.gmra.mxu0 %v1903
        %v2161 = vpop.f32.mrf.mxu0
        %v2162 = vadd.f32 %v1800, %v2161
        %v2163 = vpop.f32.mrf.mxu0
        %v2164 = vadd.f32 %v1804, %v2163
        %v2165 = vpop.f32.mrf.mxu0
        %v2166 = vadd.f32 %v1800, %v2165
        %v2167 = vpop.f32.mrf.mxu0
        %v2168 = vadd.f32 %v1804, %v2167
        %2169 = vmatprep.mubr.bf16.mxu0 %v1906
        %2170 = vmatmul.mubr.bf16.gmra.mxu0 %v1905
        %v2171 = vpop.f32.mrf.mxu0
        %v2172 = vadd.f32 %v1800, %v2171
        %v2173 = vpop.f32.mrf.mxu0
        %v2174 = vadd.f32 %v1804, %v2173
        %v2175 = vpop.f32.mrf.mxu0
        %v2176 = vadd.f32 %v1800, %v2175
        %v2177 = vpop.f32.mrf.mxu0
        %v2178 = vadd.f32 %v1804, %v2177
        %2179 = vmatprep.mubr.bf16.mxu0 %v1908
        %2180 = vmatmul.mubr.bf16.gmra.mxu0 %v1907
        %v2181 = vpop.f32.mrf.mxu0
        %v2182 = vadd.f32 %v1800, %v2181
        %v2183 = vpop.f32.mrf.mxu0
        %v2184 = vadd.f32 %v1804, %v2183
        %v2185 = vpop.f32.mrf.mxu0
        %v2186 = vadd.f32 %v1800, %v2185
        %v2187 = vpop.f32.mrf.mxu0
        %v2188 = vadd.f32 %v1804, %v2187
        %2189 = vmatprep.mubr.bf16.mxu0 %v1910
        %2190 = vmatmul.mubr.bf16.gmra.mxu0 %v1909
        %v2191 = vpop.f32.mrf.mxu0
        %v2192 = vadd.f32 %v1800, %v2191
        %v2193 = vpop.f32.mrf.mxu0
        %v2194 = vadd.f32 %v1804, %v2193
        %v2195 = vpop.f32.mrf.mxu0
        %v2196 = vadd.f32 %v1800, %v2195
        %v2197 = vpop.f32.mrf.mxu0
        %v2198 = vadd.f32 %v1804, %v2197
        %2199 = vmatprep.mubr.bf16.mxu0 %v1912
        %2200 = vmatmul.mubr.bf16.gmra.mxu0 %v1911
        %v2201 = vpop.f32.mrf.mxu0
        %v2202 = vadd.f32 %v1800, %v2201
        %v2203 = vpop.f32.mrf.mxu0
        %v2204 = vadd.f32 %v1804, %v2203
        %v2205 = vpop.f32.mrf.mxu0
        %v2206 = vadd.f32 %v1800, %v2205
        %v2207 = vpop.f32.mrf.mxu0
        %v2208 = vadd.f32 %v1804, %v2207
        %2209 = vmatprep.mubr.bf16.mxu0 %v1914
        %2210 = vmatmul.mubr.bf16.gmra.mxu0 %v1913
        %v2211 = vpop.f32.mrf.mxu0
        %v2212 = vadd.f32 %v1800, %v2211
        %v2213 = vpop.f32.mrf.mxu0
        %v2214 = vadd.f32 %v1804, %v2213
        %v2215 = vpop.f32.mrf.mxu0
        %v2216 = vadd.f32 %v1800, %v2215
        %v2217 = vpop.f32.mrf.mxu0
        %v2218 = vadd.f32 %v1804, %v2217
        %2219 = vmatprep.mubr.bf16.mxu0 %v1916
        %2220 = vmatmul.mubr.bf16.gmra.mxu0 %v1915
        %v2221 = vpop.f32.mrf.mxu0
        %v2222 = vadd.f32 %v1800, %v2221
        %v2223 = vpop.f32.mrf.mxu0
        %v2224 = vadd.f32 %v1804, %v2223
        %v2225 = vpop.f32.mrf.mxu0
        %v2226 = vadd.f32 %v1800, %v2225
        %v2227 = vpop.f32.mrf.mxu0
        %v2228 = vadd.f32 %v1804, %v2227
        %2229 = vmatprep.mubr.bf16.mxu0 %v1918
        %2230 = vmatmul.mubr.bf16.gmra.mxu0 %v1917
        %v2231 = vpop.f32.mrf.mxu0
        %v2232 = vadd.f32 %v1800, %v2231
        %v2233 = vpop.f32.mrf.mxu0
        %v2234 = vadd.f32 %v1804, %v2233
        %v2235 = vpop.f32.mrf.mxu0
        %v2236 = vadd.f32 %v1800, %v2235
        %v2237 = vpop.f32.mrf.mxu0
        %v2238 = vadd.f32 %v1804, %v2237
        %2239 = vmatprep.mubr.bf16.mxu0 %v1920
        %2240 = vmatmul.mubr.bf16.gmra.mxu0 %v1919
        %v2241 = vpop.f32.mrf.mxu0
        %v2242 = vadd.f32 %v1800, %v2241
        %v2243 = vpop.f32.mrf.mxu0
        %v2244 = vadd.f32 %v1804, %v2243
        %v2245 = vpop.f32.mrf.mxu0
        %v2246 = vadd.f32 %v1800, %v2245
        %v2247 = vpop.f32.mrf.mxu0
        %v2248 = vadd.f32 %v1804, %v2247
        %2249 = vmatprep.mubr.bf16.mxu0 %v1922
        %2250 = vmatmul.mubr.bf16.gmra.mxu0 %v1921
        %v2251 = vpop.f32.mrf.mxu0
        %v2252 = vadd.f32 %v1800, %v2251
        %v2253 = vpop.f32.mrf.mxu0
        %v2254 = vadd.f32 %v1804, %v2253
        %v2255 = vpop.f32.mrf.mxu0
        %v2256 = vadd.f32 %v1800, %v2255
        %v2257 = vpop.f32.mrf.mxu0
        %v2258 = vadd.f32 %v1804, %v2257
        %2259 = vmatprep.mubr.bf16.mxu0 %v1924
        %2260 = vmatmul.mubr.bf16.gmra.mxu0 %v1923
        %v2261 = vpop.f32.mrf.mxu0
        %v2262 = vadd.f32 %v1800, %v2261
        %v2263 = vpop.f32.mrf.mxu0
        %v2264 = vadd.f32 %v1804, %v2263
        %v2265 = vpop.f32.mrf.mxu0
        %v2266 = vadd.f32 %v1800, %v2265
        %v2267 = vpop.f32.mrf.mxu0
        %v2268 = vadd.f32 %v1804, %v2267
        %2269 = vmatprep.mubr.bf16.mxu0 %v1926
        %2270 = vmatmul.mubr.bf16.gmra.mxu0 %v1925
        %v2271 = vpop.f32.mrf.mxu0
        %v2272 = vadd.f32 %v1800, %v2271
        %v2273 = vpop.f32.mrf.mxu0
        %v2274 = vadd.f32 %v1804, %v2273
        %v2275 = vpop.f32.mrf.mxu0
        %v2276 = vadd.f32 %v1800, %v2275
        %v2277 = vpop.f32.mrf.mxu0
        %v2278 = vadd.f32 %v1804, %v2277
        %2279 = vmatprep.mubr.bf16.mxu0 %v1928
        %2280 = vmatmul.mubr.bf16.gmra.mxu0 %v1927
        %v2281 = vpop.f32.mrf.mxu0
        %v2282 = vadd.f32 %v1800, %v2281
        %v2283 = vpop.f32.mrf.mxu0
        %v2284 = vadd.f32 %v1804, %v2283
        %v2285 = vpop.f32.mrf.mxu0
        %v2286 = vadd.f32 %v1800, %v2285
        %v2287 = vpop.f32.mrf.mxu0
        %v2288 = vadd.f32 %v1804, %v2287
        %2289 = vmatprep.mubr.bf16.mxu0 %v1930
        %2290 = vmatmul.mubr.bf16.gmra.mxu0 %v1929
        %v2291 = vpop.f32.mrf.mxu0
        %v2292 = vadd.f32 %v1800, %v2291
        %v2293 = vpop.f32.mrf.mxu0
        %v2294 = vadd.f32 %v1804, %v2293
        %v2295 = vpop.f32.mrf.mxu0
        %v2296 = vadd.f32 %v1800, %v2295
        %v2297 = vpop.f32.mrf.mxu0
        %v2298 = vadd.f32 %v1804, %v2297
        %2299 = vmatprep.mubr.bf16.mxu0 %v1932
        %2300 = vmatmul.mubr.bf16.gmra.mxu0 %v1931
        %v2301 = vpop.f32.mrf.mxu0
        %v2302 = vadd.f32 %v1800, %v2301
        %v2303 = vpop.f32.mrf.mxu0
        %v2304 = vadd.f32 %v1804, %v2303
        %v2305 = vpop.f32.mrf.mxu0
        %v2306 = vadd.f32 %v1800, %v2305
        %v2307 = vpop.f32.mrf.mxu0
        %v2308 = vadd.f32 %v1804, %v2307
        %2309 = vmatprep.mubr.bf16.mxu0 %v1934
        %2310 = vmatmul.mubr.bf16.gmra.mxu0 %v1933
        %v2311 = vpop.f32.mrf.mxu0
        %v2312 = vadd.f32 %v1800, %v2311
        %v2313 = vpop.f32.mrf.mxu0
        %v2314 = vadd.f32 %v1804, %v2313
        %v2315 = vpop.f32.mrf.mxu0
        %v2316 = vadd.f32 %v1800, %v2315
        %v2317 = vpop.f32.mrf.mxu0
        %v2318 = vadd.f32 %v1804, %v2317
        %2319 = vdwg.mxu0
        %p2320 = scmp.lt.s32.totalorder %s49, 2
        // Predicated region
        $region109: #{tpu_custom_call.1} parent=67 // pred_check
          %p2321 = pneg %p2320
        $region110: #{tpu_custom_call.1} parent=67 // pred_check_branch
          %2323 = sbr.rel (%p2321) target = $region112
        $region111: #{tpu_custom_call.1} parent=67 // pred_region
          %p2324 = scmp.lt.s32.totalorder %s49, 1
          %v2325 = vld [vmem:[%s5] sm:$0x1]
          %v2326 = vld [vmem:[%s6] sm:$0x1]
          %s2327 = scalar_select %p2324, 1, 0
          %v2328 = vstv %s2327
          %vm2329 = vcmp.eq.s32.totalorder %v2328, 1
          %v2330 = vsel %vm2329, %v2325, %v2326
          %v2331 = vld [vmem:[#allocation13] sm:$0xff]
          %v2332 = vld [vmem:[#allocation13 + $0x8] sm:$0xff]
          %v2333 = vld [vmem:[#allocation13 + $0x10] sm:$0xff]
          %v2334 = vld [vmem:[#allocation13 + $0x18] sm:$0xff]
          %v2335 = vld [vmem:[#allocation13 + $0x20] sm:$0xff]
          %v2336 = vld [vmem:[#allocation13 + $0x28] sm:$0xff]
          %v2337 = vld [vmem:[#allocation13 + $0x30] sm:$0xff]
          %v2338 = vld [vmem:[#allocation13 + $0x38] sm:$0xff]
          %v2339 = vld [vmem:[#allocation13 + $0x40] sm:$0xff]
          %v2340 = vld [vmem:[#allocation13 + $0x48] sm:$0xff]
          %v2341 = vld [vmem:[#allocation13 + $0x50] sm:$0xff]
          %v2342 = vld [vmem:[#allocation13 + $0x58] sm:$0xff]
          %v2343 = vld [vmem:[#allocation13 + $0x60] sm:$0xff]
          %v2344 = vld [vmem:[#allocation13 + $0x68] sm:$0xff]
          %v2345 = vld [vmem:[#allocation13 + $0x70] sm:$0xff]
          %v2346 = vld [vmem:[#allocation13 + $0x78] sm:$0xff]
          %v2347 = vld [vmem:[#allocation13 + $0x80] sm:$0xff]
          %v2348 = vld [vmem:[#allocation13 + $0x88] sm:$0xff]
          %v2349 = vld [vmem:[#allocation13 + $0x90] sm:$0xff]
          %v2350 = vld [vmem:[#allocation13 + $0x98] sm:$0xff]
          %v2351 = vld [vmem:[#allocation13 + $0xa0] sm:$0xff]
          %v2352 = vld [vmem:[#allocation13 + $0xa8] sm:$0xff]
          %v2353 = vld [vmem:[#allocation13 + $0xb0] sm:$0xff]
          %v2354 = vld [vmem:[#allocation13 + $0xb8] sm:$0xff]
          %v2355 = vld [vmem:[#allocation13 + $0xc0] sm:$0xff]
          %v2356 = vld [vmem:[#allocation13 + $0xc8] sm:$0xff]
          %v2357 = vld [vmem:[#allocation13 + $0xd0] sm:$0xff]
          %v2358 = vld [vmem:[#allocation13 + $0xd8] sm:$0xff]
          %v2359 = vld [vmem:[#allocation13 + $0xe0] sm:$0xff]
          %v2360 = vld [vmem:[#allocation13 + $0xe8] sm:$0xff]
          %v2361 = vld [vmem:[#allocation13 + $0xf0] sm:$0xff]
          %v2362 = vld [vmem:[#allocation13 + $0xf8] sm:$0xff]
          %v2363 = vld [vmem:[#allocation15] sm:$0xff]
          %v2364 = vld [vmem:[#allocation15 + $0x8] sm:$0xff]
          %v2365 = vld [vmem:[#allocation15 + $0x10] sm:$0xff]
          %v2366 = vld [vmem:[#allocation15 + $0x18] sm:$0xff]
          %v2367 = vld [vmem:[#allocation15 + $0x20] sm:$0xff]
          %v2368 = vld [vmem:[#allocation15 + $0x28] sm:$0xff]
          %v2369 = vld [vmem:[#allocation15 + $0x30] sm:$0xff]
          %v2370 = vld [vmem:[#allocation15 + $0x38] sm:$0xff]
          %v2371 = vld [vmem:[#allocation15 + $0x40] sm:$0xff]
          %v2372 = vld [vmem:[#allocation15 + $0x48] sm:$0xff]
          %v2373 = vld [vmem:[#allocation15 + $0x50] sm:$0xff]
          %v2374 = vld [vmem:[#allocation15 + $0x58] sm:$0xff]
          %v2375 = vld [vmem:[#allocation15 + $0x60] sm:$0xff]
          %v2376 = vld [vmem:[#allocation15 + $0x68] sm:$0xff]
          %v2377 = vld [vmem:[#allocation15 + $0x70] sm:$0xff]
          %v2378 = vld [vmem:[#allocation15 + $0x78] sm:$0xff]
          %v2379 = vld [vmem:[#allocation15 + $0x80] sm:$0xff]
          %v2380 = vld [vmem:[#allocation15 + $0x88] sm:$0xff]
          %v2381 = vld [vmem:[#allocation15 + $0x90] sm:$0xff]
          %v2382 = vld [vmem:[#allocation15 + $0x98] sm:$0xff]
          %v2383 = vld [vmem:[#allocation15 + $0xa0] sm:$0xff]
          %v2384 = vld [vmem:[#allocation15 + $0xa8] sm:$0xff]
          %v2385 = vld [vmem:[#allocation15 + $0xb0] sm:$0xff]
          %v2386 = vld [vmem:[#allocation15 + $0xb8] sm:$0xff]
          %v2387 = vld [vmem:[#allocation15 + $0xc0] sm:$0xff]
          %v2388 = vld [vmem:[#allocation15 + $0xc8] sm:$0xff]
          %v2389 = vld [vmem:[#allocation15 + $0xd0] sm:$0xff]
          %v2390 = vld [vmem:[#allocation15 + $0xd8] sm:$0xff]
          %v2391 = vld [vmem:[#allocation15 + $0xe0] sm:$0xff]
          %v2392 = vld [vmem:[#allocation15 + $0xe8] sm:$0xff]
          %v2393 = vld [vmem:[#allocation15 + $0xf0] sm:$0xff]
          %v2394 = vld [vmem:[#allocation15 + $0xf8] sm:$0xff]
          %v2395 = vld [vmem:[#allocation16] sm:$0xff]
          %v2396 = vld [vmem:[#allocation16 + $0x8] sm:$0xff]
          %v2397 = vld [vmem:[#allocation16 + $0x10] sm:$0xff]
          %v2398 = vld [vmem:[#allocation16 + $0x18] sm:$0xff]
          %v2399 = vld [vmem:[#allocation16 + $0x20] sm:$0xff]
          %v2400 = vld [vmem:[#allocation16 + $0x28] sm:$0xff]
          %v2401 = vld [vmem:[#allocation16 + $0x30] sm:$0xff]
          %v2402 = vld [vmem:[#allocation16 + $0x38] sm:$0xff]
          %v2403 = vld [vmem:[#allocation16 + $0x40] sm:$0xff]
          %v2404 = vld [vmem:[#allocation16 + $0x48] sm:$0xff]
          %v2405 = vld [vmem:[#allocation16 + $0x50] sm:$0xff]
          %v2406 = vld [vmem:[#allocation16 + $0x58] sm:$0xff]
          %v2407 = vld [vmem:[#allocation16 + $0x60] sm:$0xff]
          %v2408 = vld [vmem:[#allocation16 + $0x68] sm:$0xff]
          %v2409 = vld [vmem:[#allocation16 + $0x70] sm:$0xff]
          %v2410 = vld [vmem:[#allocation16 + $0x78] sm:$0xff]
          %v2411 = vmul.f32 %v2162, %v2162
          %v2412 = vmul.f32 %v2166, %v2166
          %v2413 = vmul.f32 %v2172, %v2172
          %v2414 = vmul.f32 %v2176, %v2176
          %v2415 = vmul.f32 %v2182, %v2182
          %v2416 = vmul.f32 %v2186, %v2186
          %v2417 = vmul.f32 %v2192, %v2192
          %v2418 = vmul.f32 %v2196, %v2196
          %v2419 = vmul.f32 %v2202, %v2202
          %v2420 = vmul.f32 %v2206, %v2206
          %v2421 = vmul.f32 %v2212, %v2212
          %v2422 = vmul.f32 %v2216, %v2216
          %v2423 = vmul.f32 %v2222, %v2222
          %v2424 = vmul.f32 %v2226, %v2226
          %v2425 = vmul.f32 %v2232, %v2232
          %v2426 = vmul.f32 %v2236, %v2236
          %v2427 = vmul.f32 %v2242, %v2242
          %v2428 = vmul.f32 %v2246, %v2246
          %v2429 = vmul.f32 %v2252, %v2252
          %v2430 = vmul.f32 %v2256, %v2256
          %v2431 = vmul.f32 %v2262, %v2262
          %v2432 = vmul.f32 %v2266, %v2266
          %v2433 = vmul.f32 %v2272, %v2272
          %v2434 = vmul.f32 %v2276, %v2276
          %v2435 = vmul.f32 %v2282, %v2282
          %v2436 = vmul.f32 %v2286, %v2286
          %v2437 = vmul.f32 %v2292, %v2292
          %v2438 = vmul.f32 %v2296, %v2296
          %v2439 = vmul.f32 %v2302, %v2302
          %v2440 = vmul.f32 %v2306, %v2306
          %v2441 = vmul.f32 %v2312, %v2312
          %v2442 = vmul.f32 %v2316, %v2316
          %2443 = vadd.xlane.f32.xlu0 %v2411
          %v2444 = vpop.xlane.xlu0 %2443
          %2445 = vadd.xlane.f32.xlu0 %v2412
          %v2446 = vpop.xlane.xlu0 %2445
          %2447 = vadd.xlane.f32.xlu0 %v2413
          %v2448 = vpop.xlane.xlu0 %2447
          %2449 = vadd.xlane.f32.xlu0 %v2414
          %v2450 = vpop.xlane.xlu0 %2449
          %2451 = vadd.xlane.f32.xlu0 %v2415
          %v2452 = vpop.xlane.xlu0 %2451
          %2453 = vadd.xlane.f32.xlu0 %v2416
          %v2454 = vpop.xlane.xlu0 %2453
          %2455 = vadd.xlane.f32.xlu0 %v2417
          %v2456 = vpop.xlane.xlu0 %2455
          %2457 = vadd.xlane.f32.xlu0 %v2418
          %v2458 = vpop.xlane.xlu0 %2457
          %2459 = vadd.xlane.f32.xlu0 %v2419
          %v2460 = vpop.xlane.xlu0 %2459
          %2461 = vadd.xlane.f32.xlu0 %v2420
          %v2462 = vpop.xlane.xlu0 %2461
          %2463 = vadd.xlane.f32.xlu0 %v2421
          %v2464 = vpop.xlane.xlu0 %2463
          %2465 = vadd.xlane.f32.xlu0 %v2422
          %v2466 = vpop.xlane.xlu0 %2465
          %2467 = vadd.xlane.f32.xlu0 %v2423
          %v2468 = vpop.xlane.xlu0 %2467
          %2469 = vadd.xlane.f32.xlu0 %v2424
          %v2470 = vpop.xlane.xlu0 %2469
          %2471 = vadd.xlane.f32.xlu0 %v2425
          %v2472 = vpop.xlane.xlu0 %2471
          %2473 = vadd.xlane.f32.xlu0 %v2426
          %v2474 = vpop.xlane.xlu0 %2473
          %2475 = vadd.xlane.f32.xlu0 %v2427
          %v2476 = vpop.xlane.xlu0 %2475
          %2477 = vadd.xlane.f32.xlu0 %v2428
          %v2478 = vpop.xlane.xlu0 %2477
          %2479 = vadd.xlane.f32.xlu0 %v2429
          %v2480 = vpop.xlane.xlu0 %2479
          %2481 = vadd.xlane.f32.xlu0 %v2430
          %v2482 = vpop.xlane.xlu0 %2481
          %2483 = vadd.xlane.f32.xlu0 %v2431
          %v2484 = vpop.xlane.xlu0 %2483
          %2485 = vadd.xlane.f32.xlu0 %v2432
          %v2486 = vpop.xlane.xlu0 %2485
          %2487 = vadd.xlane.f32.xlu0 %v2433
          %v2488 = vpop.xlane.xlu0 %2487
          %2489 = vadd.xlane.f32.xlu0 %v2434
          %v2490 = vpop.xlane.xlu0 %2489
          %2491 = vadd.xlane.f32.xlu0 %v2435
          %v2492 = vpop.xlane.xlu0 %2491
          %2493 = vadd.xlane.f32.xlu0 %v2436
          %v2494 = vpop.xlane.xlu0 %2493
          %2495 = vadd.xlane.f32.xlu0 %v2437
          %v2496 = vpop.xlane.xlu0 %2495
          %2497 = vadd.xlane.f32.xlu0 %v2438
          %v2498 = vpop.xlane.xlu0 %2497
          %2499 = vadd.xlane.f32.xlu0 %v2439
          %v2500 = vpop.xlane.xlu0 %2499
          %2501 = vadd.xlane.f32.xlu0 %v2440
          %v2502 = vpop.xlane.xlu0 %2501
          %2503 = vadd.xlane.f32.xlu0 %v2441
          %v2504 = vpop.xlane.xlu0 %2503
          %2505 = vadd.xlane.f32.xlu0 %v2442
          %v2506 = vpop.xlane.xlu0 %2505
          %v2507 = vrcp.pop 128.0
          %v2508 = vmul.f32 %v2444, %v2507
          %v2509 = vmul.f32 %v2446, %v2507
          %v2510 = vmul.f32 %v2448, %v2507
          %v2511 = vmul.f32 %v2450, %v2507
          %v2512 = vmul.f32 %v2452, %v2507
          %v2513 = vmul.f32 %v2454, %v2507
          %v2514 = vmul.f32 %v2456, %v2507
          %v2515 = vmul.f32 %v2458, %v2507
          %v2516 = vmul.f32 %v2460, %v2507
          %v2517 = vmul.f32 %v2462, %v2507
          %v2518 = vmul.f32 %v2464, %v2507
          %v2519 = vmul.f32 %v2466, %v2507
          %v2520 = vmul.f32 %v2468, %v2507
          %v2521 = vmul.f32 %v2470, %v2507
          %v2522 = vmul.f32 %v2472, %v2507
          %v2523 = vmul.f32 %v2474, %v2507
          %v2524 = vmul.f32 %v2476, %v2507
          %v2525 = vmul.f32 %v2478, %v2507
          %v2526 = vmul.f32 %v2480, %v2507
          %v2527 = vmul.f32 %v2482, %v2507
          %v2528 = vmul.f32 %v2484, %v2507
          %v2529 = vmul.f32 %v2486, %v2507
          %v2530 = vmul.f32 %v2488, %v2507
          %v2531 = vmul.f32 %v2490, %v2507
          %v2532 = vmul.f32 %v2492, %v2507
          %v2533 = vmul.f32 %v2494, %v2507
          %v2534 = vmul.f32 %v2496, %v2507
          %v2535 = vmul.f32 %v2498, %v2507
          %v2536 = vmul.f32 %v2500, %v2507
          %v2537 = vmul.f32 %v2502, %v2507
          %v2538 = vmul.f32 %v2504, %v2507
          %v2539 = vmul.f32 %v2506, %v2507
          %v2540 = vadd.f32 %v2508, 1e-06
          %v2541 = vadd.f32 %v2509, 1e-06
          %v2542 = vadd.f32 %v2510, 1e-06
          %v2543 = vadd.f32 %v2511, 1e-06
          %v2544 = vadd.f32 %v2512, 1e-06
          %v2545 = vadd.f32 %v2513, 1e-06
          %v2546 = vadd.f32 %v2514, 1e-06
          %v2547 = vadd.f32 %v2515, 1e-06
          %v2548 = vadd.f32 %v2516, 1e-06
          %v2549 = vadd.f32 %v2517, 1e-06
          %v2550 = vadd.f32 %v2518, 1e-06
          %v2551 = vadd.f32 %v2519, 1e-06
          %v2552 = vadd.f32 %v2520, 1e-06
          %v2553 = vadd.f32 %v2521, 1e-06
          %v2554 = vadd.f32 %v2522, 1e-06
          %v2555 = vadd.f32 %v2523, 1e-06
          %v2556 = vadd.f32 %v2524, 1e-06
          %v2557 = vadd.f32 %v2525, 1e-06
          %v2558 = vadd.f32 %v2526, 1e-06
          %v2559 = vadd.f32 %v2527, 1e-06
          %v2560 = vadd.f32 %v2528, 1e-06
          %v2561 = vadd.f32 %v2529, 1e-06
          %v2562 = vadd.f32 %v2530, 1e-06
          %v2563 = vadd.f32 %v2531, 1e-06
          %v2564 = vadd.f32 %v2532, 1e-06
          %v2565 = vadd.f32 %v2533, 1e-06
          %v2566 = vadd.f32 %v2534, 1e-06
          %v2567 = vadd.f32 %v2535, 1e-06
          %v2568 = vadd.f32 %v2536, 1e-06
          %v2569 = vadd.f32 %v2537, 1e-06
          %v2570 = vadd.f32 %v2538, 1e-06
          %v2571 = vadd.f32 %v2539, 1e-06
          %v2572 = vrsqrt.pop %v2540
          %v2573 = vrsqrt.pop %v2541
          %v2574 = vrsqrt.pop %v2542
          %v2575 = vrsqrt.pop %v2543
          %v2576 = vrsqrt.pop %v2544
          %v2577 = vrsqrt.pop %v2545
          %v2578 = vrsqrt.pop %v2546
          %v2579 = vrsqrt.pop %v2547
          %v2580 = vrsqrt.pop %v2548
          %v2581 = vrsqrt.pop %v2549
          %v2582 = vrsqrt.pop %v2550
          %v2583 = vrsqrt.pop %v2551
          %v2584 = vrsqrt.pop %v2552
          %v2585 = vrsqrt.pop %v2553
          %v2586 = vrsqrt.pop %v2554
          %v2587 = vrsqrt.pop %v2555
          %v2588 = vrsqrt.pop %v2556
          %v2589 = vrsqrt.pop %v2557
          %v2590 = vrsqrt.pop %v2558
          %v2591 = vrsqrt.pop %v2559
          %v2592 = vrsqrt.pop %v2560
          %v2593 = vrsqrt.pop %v2561
          %v2594 = vrsqrt.pop %v2562
          %v2595 = vrsqrt.pop %v2563
          %v2596 = vrsqrt.pop %v2564
          %v2597 = vrsqrt.pop %v2565
          %v2598 = vrsqrt.pop %v2566
          %v2599 = vrsqrt.pop %v2567
          %v2600 = vrsqrt.pop %v2568
          %v2601 = vrsqrt.pop %v2569
          %v2602 = vrsqrt.pop %v2570
          %v2603 = vrsqrt.pop %v2571
          %v2604 = vmul.f32 %v2162, %v2572
          %v2605 = vmul.f32 %v2166, %v2573
          %v2606 = vmul.f32 %v2172, %v2574
          %v2607 = vmul.f32 %v2176, %v2575
          %v2608 = vmul.f32 %v2182, %v2576
          %v2609 = vmul.f32 %v2186, %v2577
          %v2610 = vmul.f32 %v2192, %v2578
          %v2611 = vmul.f32 %v2196, %v2579
          %v2612 = vmul.f32 %v2202, %v2580
          %v2613 = vmul.f32 %v2206, %v2581
          %v2614 = vmul.f32 %v2212, %v2582
          %v2615 = vmul.f32 %v2216, %v2583
          %v2616 = vmul.f32 %v2222, %v2584
          %v2617 = vmul.f32 %v2226, %v2585
          %v2618 = vmul.f32 %v2232, %v2586
          %v2619 = vmul.f32 %v2236, %v2587
          %v2620 = vmul.f32 %v2242, %v2588
          %v2621 = vmul.f32 %v2246, %v2589
          %v2622 = vmul.f32 %v2252, %v2590
          %v2623 = vmul.f32 %v2256, %v2591
          %v2624 = vmul.f32 %v2262, %v2592
          %v2625 = vmul.f32 %v2266, %v2593
          %v2626 = vmul.f32 %v2272, %v2594
          %v2627 = vmul.f32 %v2276, %v2595
          %v2628 = vmul.f32 %v2282, %v2596
          %v2629 = vmul.f32 %v2286, %v2597
          %v2630 = vmul.f32 %v2292, %v2598
          %v2631 = vmul.f32 %v2296, %v2599
          %v2632 = vmul.f32 %v2302, %v2600
          %v2633 = vmul.f32 %v2306, %v2601
          %v2634 = vmul.f32 %v2312, %v2602
          %v2635 = vmul.f32 %v2316, %v2603
          %v2637 = vlaneseq
          %v2638 = vshrl.u32 %v2637, 7
          %v2639 = vsub.s32 0, %v2638
          %v2640 = vrot.slane %v2330, %v2639
          %v2642 = vmul.f32 %v2604, %v2640
          %v2643 = vmul.f32 %v2605, %v2640
          %v2644 = vmul.f32 %v2606, %v2640
          %v2645 = vmul.f32 %v2607, %v2640
          %v2646 = vmul.f32 %v2608, %v2640
          %v2647 = vmul.f32 %v2609, %v2640
          %v2648 = vmul.f32 %v2610, %v2640
          %v2649 = vmul.f32 %v2611, %v2640
          %v2650 = vmul.f32 %v2612, %v2640
          %v2651 = vmul.f32 %v2613, %v2640
          %v2652 = vmul.f32 %v2614, %v2640
          %v2653 = vmul.f32 %v2615, %v2640
          %v2654 = vmul.f32 %v2616, %v2640
          %v2655 = vmul.f32 %v2617, %v2640
          %v2656 = vmul.f32 %v2618, %v2640
          %v2657 = vmul.f32 %v2619, %v2640
          %v2658 = vmul.f32 %v2620, %v2640
          %v2659 = vmul.f32 %v2621, %v2640
          %v2660 = vmul.f32 %v2622, %v2640
          %v2661 = vmul.f32 %v2623, %v2640
          %v2662 = vmul.f32 %v2624, %v2640
          %v2663 = vmul.f32 %v2625, %v2640
          %v2664 = vmul.f32 %v2626, %v2640
          %v2665 = vmul.f32 %v2627, %v2640
          %v2666 = vmul.f32 %v2628, %v2640
          %v2667 = vmul.f32 %v2629, %v2640
          %v2668 = vmul.f32 %v2630, %v2640
          %v2669 = vmul.f32 %v2631, %v2640
          %v2670 = vmul.f32 %v2632, %v2640
          %v2671 = vmul.f32 %v2633, %v2640
          %v2672 = vmul.f32 %v2634, %v2640
          %v2673 = vmul.f32 %v2635, %v2640
          %2674 = vmatprep.subr.mxu0 0.0
          %2675 = vmatpush1.msra.mxu0 %v2410
          %2676 = vmatprep.subr.mxu0 0.0
          %2677 = vmatpush1.msra.mxu0 %v2409
          %2678 = vmatprep.subr.mxu0 0.0
          %2679 = vmatpush1.msra.mxu0 %v2408
          %2680 = vmatprep.subr.mxu0 0.0
          %2681 = vmatpush1.msra.mxu0 %v2407
          %2682 = vmatprep.subr.mxu0 0.0
          %2683 = vmatpush1.msra.mxu0 %v2406
          %2684 = vmatprep.subr.mxu0 0.0
          %2685 = vmatpush1.msra.mxu0 %v2405
          %2686 = vmatprep.subr.mxu0 0.0
          %2687 = vmatpush1.msra.mxu0 %v2404
          %2688 = vmatprep.subr.mxu0 0.0
          %2689 = vmatpush1.msra.mxu0 %v2403
          %2690 = vmatprep.subr.mxu0 0.0
          %2691 = vmatpush1.msra.mxu0 %v2402
          %2692 = vmatprep.subr.mxu0 0.0
          %2693 = vmatpush1.msra.mxu0 %v2401
          %2694 = vmatprep.subr.mxu0 0.0
          %2695 = vmatpush1.msra.mxu0 %v2400
          %2696 = vmatprep.subr.mxu0 0.0
          %2697 = vmatpush1.msra.mxu0 %v2399
          %2698 = vmatprep.subr.mxu0 0.0
          %2699 = vmatpush1.msra.mxu0 %v2398
          %2700 = vmatprep.subr.mxu0 0.0
          %2701 = vmatpush1.msra.mxu0 %v2397
          %2702 = vmatprep.subr.mxu0 0.0
          %2703 = vmatpush1.msra.mxu0 %v2396
          %2704 = vmatprep.subr.mxu0 0.0
          %2705 = vmatpush1.msra.mxu0 %v2395
          %2706 = vmatprep.subr.mxu0 0.0
          %2707 = vmatpush2.msra.mxu0 0.0
          %2708 = vmatprep.subr.mxu0 0.0
          %2709 = vmatpush2.msra.mxu0 0.0
          %2710 = vmatprep.subr.mxu0 0.0
          %2711 = vmatpush2.msra.mxu0 0.0
          %2712 = vmatprep.subr.mxu0 0.0
          %2713 = vmatpush2.msra.mxu0 0.0
          %2714 = vmatprep.subr.mxu0 0.0
          %2715 = vmatpush2.msra.mxu0 0.0
          %2716 = vmatprep.subr.mxu0 0.0
          %2717 = vmatpush2.msra.mxu0 0.0
          %2718 = vmatprep.subr.mxu0 0.0
          %2719 = vmatpush2.msra.mxu0 0.0
          %2720 = vmatprep.subr.mxu0 0.0
          %2721 = vmatpush2.msra.mxu0 0.0
          %2722 = vmatprep.subr.mxu0 0.0
          %2723 = vmatpush2.msra.mxu0 0.0
          %2724 = vmatprep.subr.mxu0 0.0
          %2725 = vmatpush2.msra.mxu0 0.0
          %2726 = vmatprep.subr.mxu0 0.0
          %2727 = vmatpush2.msra.mxu0 0.0
          %2728 = vmatprep.subr.mxu0 0.0
          %2729 = vmatpush2.msra.mxu0 0.0
          %2730 = vmatprep.subr.mxu0 0.0
          %2731 = vmatpush2.msra.mxu0 0.0
          %2732 = vmatprep.subr.mxu0 0.0
          %2733 = vmatpush2.msra.mxu0 0.0
          %2734 = vmatprep.subr.mxu0 0.0
          %2735 = vmatpush2.msra.mxu0 0.0
          %2736 = vmatprep.subr.mxu0 0.0
          %2737 = vmatpush2.msra.mxu0 0.0
          %2738 = vmatprep.mubr.f32.mxu0 0.0
          %2739 = vmatmul.mubr.f32.gmra.mxu0 %v2642
          %v2740 = vpop.f32.mrf.mxu0
          %v2741 = vadd.f32 0.0, %v2740
          %v2742 = vpop.f32.mrf.mxu0
          %2743 = vmatprep.mubr.f32.mxu0 0.0
          %2744 = vmatmul.mubr.f32.gmra.mxu0 %v2643
          %v2745 = vpop.f32.mrf.mxu0
          %v2746 = vadd.f32 0.0, %v2745
          %v2747 = vpop.f32.mrf.mxu0
          %2748 = vmatprep.mubr.f32.mxu0 0.0
          %2749 = vmatmul.mubr.f32.gmra.mxu0 %v2644
          %v2750 = vpop.f32.mrf.mxu0
          %v2751 = vadd.f32 0.0, %v2750
          %v2752 = vpop.f32.mrf.mxu0
          %2753 = vmatprep.mubr.f32.mxu0 0.0
          %2754 = vmatmul.mubr.f32.gmra.mxu0 %v2645
          %v2755 = vpop.f32.mrf.mxu0
          %v2756 = vadd.f32 0.0, %v2755
          %v2757 = vpop.f32.mrf.mxu0
          %2758 = vmatprep.mubr.f32.mxu0 0.0
          %2759 = vmatmul.mubr.f32.gmra.mxu0 %v2646
          %v2760 = vpop.f32.mrf.mxu0
          %v2761 = vadd.f32 0.0, %v2760
          %v2762 = vpop.f32.mrf.mxu0
          %2763 = vmatprep.mubr.f32.mxu0 0.0
          %2764 = vmatmul.mubr.f32.gmra.mxu0 %v2647
          %v2765 = vpop.f32.mrf.mxu0
          %v2766 = vadd.f32 0.0, %v2765
          %v2767 = vpop.f32.mrf.mxu0
          %2768 = vmatprep.mubr.f32.mxu0 0.0
          %2769 = vmatmul.mubr.f32.gmra.mxu0 %v2648
          %v2770 = vpop.f32.mrf.mxu0
          %v2771 = vadd.f32 0.0, %v2770
          %v2772 = vpop.f32.mrf.mxu0
          %2773 = vmatprep.mubr.f32.mxu0 0.0
          %2774 = vmatmul.mubr.f32.gmra.mxu0 %v2649
          %v2775 = vpop.f32.mrf.mxu0
          %v2776 = vadd.f32 0.0, %v2775
          %v2777 = vpop.f32.mrf.mxu0
          %2778 = vmatprep.mubr.f32.mxu0 0.0
          %2779 = vmatmul.mubr.f32.gmra.mxu0 %v2650
          %v2780 = vpop.f32.mrf.mxu0
          %v2781 = vadd.f32 0.0, %v2780
          %v2782 = vpop.f32.mrf.mxu0
          %2783 = vmatprep.mubr.f32.mxu0 0.0
          %2784 = vmatmul.mubr.f32.gmra.mxu0 %v2651
          %v2785 = vpop.f32.mrf.mxu0
          %v2786 = vadd.f32 0.0, %v2785
          %v2787 = vpop.f32.mrf.mxu0
          %2788 = vmatprep.mubr.f32.mxu0 0.0
          %2789 = vmatmul.mubr.f32.gmra.mxu0 %v2652
          %v2790 = vpop.f32.mrf.mxu0
          %v2791 = vadd.f32 0.0, %v2790
          %v2792 = vpop.f32.mrf.mxu0
          %2793 = vmatprep.mubr.f32.mxu0 0.0
          %2794 = vmatmul.mubr.f32.gmra.mxu0 %v2653
          %v2795 = vpop.f32.mrf.mxu0
          %v2796 = vadd.f32 0.0, %v2795
          %v2797 = vpop.f32.mrf.mxu0
          %2798 = vmatprep.mubr.f32.mxu0 0.0
          %2799 = vmatmul.mubr.f32.gmra.mxu0 %v2654
          %v2800 = vpop.f32.mrf.mxu0
          %v2801 = vadd.f32 0.0, %v2800
          %v2802 = vpop.f32.mrf.mxu0
          %2803 = vmatprep.mubr.f32.mxu0 0.0
          %2804 = vmatmul.mubr.f32.gmra.mxu0 %v2655
          %v2805 = vpop.f32.mrf.mxu0
          %v2806 = vadd.f32 0.0, %v2805
          %v2807 = vpop.f32.mrf.mxu0
          %2808 = vmatprep.mubr.f32.mxu0 0.0
          %2809 = vmatmul.mubr.f32.gmra.mxu0 %v2656
          %v2810 = vpop.f32.mrf.mxu0
          %v2811 = vadd.f32 0.0, %v2810
          %v2812 = vpop.f32.mrf.mxu0
          %2813 = vmatprep.mubr.f32.mxu0 0.0
          %2814 = vmatmul.mubr.f32.gmra.mxu0 %v2657
          %v2815 = vpop.f32.mrf.mxu0
          %v2816 = vadd.f32 0.0, %v2815
          %v2817 = vpop.f32.mrf.mxu0
          %2818 = vmatprep.mubr.f32.mxu0 0.0
          %2819 = vmatmul.mubr.f32.gmra.mxu0 %v2658
          %v2820 = vpop.f32.mrf.mxu0
          %v2821 = vadd.f32 0.0, %v2820
          %v2822 = vpop.f32.mrf.mxu0
          %2823 = vmatprep.mubr.f32.mxu0 0.0
          %2824 = vmatmul.mubr.f32.gmra.mxu0 %v2659
          %v2825 = vpop.f32.mrf.mxu0
          %v2826 = vadd.f32 0.0, %v2825
          %v2827 = vpop.f32.mrf.mxu0
          %2828 = vmatprep.mubr.f32.mxu0 0.0
          %2829 = vmatmul.mubr.f32.gmra.mxu0 %v2660
          %v2830 = vpop.f32.mrf.mxu0
          %v2831 = vadd.f32 0.0, %v2830
          %v2832 = vpop.f32.mrf.mxu0
          %2833 = vmatprep.mubr.f32.mxu0 0.0
          %2834 = vmatmul.mubr.f32.gmra.mxu0 %v2661
          %v2835 = vpop.f32.mrf.mxu0
          %v2836 = vadd.f32 0.0, %v2835
          %v2837 = vpop.f32.mrf.mxu0
          %2838 = vmatprep.mubr.f32.mxu0 0.0
          %2839 = vmatmul.mubr.f32.gmra.mxu0 %v2662
          %v2840 = vpop.f32.mrf.mxu0
          %v2841 = vadd.f32 0.0, %v2840
          %v2842 = vpop.f32.mrf.mxu0
          %2843 = vmatprep.mubr.f32.mxu0 0.0
          %2844 = vmatmul.mubr.f32.gmra.mxu0 %v2663
          %v2845 = vpop.f32.mrf.mxu0
          %v2846 = vadd.f32 0.0, %v2845
          %v2847 = vpop.f32.mrf.mxu0
          %2848 = vmatprep.mubr.f32.mxu0 0.0
          %2849 = vmatmul.mubr.f32.gmra.mxu0 %v2664
          %v2850 = vpop.f32.mrf.mxu0
          %v2851 = vadd.f32 0.0, %v2850
          %v2852 = vpop.f32.mrf.mxu0
          %2853 = vmatprep.mubr.f32.mxu0 0.0
          %2854 = vmatmul.mubr.f32.gmra.mxu0 %v2665
          %v2855 = vpop.f32.mrf.mxu0
          %v2856 = vadd.f32 0.0, %v2855
          %v2857 = vpop.f32.mrf.mxu0
          %2858 = vmatprep.mubr.f32.mxu0 0.0
          %2859 = vmatmul.mubr.f32.gmra.mxu0 %v2666
          %v2860 = vpop.f32.mrf.mxu0
          %v2861 = vadd.f32 0.0, %v2860
          %v2862 = vpop.f32.mrf.mxu0
          %2863 = vmatprep.mubr.f32.mxu0 0.0
          %2864 = vmatmul.mubr.f32.gmra.mxu0 %v2667
          %v2865 = vpop.f32.mrf.mxu0
          %v2866 = vadd.f32 0.0, %v2865
          %v2867 = vpop.f32.mrf.mxu0
          %2868 = vmatprep.mubr.f32.mxu0 0.0
          %2869 = vmatmul.mubr.f32.gmra.mxu0 %v2668
          %v2870 = vpop.f32.mrf.mxu0
          %v2871 = vadd.f32 0.0, %v2870
          %v2872 = vpop.f32.mrf.mxu0
          %2873 = vmatprep.mubr.f32.mxu0 0.0
          %2874 = vmatmul.mubr.f32.gmra.mxu0 %v2669
          %v2875 = vpop.f32.mrf.mxu0
          %v2876 = vadd.f32 0.0, %v2875
          %v2877 = vpop.f32.mrf.mxu0
          %2878 = vmatprep.mubr.f32.mxu0 0.0
          %2879 = vmatmul.mubr.f32.gmra.mxu0 %v2670
          %v2880 = vpop.f32.mrf.mxu0
          %v2881 = vadd.f32 0.0, %v2880
          %v2882 = vpop.f32.mrf.mxu0
          %2883 = vmatprep.mubr.f32.mxu0 0.0
          %2884 = vmatmul.mubr.f32.gmra.mxu0 %v2671
          %v2885 = vpop.f32.mrf.mxu0
          %v2886 = vadd.f32 0.0, %v2885
          %v2887 = vpop.f32.mrf.mxu0
          %2888 = vmatprep.mubr.f32.mxu0 0.0
          %2889 = vmatmul.mubr.f32.gmra.mxu0 %v2672
          %v2890 = vpop.f32.mrf.mxu0
          %v2891 = vadd.f32 0.0, %v2890
          %v2892 = vpop.f32.mrf.mxu0
          %2893 = vmatprep.mubr.f32.mxu0 0.0
          %2894 = vmatmul.mubr.f32.gmra.mxu0 %v2673
          %v2895 = vpop.f32.mrf.mxu0
          %v2896 = vadd.f32 0.0, %v2895
          %v2897 = vpop.f32.mrf.mxu0
          %2898 = vdwg.mxu0
          %v2899 = vmul.f32 %v2642, %v2331
          %v2900 = vmul.f32 %v2643, %v2332
          %v2901 = vmul.f32 %v2644, %v2333
          %v2902 = vmul.f32 %v2645, %v2334
          %v2903 = vmul.f32 %v2646, %v2335
          %v2904 = vmul.f32 %v2647, %v2336
          %v2905 = vmul.f32 %v2648, %v2337
          %v2906 = vmul.f32 %v2649, %v2338
          %v2907 = vmul.f32 %v2650, %v2339
          %v2908 = vmul.f32 %v2651, %v2340
          %v2909 = vmul.f32 %v2652, %v2341
          %v2910 = vmul.f32 %v2653, %v2342
          %v2911 = vmul.f32 %v2654, %v2343
          %v2912 = vmul.f32 %v2655, %v2344
          %v2913 = vmul.f32 %v2656, %v2345
          %v2914 = vmul.f32 %v2657, %v2346
          %v2915 = vmul.f32 %v2658, %v2347
          %v2916 = vmul.f32 %v2659, %v2348
          %v2917 = vmul.f32 %v2660, %v2349
          %v2918 = vmul.f32 %v2661, %v2350
          %v2919 = vmul.f32 %v2662, %v2351
          %v2920 = vmul.f32 %v2663, %v2352
          %v2921 = vmul.f32 %v2664, %v2353
          %v2922 = vmul.f32 %v2665, %v2354
          %v2923 = vmul.f32 %v2666, %v2355
          %v2924 = vmul.f32 %v2667, %v2356
          %v2925 = vmul.f32 %v2668, %v2357
          %v2926 = vmul.f32 %v2669, %v2358
          %v2927 = vmul.f32 %v2670, %v2359
          %v2928 = vmul.f32 %v2671, %v2360
          %v2929 = vmul.f32 %v2672, %v2361
          %v2930 = vmul.f32 %v2673, %v2362
          %v2931 = vmul.f32 %v2741, %v2363
          %v2932 = vmul.f32 %v2746, %v2364
          %v2933 = vmul.f32 %v2751, %v2365
          %v2934 = vmul.f32 %v2756, %v2366
          %v2935 = vmul.f32 %v2761, %v2367
          %v2936 = vmul.f32 %v2766, %v2368
          %v2937 = vmul.f32 %v2771, %v2369
          %v2938 = vmul.f32 %v2776, %v2370
          %v2939 = vmul.f32 %v2781, %v2371
          %v2940 = vmul.f32 %v2786, %v2372
          %v2941 = vmul.f32 %v2791, %v2373
          %v2942 = vmul.f32 %v2796, %v2374
          %v2943 = vmul.f32 %v2801, %v2375
          %v2944 = vmul.f32 %v2806, %v2376
          %v2945 = vmul.f32 %v2811, %v2377
          %v2946 = vmul.f32 %v2816, %v2378
          %v2947 = vmul.f32 %v2821, %v2379
          %v2948 = vmul.f32 %v2826, %v2380
          %v2949 = vmul.f32 %v2831, %v2381
          %v2950 = vmul.f32 %v2836, %v2382
          %v2951 = vmul.f32 %v2841, %v2383
          %v2952 = vmul.f32 %v2846, %v2384
          %v2953 = vmul.f32 %v2851, %v2385
          %v2954 = vmul.f32 %v2856, %v2386
          %v2955 = vmul.f32 %v2861, %v2387
          %v2956 = vmul.f32 %v2866, %v2388
          %v2957 = vmul.f32 %v2871, %v2389
          %v2958 = vmul.f32 %v2876, %v2390
          %v2959 = vmul.f32 %v2881, %v2391
          %v2960 = vmul.f32 %v2886, %v2392
          %v2961 = vmul.f32 %v2891, %v2393
          %v2962 = vmul.f32 %v2896, %v2394
          %v2963 = vadd.f32 %v2899, %v2931
          %v2964 = vadd.f32 %v2900, %v2932
          %v2965 = vadd.f32 %v2901, %v2933
          %v2966 = vadd.f32 %v2902, %v2934
          %v2967 = vadd.f32 %v2903, %v2935
          %v2968 = vadd.f32 %v2904, %v2936
          %v2969 = vadd.f32 %v2905, %v2937
          %v2970 = vadd.f32 %v2906, %v2938
          %v2971 = vadd.f32 %v2907, %v2939
          %v2972 = vadd.f32 %v2908, %v2940
          %v2973 = vadd.f32 %v2909, %v2941
          %v2974 = vadd.f32 %v2910, %v2942
          %v2975 = vadd.f32 %v2911, %v2943
          %v2976 = vadd.f32 %v2912, %v2944
          %v2977 = vadd.f32 %v2913, %v2945
          %v2978 = vadd.f32 %v2914, %v2946
          %v2979 = vadd.f32 %v2915, %v2947
          %v2980 = vadd.f32 %v2916, %v2948
          %v2981 = vadd.f32 %v2917, %v2949
          %v2982 = vadd.f32 %v2918, %v2950
          %v2983 = vadd.f32 %v2919, %v2951
          %v2984 = vadd.f32 %v2920, %v2952
          %v2985 = vadd.f32 %v2921, %v2953
          %v2986 = vadd.f32 %v2922, %v2954
          %v2987 = vadd.f32 %v2923, %v2955
          %v2988 = vadd.f32 %v2924, %v2956
          %v2989 = vadd.f32 %v2925, %v2957
          %v2990 = vadd.f32 %v2926, %v2958
          %v2991 = vadd.f32 %v2927, %v2959
          %v2992 = vadd.f32 %v2928, %v2960
          %v2993 = vadd.f32 %v2929, %v2961
          %v2994 = vadd.f32 %v2930, %v2962
          %v2995 = vpack.c.bf16 %v2964, %v2963
          %v2996 = vpack.c.bf16 %v2966, %v2965
          %v2997 = vpack.c.bf16 %v2968, %v2967
          %v2998 = vpack.c.bf16 %v2970, %v2969
          %v2999 = vpack.c.bf16 %v2972, %v2971
          %v3000 = vpack.c.bf16 %v2974, %v2973
          %v3001 = vpack.c.bf16 %v2976, %v2975
          %v3002 = vpack.c.bf16 %v2978, %v2977
          %v3003 = vpack.c.bf16 %v2980, %v2979
          %v3004 = vpack.c.bf16 %v2982, %v2981
          %v3005 = vpack.c.bf16 %v2984, %v2983
          %v3006 = vpack.c.bf16 %v2986, %v2985
          %v3007 = vpack.c.bf16 %v2988, %v2987
          %v3008 = vpack.c.bf16 %v2990, %v2989
          %v3009 = vpack.c.bf16 %v2992, %v2991
          %v3010 = vpack.c.bf16 %v2994, %v2993
          %v3027 = vunpack.c.l.b16 %v2995
          %v3028 = vunpack.c.h.b16 %v2995
          %v3029 = vunpack.c.l.b16 %v2996
          %v3030 = vunpack.c.h.b16 %v2996
          %v3031 = vunpack.c.l.b16 %v2997
          %v3032 = vunpack.c.h.b16 %v2997
          %v3033 = vunpack.c.l.b16 %v2998
          %v3034 = vunpack.c.h.b16 %v2998
          %v3035 = vunpack.c.l.b16 %v2999
          %v3036 = vunpack.c.h.b16 %v2999
          %v3037 = vunpack.c.l.b16 %v3000
          %v3038 = vunpack.c.h.b16 %v3000
          %v3039 = vunpack.c.l.b16 %v3001
          %v3040 = vunpack.c.h.b16 %v3001
          %v3041 = vunpack.c.l.b16 %v3002
          %v3042 = vunpack.c.h.b16 %v3002
          %v3043 = vunpack.c.l.b16 %v3003
          %v3044 = vunpack.c.h.b16 %v3003
          %v3045 = vunpack.c.l.b16 %v3004
          %v3046 = vunpack.c.h.b16 %v3004
          %v3047 = vunpack.c.l.b16 %v3005
          %v3048 = vunpack.c.h.b16 %v3005
          %v3049 = vunpack.c.l.b16 %v3006
          %v3050 = vunpack.c.h.b16 %v3006
          %v3051 = vunpack.c.l.b16 %v3007
          %v3052 = vunpack.c.h.b16 %v3007
          %v3053 = vunpack.c.l.b16 %v3008
          %v3054 = vunpack.c.h.b16 %v3008
          %v3055 = vunpack.c.l.b16 %v3009
          %v3056 = vunpack.c.h.b16 %v3009
          %v3057 = vunpack.c.l.b16 %v3010
          %v3058 = vunpack.c.h.b16 %v3010
          %v3059 = vpack.c.b16 %v3027, %v3027
          %v3060 = vpack.c.b16 %v3028, %v3028
          %v3061 = vpack.c.b16 %v3029, %v3029
          %v3062 = vpack.c.b16 %v3030, %v3030
          %v3063 = vpack.c.b16 %v3031, %v3031
          %v3064 = vpack.c.b16 %v3032, %v3032
          %v3065 = vpack.c.b16 %v3033, %v3033
          %v3066 = vpack.c.b16 %v3034, %v3034
          %v3067 = vpack.c.b16 %v3035, %v3035
          %v3068 = vpack.c.b16 %v3036, %v3036
          %v3069 = vpack.c.b16 %v3037, %v3037
          %v3070 = vpack.c.b16 %v3038, %v3038
          %v3071 = vpack.c.b16 %v3039, %v3039
          %v3072 = vpack.c.b16 %v3040, %v3040
          %v3073 = vpack.c.b16 %v3041, %v3041
          %v3074 = vpack.c.b16 %v3042, %v3042
          %v3075 = vpack.c.b16 %v3043, %v3043
          %v3076 = vpack.c.b16 %v3044, %v3044
          %v3077 = vpack.c.b16 %v3045, %v3045
          %v3078 = vpack.c.b16 %v3046, %v3046
          %v3079 = vpack.c.b16 %v3047, %v3047
          %v3080 = vpack.c.b16 %v3048, %v3048
          %v3081 = vpack.c.b16 %v3049, %v3049
          %v3082 = vpack.c.b16 %v3050, %v3050
          %v3083 = vpack.c.b16 %v3051, %v3051
          %v3084 = vpack.c.b16 %v3052, %v3052
          %v3085 = vpack.c.b16 %v3053, %v3053
          %v3086 = vpack.c.b16 %v3054, %v3054
          %v3087 = vpack.c.b16 %v3055, %v3055
          %v3088 = vpack.c.b16 %v3056, %v3056
          %v3089 = vpack.c.b16 %v3057, %v3057
          %v3090 = vpack.c.b16 %v3058, %v3058
          %3123 = vst [vmem:[%s751] sm:$0xf] %v3059
          %3124 = vst [vmem:[%s751 + $0x4] sm:$0xf] %v3060
          %3125 = vst [vmem:[%s751 + $0x8] sm:$0xf] %v3061
          %3126 = vst [vmem:[%s751 + $0xc] sm:$0xf] %v3062
          %3127 = vst [vmem:[%s751 + $0x10] sm:$0xf] %v3063
          %3128 = vst [vmem:[%s751 + $0x14] sm:$0xf] %v3064
          %3129 = vst [vmem:[%s751 + $0x18] sm:$0xf] %v3065
          %3130 = vst [vmem:[%s751 + $0x1c] sm:$0xf] %v3066
          %3131 = vst [vmem:[%s751 + $0x20] sm:$0xf] %v3067
          %3132 = vst [vmem:[%s751 + $0x24] sm:$0xf] %v3068
          %3133 = vst [vmem:[%s751 + $0x28] sm:$0xf] %v3069
          %3134 = vst [vmem:[%s751 + $0x2c] sm:$0xf] %v3070
          %3135 = vst [vmem:[%s751 + $0x30] sm:$0xf] %v3071
          %3136 = vst [vmem:[%s751 + $0x34] sm:$0xf] %v3072
          %3137 = vst [vmem:[%s751 + $0x38] sm:$0xf] %v3073
          %3138 = vst [vmem:[%s751 + $0x3c] sm:$0xf] %v3074
          %3139 = vst [vmem:[%s751 + $0x40] sm:$0xf] %v3075
          %3140 = vst [vmem:[%s751 + $0x44] sm:$0xf] %v3076
          %3141 = vst [vmem:[%s751 + $0x48] sm:$0xf] %v3077
          %3142 = vst [vmem:[%s751 + $0x4c] sm:$0xf] %v3078
          %3143 = vst [vmem:[%s751 + $0x50] sm:$0xf] %v3079
          %3144 = vst [vmem:[%s751 + $0x54] sm:$0xf] %v3080
          %3145 = vst [vmem:[%s751 + $0x58] sm:$0xf] %v3081
          %3146 = vst [vmem:[%s751 + $0x5c] sm:$0xf] %v3082
          %3147 = vst [vmem:[%s751 + $0x60] sm:$0xf] %v3083
          %3148 = vst [vmem:[%s751 + $0x64] sm:$0xf] %v3084
          %3149 = vst [vmem:[%s751 + $0x68] sm:$0xf] %v3085
          %3150 = vst [vmem:[%s751 + $0x6c] sm:$0xf] %v3086
          %3151 = vst [vmem:[%s751 + $0x70] sm:$0xf] %v3087
          %3152 = vst [vmem:[%s751 + $0x74] sm:$0xf] %v3088
          %3153 = vst [vmem:[%s751 + $0x78] sm:$0xf] %v3089
          %3154 = vst [vmem:[%s751 + $0x7c] sm:$0xf] %v3090
          %v3155 = vmul.f32 %v2164, %v2164
          %v3156 = vmul.f32 %v2168, %v2168
          %v3157 = vmul.f32 %v2174, %v2174
          %v3158 = vmul.f32 %v2178, %v2178
          %v3159 = vmul.f32 %v2184, %v2184
          %v3160 = vmul.f32 %v2188, %v2188
          %v3161 = vmul.f32 %v2194, %v2194
          %v3162 = vmul.f32 %v2198, %v2198
          %v3163 = vmul.f32 %v2204, %v2204
          %v3164 = vmul.f32 %v2208, %v2208
          %v3165 = vmul.f32 %v2214, %v2214
          %v3166 = vmul.f32 %v2218, %v2218
          %v3167 = vmul.f32 %v2224, %v2224
          %v3168 = vmul.f32 %v2228, %v2228
          %v3169 = vmul.f32 %v2234, %v2234
          %v3170 = vmul.f32 %v2238, %v2238
          %v3171 = vmul.f32 %v2244, %v2244
          %v3172 = vmul.f32 %v2248, %v2248
          %v3173 = vmul.f32 %v2254, %v2254
          %v3174 = vmul.f32 %v2258, %v2258
          %v3175 = vmul.f32 %v2264, %v2264
          %v3176 = vmul.f32 %v2268, %v2268
          %v3177 = vmul.f32 %v2274, %v2274
          %v3178 = vmul.f32 %v2278, %v2278
          %v3179 = vmul.f32 %v2284, %v2284
          %v3180 = vmul.f32 %v2288, %v2288
          %v3181 = vmul.f32 %v2294, %v2294
          %v3182 = vmul.f32 %v2298, %v2298
          %v3183 = vmul.f32 %v2304, %v2304
          %v3184 = vmul.f32 %v2308, %v2308
          %v3185 = vmul.f32 %v2314, %v2314
          %v3186 = vmul.f32 %v2318, %v2318
          %3187 = vadd.xlane.f32.xlu0 %v3155
          %v3188 = vpop.xlane.xlu0 %3187
          %3189 = vadd.xlane.f32.xlu0 %v3156
          %v3190 = vpop.xlane.xlu0 %3189
          %3191 = vadd.xlane.f32.xlu0 %v3157
          %v3192 = vpop.xlane.xlu0 %3191
          %3193 = vadd.xlane.f32.xlu0 %v3158
          %v3194 = vpop.xlane.xlu0 %3193
          %3195 = vadd.xlane.f32.xlu0 %v3159
          %v3196 = vpop.xlane.xlu0 %3195
          %3197 = vadd.xlane.f32.xlu0 %v3160
          %v3198 = vpop.xlane.xlu0 %3197
          %3199 = vadd.xlane.f32.xlu0 %v3161
          %v3200 = vpop.xlane.xlu0 %3199
          %3201 = vadd.xlane.f32.xlu0 %v3162
          %v3202 = vpop.xlane.xlu0 %3201
          %3203 = vadd.xlane.f32.xlu0 %v3163
          %v3204 = vpop.xlane.xlu0 %3203
          %3205 = vadd.xlane.f32.xlu0 %v3164
          %v3206 = vpop.xlane.xlu0 %3205
          %3207 = vadd.xlane.f32.xlu0 %v3165
          %v3208 = vpop.xlane.xlu0 %3207
          %3209 = vadd.xlane.f32.xlu0 %v3166
          %v3210 = vpop.xlane.xlu0 %3209
          %3211 = vadd.xlane.f32.xlu0 %v3167
          %v3212 = vpop.xlane.xlu0 %3211
          %3213 = vadd.xlane.f32.xlu0 %v3168
          %v3214 = vpop.xlane.xlu0 %3213
          %3215 = vadd.xlane.f32.xlu0 %v3169
          %v3216 = vpop.xlane.xlu0 %3215
          %3217 = vadd.xlane.f32.xlu0 %v3170
          %v3218 = vpop.xlane.xlu0 %3217
          %3219 = vadd.xlane.f32.xlu0 %v3171
          %v3220 = vpop.xlane.xlu0 %3219
          %3221 = vadd.xlane.f32.xlu0 %v3172
          %v3222 = vpop.xlane.xlu0 %3221
          %3223 = vadd.xlane.f32.xlu0 %v3173
          %v3224 = vpop.xlane.xlu0 %3223
          %3225 = vadd.xlane.f32.xlu0 %v3174
          %v3226 = vpop.xlane.xlu0 %3225
          %3227 = vadd.xlane.f32.xlu0 %v3175
          %v3228 = vpop.xlane.xlu0 %3227
          %3229 = vadd.xlane.f32.xlu0 %v3176
          %v3230 = vpop.xlane.xlu0 %3229
          %3231 = vadd.xlane.f32.xlu0 %v3177
          %v3232 = vpop.xlane.xlu0 %3231
          %3233 = vadd.xlane.f32.xlu0 %v3178
          %v3234 = vpop.xlane.xlu0 %3233
          %3235 = vadd.xlane.f32.xlu0 %v3179
          %v3236 = vpop.xlane.xlu0 %3235
          %3237 = vadd.xlane.f32.xlu0 %v3180
          %v3238 = vpop.xlane.xlu0 %3237
          %3239 = vadd.xlane.f32.xlu0 %v3181
          %v3240 = vpop.xlane.xlu0 %3239
          %3241 = vadd.xlane.f32.xlu0 %v3182
          %v3242 = vpop.xlane.xlu0 %3241
          %3243 = vadd.xlane.f32.xlu0 %v3183
          %v3244 = vpop.xlane.xlu0 %3243
          %3245 = vadd.xlane.f32.xlu0 %v3184
          %v3246 = vpop.xlane.xlu0 %3245
          %3247 = vadd.xlane.f32.xlu0 %v3185
          %v3248 = vpop.xlane.xlu0 %3247
          %3249 = vadd.xlane.f32.xlu0 %v3186
          %v3250 = vpop.xlane.xlu0 %3249
          %v3251 = vmul.f32 %v3188, %v2507
          %v3252 = vmul.f32 %v3190, %v2507
          %v3253 = vmul.f32 %v3192, %v2507
          %v3254 = vmul.f32 %v3194, %v2507
          %v3255 = vmul.f32 %v3196, %v2507
          %v3256 = vmul.f32 %v3198, %v2507
          %v3257 = vmul.f32 %v3200, %v2507
          %v3258 = vmul.f32 %v3202, %v2507
          %v3259 = vmul.f32 %v3204, %v2507
          %v3260 = vmul.f32 %v3206, %v2507
          %v3261 = vmul.f32 %v3208, %v2507
          %v3262 = vmul.f32 %v3210, %v2507
          %v3263 = vmul.f32 %v3212, %v2507
          %v3264 = vmul.f32 %v3214, %v2507
          %v3265 = vmul.f32 %v3216, %v2507
          %v3266 = vmul.f32 %v3218, %v2507
          %v3267 = vmul.f32 %v3220, %v2507
          %v3268 = vmul.f32 %v3222, %v2507
          %v3269 = vmul.f32 %v3224, %v2507
          %v3270 = vmul.f32 %v3226, %v2507
          %v3271 = vmul.f32 %v3228, %v2507
          %v3272 = vmul.f32 %v3230, %v2507
          %v3273 = vmul.f32 %v3232, %v2507
          %v3274 = vmul.f32 %v3234, %v2507
          %v3275 = vmul.f32 %v3236, %v2507
          %v3276 = vmul.f32 %v3238, %v2507
          %v3277 = vmul.f32 %v3240, %v2507
          %v3278 = vmul.f32 %v3242, %v2507
          %v3279 = vmul.f32 %v3244, %v2507
          %v3280 = vmul.f32 %v3246, %v2507
          %v3281 = vmul.f32 %v3248, %v2507
          %v3282 = vmul.f32 %v3250, %v2507
          %v3283 = vadd.f32 %v3251, 1e-06
          %v3284 = vadd.f32 %v3252, 1e-06
          %v3285 = vadd.f32 %v3253, 1e-06
          %v3286 = vadd.f32 %v3254, 1e-06
          %v3287 = vadd.f32 %v3255, 1e-06
          %v3288 = vadd.f32 %v3256, 1e-06
          %v3289 = vadd.f32 %v3257, 1e-06
          %v3290 = vadd.f32 %v3258, 1e-06
          %v3291 = vadd.f32 %v3259, 1e-06
          %v3292 = vadd.f32 %v3260, 1e-06
          %v3293 = vadd.f32 %v3261, 1e-06
          %v3294 = vadd.f32 %v3262, 1e-06
          %v3295 = vadd.f32 %v3263, 1e-06
          %v3296 = vadd.f32 %v3264, 1e-06
          %v3297 = vadd.f32 %v3265, 1e-06
          %v3298 = vadd.f32 %v3266, 1e-06
          %v3299 = vadd.f32 %v3267, 1e-06
          %v3300 = vadd.f32 %v3268, 1e-06
          %v3301 = vadd.f32 %v3269, 1e-06
          %v3302 = vadd.f32 %v3270, 1e-06
          %v3303 = vadd.f32 %v3271, 1e-06
          %v3304 = vadd.f32 %v3272, 1e-06
          %v3305 = vadd.f32 %v3273, 1e-06
          %v3306 = vadd.f32 %v3274, 1e-06
          %v3307 = vadd.f32 %v3275, 1e-06
          %v3308 = vadd.f32 %v3276, 1e-06
          %v3309 = vadd.f32 %v3277, 1e-06
          %v3310 = vadd.f32 %v3278, 1e-06
          %v3311 = vadd.f32 %v3279, 1e-06
          %v3312 = vadd.f32 %v3280, 1e-06
          %v3313 = vadd.f32 %v3281, 1e-06
          %v3314 = vadd.f32 %v3282, 1e-06
          %v3315 = vrsqrt.pop %v3283
          %v3316 = vrsqrt.pop %v3284
          %v3317 = vrsqrt.pop %v3285
          %v3318 = vrsqrt.pop %v3286
          %v3319 = vrsqrt.pop %v3287
          %v3320 = vrsqrt.pop %v3288
          %v3321 = vrsqrt.pop %v3289
          %v3322 = vrsqrt.pop %v3290
          %v3323 = vrsqrt.pop %v3291
          %v3324 = vrsqrt.pop %v3292
          %v3325 = vrsqrt.pop %v3293
          %v3326 = vrsqrt.pop %v3294
          %v3327 = vrsqrt.pop %v3295
          %v3328 = vrsqrt.pop %v3296
          %v3329 = vrsqrt.pop %v3297
          %v3330 = vrsqrt.pop %v3298
          %v3331 = vrsqrt.pop %v3299
          %v3332 = vrsqrt.pop %v3300
          %v3333 = vrsqrt.pop %v3301
          %v3334 = vrsqrt.pop %v3302
          %v3335 = vrsqrt.pop %v3303
          %v3336 = vrsqrt.pop %v3304
          %v3337 = vrsqrt.pop %v3305
          %v3338 = vrsqrt.pop %v3306
          %v3339 = vrsqrt.pop %v3307
          %v3340 = vrsqrt.pop %v3308
          %v3341 = vrsqrt.pop %v3309
          %v3342 = vrsqrt.pop %v3310
          %v3343 = vrsqrt.pop %v3311
          %v3344 = vrsqrt.pop %v3312
          %v3345 = vrsqrt.pop %v3313
          %v3346 = vrsqrt.pop %v3314
          %v3347 = vmul.f32 %v2164, %v3315
          %v3348 = vmul.f32 %v2168, %v3316
          %v3349 = vmul.f32 %v2174, %v3317
          %v3350 = vmul.f32 %v2178, %v3318
          %v3351 = vmul.f32 %v2184, %v3319
          %v3352 = vmul.f32 %v2188, %v3320
          %v3353 = vmul.f32 %v2194, %v3321
          %v3354 = vmul.f32 %v2198, %v3322
          %v3355 = vmul.f32 %v2204, %v3323
          %v3356 = vmul.f32 %v2208, %v3324
          %v3357 = vmul.f32 %v2214, %v3325
          %v3358 = vmul.f32 %v2218, %v3326
          %v3359 = vmul.f32 %v2224, %v3327
          %v3360 = vmul.f32 %v2228, %v3328
          %v3361 = vmul.f32 %v2234, %v3329
          %v3362 = vmul.f32 %v2238, %v3330
          %v3363 = vmul.f32 %v2244, %v3331
          %v3364 = vmul.f32 %v2248, %v3332
          %v3365 = vmul.f32 %v2254, %v3333
          %v3366 = vmul.f32 %v2258, %v3334
          %v3367 = vmul.f32 %v2264, %v3335
          %v3368 = vmul.f32 %v2268, %v3336
          %v3369 = vmul.f32 %v2274, %v3337
          %v3370 = vmul.f32 %v2278, %v3338
          %v3371 = vmul.f32 %v2284, %v3339
          %v3372 = vmul.f32 %v2288, %v3340
          %v3373 = vmul.f32 %v2294, %v3341
          %v3374 = vmul.f32 %v2298, %v3342
          %v3375 = vmul.f32 %v2304, %v3343
          %v3376 = vmul.f32 %v2308, %v3344
          %v3377 = vmul.f32 %v2314, %v3345
          %v3378 = vmul.f32 %v2318, %v3346
          %v3379 = vmul.f32 %v3347, %v2640
          %v3380 = vmul.f32 %v3348, %v2640
          %v3381 = vmul.f32 %v3349, %v2640
          %v3382 = vmul.f32 %v3350, %v2640
          %v3383 = vmul.f32 %v3351, %v2640
          %v3384 = vmul.f32 %v3352, %v2640
          %v3385 = vmul.f32 %v3353, %v2640
          %v3386 = vmul.f32 %v3354, %v2640
          %v3387 = vmul.f32 %v3355, %v2640
          %v3388 = vmul.f32 %v3356, %v2640
          %v3389 = vmul.f32 %v3357, %v2640
          %v3390 = vmul.f32 %v3358, %v2640
          %v3391 = vmul.f32 %v3359, %v2640
          %v3392 = vmul.f32 %v3360, %v2640
          %v3393 = vmul.f32 %v3361, %v2640
          %v3394 = vmul.f32 %v3362, %v2640
          %v3395 = vmul.f32 %v3363, %v2640
          %v3396 = vmul.f32 %v3364, %v2640
          %v3397 = vmul.f32 %v3365, %v2640
          %v3398 = vmul.f32 %v3366, %v2640
          %v3399 = vmul.f32 %v3367, %v2640
          %v3400 = vmul.f32 %v3368, %v2640
          %v3401 = vmul.f32 %v3369, %v2640
          %v3402 = vmul.f32 %v3370, %v2640
          %v3403 = vmul.f32 %v3371, %v2640
          %v3404 = vmul.f32 %v3372, %v2640
          %v3405 = vmul.f32 %v3373, %v2640
          %v3406 = vmul.f32 %v3374, %v2640
          %v3407 = vmul.f32 %v3375, %v2640
          %v3408 = vmul.f32 %v3376, %v2640
          %v3409 = vmul.f32 %v3377, %v2640
          %v3410 = vmul.f32 %v3378, %v2640
          %3411 = vmatprep.subr.mxu0 0.0
          %3412 = vmatpush1.msra.mxu0 %v2410
          %3413 = vmatprep.subr.mxu0 0.0
          %3414 = vmatpush1.msra.mxu0 %v2409
          %3415 = vmatprep.subr.mxu0 0.0
          %3416 = vmatpush1.msra.mxu0 %v2408
          %3417 = vmatprep.subr.mxu0 0.0
          %3418 = vmatpush1.msra.mxu0 %v2407
          %3419 = vmatprep.subr.mxu0 0.0
          %3420 = vmatpush1.msra.mxu0 %v2406
          %3421 = vmatprep.subr.mxu0 0.0
          %3422 = vmatpush1.msra.mxu0 %v2405
          %3423 = vmatprep.subr.mxu0 0.0
          %3424 = vmatpush1.msra.mxu0 %v2404
          %3425 = vmatprep.subr.mxu0 0.0
          %3426 = vmatpush1.msra.mxu0 %v2403
          %3427 = vmatprep.subr.mxu0 0.0
          %3428 = vmatpush1.msra.mxu0 %v2402
          %3429 = vmatprep.subr.mxu0 0.0
          %3430 = vmatpush1.msra.mxu0 %v2401
          %3431 = vmatprep.subr.mxu0 0.0
          %3432 = vmatpush1.msra.mxu0 %v2400
          %3433 = vmatprep.subr.mxu0 0.0
          %3434 = vmatpush1.msra.mxu0 %v2399
          %3435 = vmatprep.subr.mxu0 0.0
          %3436 = vmatpush1.msra.mxu0 %v2398
          %3437 = vmatprep.subr.mxu0 0.0
          %3438 = vmatpush1.msra.mxu0 %v2397
          %3439 = vmatprep.subr.mxu0 0.0
          %3440 = vmatpush1.msra.mxu0 %v2396
          %3441 = vmatprep.subr.mxu0 0.0
          %3442 = vmatpush1.msra.mxu0 %v2395
          %3443 = vmatprep.subr.mxu0 0.0
          %3444 = vmatpush2.msra.mxu0 0.0
          %3445 = vmatprep.subr.mxu0 0.0
          %3446 = vmatpush2.msra.mxu0 0.0
          %3447 = vmatprep.subr.mxu0 0.0
          %3448 = vmatpush2.msra.mxu0 0.0
          %3449 = vmatprep.subr.mxu0 0.0
          %3450 = vmatpush2.msra.mxu0 0.0
          %3451 = vmatprep.subr.mxu0 0.0
          %3452 = vmatpush2.msra.mxu0 0.0
          %3453 = vmatprep.subr.mxu0 0.0
          %3454 = vmatpush2.msra.mxu0 0.0
          %3455 = vmatprep.subr.mxu0 0.0
          %3456 = vmatpush2.msra.mxu0 0.0
          %3457 = vmatprep.subr.mxu0 0.0
          %3458 = vmatpush2.msra.mxu0 0.0
          %3459 = vmatprep.subr.mxu0 0.0
          %3460 = vmatpush2.msra.mxu0 0.0
          %3461 = vmatprep.subr.mxu0 0.0
          %3462 = vmatpush2.msra.mxu0 0.0
          %3463 = vmatprep.subr.mxu0 0.0
          %3464 = vmatpush2.msra.mxu0 0.0
          %3465 = vmatprep.subr.mxu0 0.0
          %3466 = vmatpush2.msra.mxu0 0.0
          %3467 = vmatprep.subr.mxu0 0.0
          %3468 = vmatpush2.msra.mxu0 0.0
          %3469 = vmatprep.subr.mxu0 0.0
          %3470 = vmatpush2.msra.mxu0 0.0
          %3471 = vmatprep.subr.mxu0 0.0
          %3472 = vmatpush2.msra.mxu0 0.0
          %3473 = vmatprep.subr.mxu0 0.0
          %3474 = vmatpush2.msra.mxu0 0.0
          %3475 = vmatprep.mubr.f32.mxu0 0.0
          %3476 = vmatmul.mubr.f32.gmra.mxu0 %v3379
          %v3477 = vpop.f32.mrf.mxu0
          %v3478 = vadd.f32 0.0, %v3477
          %v3479 = vpop.f32.mrf.mxu0
          %3480 = vmatprep.mubr.f32.mxu0 0.0
          %3481 = vmatmul.mubr.f32.gmra.mxu0 %v3380
          %v3482 = vpop.f32.mrf.mxu0
          %v3483 = vadd.f32 0.0, %v3482
          %v3484 = vpop.f32.mrf.mxu0
          %3485 = vmatprep.mubr.f32.mxu0 0.0
          %3486 = vmatmul.mubr.f32.gmra.mxu0 %v3381
          %v3487 = vpop.f32.mrf.mxu0
          %v3488 = vadd.f32 0.0, %v3487
          %v3489 = vpop.f32.mrf.mxu0
          %3490 = vmatprep.mubr.f32.mxu0 0.0
          %3491 = vmatmul.mubr.f32.gmra.mxu0 %v3382
          %v3492 = vpop.f32.mrf.mxu0
          %v3493 = vadd.f32 0.0, %v3492
          %v3494 = vpop.f32.mrf.mxu0
          %3495 = vmatprep.mubr.f32.mxu0 0.0
          %3496 = vmatmul.mubr.f32.gmra.mxu0 %v3383
          %v3497 = vpop.f32.mrf.mxu0
          %v3498 = vadd.f32 0.0, %v3497
          %v3499 = vpop.f32.mrf.mxu0
          %3500 = vmatprep.mubr.f32.mxu0 0.0
          %3501 = vmatmul.mubr.f32.gmra.mxu0 %v3384
          %v3502 = vpop.f32.mrf.mxu0
          %v3503 = vadd.f32 0.0, %v3502
          %v3504 = vpop.f32.mrf.mxu0
          %3505 = vmatprep.mubr.f32.mxu0 0.0
          %3506 = vmatmul.mubr.f32.gmra.mxu0 %v3385
          %v3507 = vpop.f32.mrf.mxu0
          %v3508 = vadd.f32 0.0, %v3507
          %v3509 = vpop.f32.mrf.mxu0
          %3510 = vmatprep.mubr.f32.mxu0 0.0
          %3511 = vmatmul.mubr.f32.gmra.mxu0 %v3386
          %v3512 = vpop.f32.mrf.mxu0
          %v3513 = vadd.f32 0.0, %v3512
          %v3514 = vpop.f32.mrf.mxu0
          %3515 = vmatprep.mubr.f32.mxu0 0.0
          %3516 = vmatmul.mubr.f32.gmra.mxu0 %v3387
          %v3517 = vpop.f32.mrf.mxu0
          %v3518 = vadd.f32 0.0, %v3517
          %v3519 = vpop.f32.mrf.mxu0
          %3520 = vmatprep.mubr.f32.mxu0 0.0
          %3521 = vmatmul.mubr.f32.gmra.mxu0 %v3388
          %v3522 = vpop.f32.mrf.mxu0
          %v3523 = vadd.f32 0.0, %v3522
          %v3524 = vpop.f32.mrf.mxu0
          %3525 = vmatprep.mubr.f32.mxu0 0.0
          %3526 = vmatmul.mubr.f32.gmra.mxu0 %v3389
          %v3527 = vpop.f32.mrf.mxu0
          %v3528 = vadd.f32 0.0, %v3527
          %v3529 = vpop.f32.mrf.mxu0
          %3530 = vmatprep.mubr.f32.mxu0 0.0
          %3531 = vmatmul.mubr.f32.gmra.mxu0 %v3390
          %v3532 = vpop.f32.mrf.mxu0
          %v3533 = vadd.f32 0.0, %v3532
          %v3534 = vpop.f32.mrf.mxu0
          %3535 = vmatprep.mubr.f32.mxu0 0.0
          %3536 = vmatmul.mubr.f32.gmra.mxu0 %v3391
          %v3537 = vpop.f32.mrf.mxu0
          %v3538 = vadd.f32 0.0, %v3537
          %v3539 = vpop.f32.mrf.mxu0
          %3540 = vmatprep.mubr.f32.mxu0 0.0
          %3541 = vmatmul.mubr.f32.gmra.mxu0 %v3392
          %v3542 = vpop.f32.mrf.mxu0
          %v3543 = vadd.f32 0.0, %v3542
          %v3544 = vpop.f32.mrf.mxu0
          %3545 = vmatprep.mubr.f32.mxu0 0.0
          %3546 = vmatmul.mubr.f32.gmra.mxu0 %v3393
          %v3547 = vpop.f32.mrf.mxu0
          %v3548 = vadd.f32 0.0, %v3547
          %v3549 = vpop.f32.mrf.mxu0
          %3550 = vmatprep.mubr.f32.mxu0 0.0
          %3551 = vmatmul.mubr.f32.gmra.mxu0 %v3394
          %v3552 = vpop.f32.mrf.mxu0
          %v3553 = vadd.f32 0.0, %v3552
          %v3554 = vpop.f32.mrf.mxu0
          %3555 = vmatprep.mubr.f32.mxu0 0.0
          %3556 = vmatmul.mubr.f32.gmra.mxu0 %v3395
          %v3557 = vpop.f32.mrf.mxu0
          %v3558 = vadd.f32 0.0, %v3557
          %v3559 = vpop.f32.mrf.mxu0
          %3560 = vmatprep.mubr.f32.mxu0 0.0
          %3561 = vmatmul.mubr.f32.gmra.mxu0 %v3396
          %v3562 = vpop.f32.mrf.mxu0
          %v3563 = vadd.f32 0.0, %v3562
          %v3564 = vpop.f32.mrf.mxu0
          %3565 = vmatprep.mubr.f32.mxu0 0.0
          %3566 = vmatmul.mubr.f32.gmra.mxu0 %v3397
          %v3567 = vpop.f32.mrf.mxu0
          %v3568 = vadd.f32 0.0, %v3567
          %v3569 = vpop.f32.mrf.mxu0
          %3570 = vmatprep.mubr.f32.mxu0 0.0
          %3571 = vmatmul.mubr.f32.gmra.mxu0 %v3398
          %v3572 = vpop.f32.mrf.mxu0
          %v3573 = vadd.f32 0.0, %v3572
          %v3574 = vpop.f32.mrf.mxu0
          %3575 = vmatprep.mubr.f32.mxu0 0.0
          %3576 = vmatmul.mubr.f32.gmra.mxu0 %v3399
          %v3577 = vpop.f32.mrf.mxu0
          %v3578 = vadd.f32 0.0, %v3577
          %v3579 = vpop.f32.mrf.mxu0
          %3580 = vmatprep.mubr.f32.mxu0 0.0
          %3581 = vmatmul.mubr.f32.gmra.mxu0 %v3400
          %v3582 = vpop.f32.mrf.mxu0
          %v3583 = vadd.f32 0.0, %v3582
          %v3584 = vpop.f32.mrf.mxu0
          %3585 = vmatprep.mubr.f32.mxu0 0.0
          %3586 = vmatmul.mubr.f32.gmra.mxu0 %v3401
          %v3587 = vpop.f32.mrf.mxu0
          %v3588 = vadd.f32 0.0, %v3587
          %v3589 = vpop.f32.mrf.mxu0
          %3590 = vmatprep.mubr.f32.mxu0 0.0
          %3591 = vmatmul.mubr.f32.gmra.mxu0 %v3402
          %v3592 = vpop.f32.mrf.mxu0
          %v3593 = vadd.f32 0.0, %v3592
          %v3594 = vpop.f32.mrf.mxu0
          %3595 = vmatprep.mubr.f32.mxu0 0.0
          %3596 = vmatmul.mubr.f32.gmra.mxu0 %v3403
          %v3597 = vpop.f32.mrf.mxu0
          %v3598 = vadd.f32 0.0, %v3597
          %v3599 = vpop.f32.mrf.mxu0
          %3600 = vmatprep.mubr.f32.mxu0 0.0
          %3601 = vmatmul.mubr.f32.gmra.mxu0 %v3404
          %v3602 = vpop.f32.mrf.mxu0
          %v3603 = vadd.f32 0.0, %v3602
          %v3604 = vpop.f32.mrf.mxu0
          %3605 = vmatprep.mubr.f32.mxu0 0.0
          %3606 = vmatmul.mubr.f32.gmra.mxu0 %v3405
          %v3607 = vpop.f32.mrf.mxu0
          %v3608 = vadd.f32 0.0, %v3607
          %v3609 = vpop.f32.mrf.mxu0
          %3610 = vmatprep.mubr.f32.mxu0 0.0
          %3611 = vmatmul.mubr.f32.gmra.mxu0 %v3406
          %v3612 = vpop.f32.mrf.mxu0
          %v3613 = vadd.f32 0.0, %v3612
          %v3614 = vpop.f32.mrf.mxu0
          %3615 = vmatprep.mubr.f32.mxu0 0.0
          %3616 = vmatmul.mubr.f32.gmra.mxu0 %v3407
          %v3617 = vpop.f32.mrf.mxu0
          %v3618 = vadd.f32 0.0, %v3617
          %v3619 = vpop.f32.mrf.mxu0
          %3620 = vmatprep.mubr.f32.mxu0 0.0
          %3621 = vmatmul.mubr.f32.gmra.mxu0 %v3408
          %v3622 = vpop.f32.mrf.mxu0
          %v3623 = vadd.f32 0.0, %v3622
          %v3624 = vpop.f32.mrf.mxu0
          %3625 = vmatprep.mubr.f32.mxu0 0.0
          %3626 = vmatmul.mubr.f32.gmra.mxu0 %v3409
          %v3627 = vpop.f32.mrf.mxu0
          %v3628 = vadd.f32 0.0, %v3627
          %v3629 = vpop.f32.mrf.mxu0
          %3630 = vmatprep.mubr.f32.mxu0 0.0
          %3631 = vmatmul.mubr.f32.gmra.mxu0 %v3410
          %v3632 = vpop.f32.mrf.mxu0
          %v3633 = vadd.f32 0.0, %v3632
          %v3634 = vpop.f32.mrf.mxu0
          %3635 = vdwg.mxu0
          %v3636 = vmul.f32 %v3379, %v2331
          %v3637 = vmul.f32 %v3380, %v2332
          %v3638 = vmul.f32 %v3381, %v2333
          %v3639 = vmul.f32 %v3382, %v2334
          %v3640 = vmul.f32 %v3383, %v2335
          %v3641 = vmul.f32 %v3384, %v2336
          %v3642 = vmul.f32 %v3385, %v2337
          %v3643 = vmul.f32 %v3386, %v2338
          %v3644 = vmul.f32 %v3387, %v2339
          %v3645 = vmul.f32 %v3388, %v2340
          %v3646 = vmul.f32 %v3389, %v2341
          %v3647 = vmul.f32 %v3390, %v2342
          %v3648 = vmul.f32 %v3391, %v2343
          %v3649 = vmul.f32 %v3392, %v2344
          %v3650 = vmul.f32 %v3393, %v2345
          %v3651 = vmul.f32 %v3394, %v2346
          %v3652 = vmul.f32 %v3395, %v2347
          %v3653 = vmul.f32 %v3396, %v2348
          %v3654 = vmul.f32 %v3397, %v2349
          %v3655 = vmul.f32 %v3398, %v2350
          %v3656 = vmul.f32 %v3399, %v2351
          %v3657 = vmul.f32 %v3400, %v2352
          %v3658 = vmul.f32 %v3401, %v2353
          %v3659 = vmul.f32 %v3402, %v2354
          %v3660 = vmul.f32 %v3403, %v2355
          %v3661 = vmul.f32 %v3404, %v2356
          %v3662 = vmul.f32 %v3405, %v2357
          %v3663 = vmul.f32 %v3406, %v2358
          %v3664 = vmul.f32 %v3407, %v2359
          %v3665 = vmul.f32 %v3408, %v2360
          %v3666 = vmul.f32 %v3409, %v2361
          %v3667 = vmul.f32 %v3410, %v2362
          %v3668 = vmul.f32 %v3478, %v2363
          %v3669 = vmul.f32 %v3483, %v2364
          %v3670 = vmul.f32 %v3488, %v2365
          %v3671 = vmul.f32 %v3493, %v2366
          %v3672 = vmul.f32 %v3498, %v2367
          %v3673 = vmul.f32 %v3503, %v2368
          %v3674 = vmul.f32 %v3508, %v2369
          %v3675 = vmul.f32 %v3513, %v2370
          %v3676 = vmul.f32 %v3518, %v2371
          %v3677 = vmul.f32 %v3523, %v2372
          %v3678 = vmul.f32 %v3528, %v2373
          %v3679 = vmul.f32 %v3533, %v2374
          %v3680 = vmul.f32 %v3538, %v2375
          %v3681 = vmul.f32 %v3543, %v2376
          %v3682 = vmul.f32 %v3548, %v2377
          %v3683 = vmul.f32 %v3553, %v2378
          %v3684 = vmul.f32 %v3558, %v2379
          %v3685 = vmul.f32 %v3563, %v2380
          %v3686 = vmul.f32 %v3568, %v2381
          %v3687 = vmul.f32 %v3573, %v2382
          %v3688 = vmul.f32 %v3578, %v2383
          %v3689 = vmul.f32 %v3583, %v2384
          %v3690 = vmul.f32 %v3588, %v2385
          %v3691 = vmul.f32 %v3593, %v2386
          %v3692 = vmul.f32 %v3598, %v2387
          %v3693 = vmul.f32 %v3603, %v2388
          %v3694 = vmul.f32 %v3608, %v2389
          %v3695 = vmul.f32 %v3613, %v2390
          %v3696 = vmul.f32 %v3618, %v2391
          %v3697 = vmul.f32 %v3623, %v2392
          %v3698 = vmul.f32 %v3628, %v2393
          %v3699 = vmul.f32 %v3633, %v2394
          %v3700 = vadd.f32 %v3636, %v3668
          %v3701 = vadd.f32 %v3637, %v3669
          %v3702 = vadd.f32 %v3638, %v3670
          %v3703 = vadd.f32 %v3639, %v3671
          %v3704 = vadd.f32 %v3640, %v3672
          %v3705 = vadd.f32 %v3641, %v3673
          %v3706 = vadd.f32 %v3642, %v3674
          %v3707 = vadd.f32 %v3643, %v3675
          %v3708 = vadd.f32 %v3644, %v3676
          %v3709 = vadd.f32 %v3645, %v3677
          %v3710 = vadd.f32 %v3646, %v3678
          %v3711 = vadd.f32 %v3647, %v3679
          %v3712 = vadd.f32 %v3648, %v3680
          %v3713 = vadd.f32 %v3649, %v3681
          %v3714 = vadd.f32 %v3650, %v3682
          %v3715 = vadd.f32 %v3651, %v3683
          %v3716 = vadd.f32 %v3652, %v3684
          %v3717 = vadd.f32 %v3653, %v3685
          %v3718 = vadd.f32 %v3654, %v3686
          %v3719 = vadd.f32 %v3655, %v3687
          %v3720 = vadd.f32 %v3656, %v3688
          %v3721 = vadd.f32 %v3657, %v3689
          %v3722 = vadd.f32 %v3658, %v3690
          %v3723 = vadd.f32 %v3659, %v3691
          %v3724 = vadd.f32 %v3660, %v3692
          %v3725 = vadd.f32 %v3661, %v3693
          %v3726 = vadd.f32 %v3662, %v3694
          %v3727 = vadd.f32 %v3663, %v3695
          %v3728 = vadd.f32 %v3664, %v3696
          %v3729 = vadd.f32 %v3665, %v3697
          %v3730 = vadd.f32 %v3666, %v3698
          %v3731 = vadd.f32 %v3667, %v3699
          %v3732 = vpack.c.bf16 %v3701, %v3700
          %v3733 = vpack.c.bf16 %v3703, %v3702
          %v3734 = vpack.c.bf16 %v3705, %v3704
          %v3735 = vpack.c.bf16 %v3707, %v3706
          %v3736 = vpack.c.bf16 %v3709, %v3708
          %v3737 = vpack.c.bf16 %v3711, %v3710
          %v3738 = vpack.c.bf16 %v3713, %v3712
          %v3739 = vpack.c.bf16 %v3715, %v3714
          %v3740 = vpack.c.bf16 %v3717, %v3716
          %v3741 = vpack.c.bf16 %v3719, %v3718
          %v3742 = vpack.c.bf16 %v3721, %v3720
          %v3743 = vpack.c.bf16 %v3723, %v3722
          %v3744 = vpack.c.bf16 %v3725, %v3724
          %v3745 = vpack.c.bf16 %v3727, %v3726
          %v3746 = vpack.c.bf16 %v3729, %v3728
          %v3747 = vpack.c.bf16 %v3731, %v3730
          %v3764 = vunpack.c.l.b16 %v3732
          %v3765 = vunpack.c.h.b16 %v3732
          %v3766 = vunpack.c.l.b16 %v3733
          %v3767 = vunpack.c.h.b16 %v3733
          %v3768 = vunpack.c.l.b16 %v3734
          %v3769 = vunpack.c.h.b16 %v3734
          %v3770 = vunpack.c.l.b16 %v3735
          %v3771 = vunpack.c.h.b16 %v3735
          %v3772 = vunpack.c.l.b16 %v3736
          %v3773 = vunpack.c.h.b16 %v3736
          %v3774 = vunpack.c.l.b16 %v3737
          %v3775 = vunpack.c.h.b16 %v3737
          %v3776 = vunpack.c.l.b16 %v3738
          %v3777 = vunpack.c.h.b16 %v3738
          %v3778 = vunpack.c.l.b16 %v3739
          %v3779 = vunpack.c.h.b16 %v3739
          %v3780 = vunpack.c.l.b16 %v3740
          %v3781 = vunpack.c.h.b16 %v3740
          %v3782 = vunpack.c.l.b16 %v3741
          %v3783 = vunpack.c.h.b16 %v3741
          %v3784 = vunpack.c.l.b16 %v3742
          %v3785 = vunpack.c.h.b16 %v3742
          %v3786 = vunpack.c.l.b16 %v3743
          %v3787 = vunpack.c.h.b16 %v3743
          %v3788 = vunpack.c.l.b16 %v3744
          %v3789 = vunpack.c.h.b16 %v3744
          %v3790 = vunpack.c.l.b16 %v3745
          %v3791 = vunpack.c.h.b16 %v3745
          %v3792 = vunpack.c.l.b16 %v3746
          %v3793 = vunpack.c.h.b16 %v3746
          %v3794 = vunpack.c.l.b16 %v3747
          %v3795 = vunpack.c.h.b16 %v3747
          %v3796 = vpack.c.b16 %v3764, %v3764
          %v3797 = vpack.c.b16 %v3765, %v3765
          %v3798 = vpack.c.b16 %v3766, %v3766
          %v3799 = vpack.c.b16 %v3767, %v3767
          %v3800 = vpack.c.b16 %v3768, %v3768
          %v3801 = vpack.c.b16 %v3769, %v3769
          %v3802 = vpack.c.b16 %v3770, %v3770
          %v3803 = vpack.c.b16 %v3771, %v3771
          %v3804 = vpack.c.b16 %v3772, %v3772
          %v3805 = vpack.c.b16 %v3773, %v3773
          %v3806 = vpack.c.b16 %v3774, %v3774
          %v3807 = vpack.c.b16 %v3775, %v3775
          %v3808 = vpack.c.b16 %v3776, %v3776
          %v3809 = vpack.c.b16 %v3777, %v3777
          %v3810 = vpack.c.b16 %v3778, %v3778
          %v3811 = vpack.c.b16 %v3779, %v3779
          %v3812 = vpack.c.b16 %v3780, %v3780
          %v3813 = vpack.c.b16 %v3781, %v3781
          %v3814 = vpack.c.b16 %v3782, %v3782
          %v3815 = vpack.c.b16 %v3783, %v3783
          %v3816 = vpack.c.b16 %v3784, %v3784
          %v3817 = vpack.c.b16 %v3785, %v3785
          %v3818 = vpack.c.b16 %v3786, %v3786
          %v3819 = vpack.c.b16 %v3787, %v3787
          %v3820 = vpack.c.b16 %v3788, %v3788
          %v3821 = vpack.c.b16 %v3789, %v3789
          %v3822 = vpack.c.b16 %v3790, %v3790
          %v3823 = vpack.c.b16 %v3791, %v3791
          %v3824 = vpack.c.b16 %v3792, %v3792
          %v3825 = vpack.c.b16 %v3793, %v3793
          %v3826 = vpack.c.b16 %v3794, %v3794
          %v3827 = vpack.c.b16 %v3795, %v3795
          %s3860 = scalar_lea.vmem %s751, 128 [#allocation19]
          %3861 = vst [vmem:[%s3860] sm:$0xf] %v3796
          %3862 = vst [vmem:[%s3860 + $0x4] sm:$0xf] %v3797
          %3863 = vst [vmem:[%s3860 + $0x8] sm:$0xf] %v3798
          %3864 = vst [vmem:[%s3860 + $0xc] sm:$0xf] %v3799
          %3865 = vst [vmem:[%s3860 + $0x10] sm:$0xf] %v3800
          %3866 = vst [vmem:[%s3860 + $0x14] sm:$0xf] %v3801
          %3867 = vst [vmem:[%s3860 + $0x18] sm:$0xf] %v3802
          %3868 = vst [vmem:[%s3860 + $0x1c] sm:$0xf] %v3803
          %3869 = vst [vmem:[%s3860 + $0x20] sm:$0xf] %v3804
          %3870 = vst [vmem:[%s3860 + $0x24] sm:$0xf] %v3805
          %3871 = vst [vmem:[%s3860 + $0x28] sm:$0xf] %v3806
          %3872 = vst [vmem:[%s3860 + $0x2c] sm:$0xf] %v3807
          %3873 = vst [vmem:[%s3860 + $0x30] sm:$0xf] %v3808
          %3874 = vst [vmem:[%s3860 + $0x34] sm:$0xf] %v3809
          %3875 = vst [vmem:[%s3860 + $0x38] sm:$0xf] %v3810
          %3876 = vst [vmem:[%s3860 + $0x3c] sm:$0xf] %v3811
          %3877 = vst [vmem:[%s3860 + $0x40] sm:$0xf] %v3812
          %3878 = vst [vmem:[%s3860 + $0x44] sm:$0xf] %v3813
          %3879 = vst [vmem:[%s3860 + $0x48] sm:$0xf] %v3814
          %3880 = vst [vmem:[%s3860 + $0x4c] sm:$0xf] %v3815
          %3881 = vst [vmem:[%s3860 + $0x50] sm:$0xf] %v3816
          %3882 = vst [vmem:[%s3860 + $0x54] sm:$0xf] %v3817
          %3883 = vst [vmem:[%s3860 + $0x58] sm:$0xf] %v3818
          %3884 = vst [vmem:[%s3860 + $0x5c] sm:$0xf] %v3819
          %3885 = vst [vmem:[%s3860 + $0x60] sm:$0xf] %v3820
          %3886 = vst [vmem:[%s3860 + $0x64] sm:$0xf] %v3821
          %3887 = vst [vmem:[%s3860 + $0x68] sm:$0xf] %v3822
          %3888 = vst [vmem:[%s3860 + $0x6c] sm:$0xf] %v3823
          %3889 = vst [vmem:[%s3860 + $0x70] sm:$0xf] %v3824
          %3890 = vst [vmem:[%s3860 + $0x74] sm:$0xf] %v3825
          %3891 = vst [vmem:[%s3860 + $0x78] sm:$0xf] %v3826
          %3892 = vst [vmem:[%s3860 + $0x7c] sm:$0xf] %v3827
        $region112: #{tpu_custom_call.1} parent=67 // pred_fallthru
          _
        %p3893 = scmp.ge.s32.totalorder %s49, 2
        %p3894 = scmp.lt.s32.totalorder %s49, 3
        %p3895 = pnand %p3893, %p3894
        %p3896 = pneg %p3895
        // Predicated region
        $region113: #{tpu_custom_call.1} parent=67 // pred_check
          _
        $region114: #{tpu_custom_call.1} parent=67 // pred_check_branch
          %3898 = sbr.rel (%p3895) target = $region116
        $region115: #{tpu_custom_call.1} parent=67 // pred_region
          %v3899 = vpack.c.bf16 %v2166, %v2162
          %v3900 = vpack.c.bf16 %v2176, %v2172
          %v3901 = vpack.c.bf16 %v2186, %v2182
          %v3902 = vpack.c.bf16 %v2196, %v2192
          %v3903 = vpack.c.bf16 %v2206, %v2202
          %v3904 = vpack.c.bf16 %v2216, %v2212
          %v3905 = vpack.c.bf16 %v2226, %v2222
          %v3906 = vpack.c.bf16 %v2236, %v2232
          %v3907 = vpack.c.bf16 %v2246, %v2242
          %v3908 = vpack.c.bf16 %v2256, %v2252
          %v3909 = vpack.c.bf16 %v2266, %v2262
          %v3910 = vpack.c.bf16 %v2276, %v2272
          %v3911 = vpack.c.bf16 %v2286, %v2282
          %v3912 = vpack.c.bf16 %v2296, %v2292
          %v3913 = vpack.c.bf16 %v2306, %v2302
          %v3914 = vpack.c.bf16 %v2316, %v2312
          %v3931 = vunpack.c.l.b16 %v3899
          %v3932 = vunpack.c.h.b16 %v3899
          %v3933 = vunpack.c.l.b16 %v3900
          %v3934 = vunpack.c.h.b16 %v3900
          %v3935 = vunpack.c.l.b16 %v3901
          %v3936 = vunpack.c.h.b16 %v3901
          %v3937 = vunpack.c.l.b16 %v3902
          %v3938 = vunpack.c.h.b16 %v3902
          %v3939 = vunpack.c.l.b16 %v3903
          %v3940 = vunpack.c.h.b16 %v3903
          %v3941 = vunpack.c.l.b16 %v3904
          %v3942 = vunpack.c.h.b16 %v3904
          %v3943 = vunpack.c.l.b16 %v3905
          %v3944 = vunpack.c.h.b16 %v3905
          %v3945 = vunpack.c.l.b16 %v3906
          %v3946 = vunpack.c.h.b16 %v3906
          %v3947 = vunpack.c.l.b16 %v3907
          %v3948 = vunpack.c.h.b16 %v3907
          %v3949 = vunpack.c.l.b16 %v3908
          %v3950 = vunpack.c.h.b16 %v3908
          %v3951 = vunpack.c.l.b16 %v3909
          %v3952 = vunpack.c.h.b16 %v3909
          %v3953 = vunpack.c.l.b16 %v3910
          %v3954 = vunpack.c.h.b16 %v3910
          %v3955 = vunpack.c.l.b16 %v3911
          %v3956 = vunpack.c.h.b16 %v3911
          %v3957 = vunpack.c.l.b16 %v3912
          %v3958 = vunpack.c.h.b16 %v3912
          %v3959 = vunpack.c.l.b16 %v3913
          %v3960 = vunpack.c.h.b16 %v3913
          %v3961 = vunpack.c.l.b16 %v3914
          %v3962 = vunpack.c.h.b16 %v3914
          %v3963 = vpack.c.b16 %v3931, %v3931
          %v3964 = vpack.c.b16 %v3932, %v3932
          %v3965 = vpack.c.b16 %v3933, %v3933
          %v3966 = vpack.c.b16 %v3934, %v3934
          %v3967 = vpack.c.b16 %v3935, %v3935
          %v3968 = vpack.c.b16 %v3936, %v3936
          %v3969 = vpack.c.b16 %v3937, %v3937
          %v3970 = vpack.c.b16 %v3938, %v3938
          %v3971 = vpack.c.b16 %v3939, %v3939
          %v3972 = vpack.c.b16 %v3940, %v3940
          %v3973 = vpack.c.b16 %v3941, %v3941
          %v3974 = vpack.c.b16 %v3942, %v3942
          %v3975 = vpack.c.b16 %v3943, %v3943
          %v3976 = vpack.c.b16 %v3944, %v3944
          %v3977 = vpack.c.b16 %v3945, %v3945
          %v3978 = vpack.c.b16 %v3946, %v3946
          %v3979 = vpack.c.b16 %v3947, %v3947
          %v3980 = vpack.c.b16 %v3948, %v3948
          %v3981 = vpack.c.b16 %v3949, %v3949
          %v3982 = vpack.c.b16 %v3950, %v3950
          %v3983 = vpack.c.b16 %v3951, %v3951
          %v3984 = vpack.c.b16 %v3952, %v3952
          %v3985 = vpack.c.b16 %v3953, %v3953
          %v3986 = vpack.c.b16 %v3954, %v3954
          %v3987 = vpack.c.b16 %v3955, %v3955
          %v3988 = vpack.c.b16 %v3956, %v3956
          %v3989 = vpack.c.b16 %v3957, %v3957
          %v3990 = vpack.c.b16 %v3958, %v3958
          %v3991 = vpack.c.b16 %v3959, %v3959
          %v3992 = vpack.c.b16 %v3960, %v3960
          %v3993 = vpack.c.b16 %v3961, %v3961
          %v3994 = vpack.c.b16 %v3962, %v3962
          %4027 = vst [vmem:[%s751] sm:$0xf] %v3963
          %4028 = vst [vmem:[%s751 + $0x4] sm:$0xf] %v3964
          %4029 = vst [vmem:[%s751 + $0x8] sm:$0xf] %v3965
          %4030 = vst [vmem:[%s751 + $0xc] sm:$0xf] %v3966
          %4031 = vst [vmem:[%s751 + $0x10] sm:$0xf] %v3967
          %4032 = vst [vmem:[%s751 + $0x14] sm:$0xf] %v3968
          %4033 = vst [vmem:[%s751 + $0x18] sm:$0xf] %v3969
          %4034 = vst [vmem:[%s751 + $0x1c] sm:$0xf] %v3970
          %4035 = vst [vmem:[%s751 + $0x20] sm:$0xf] %v3971
          %4036 = vst [vmem:[%s751 + $0x24] sm:$0xf] %v3972
          %4037 = vst [vmem:[%s751 + $0x28] sm:$0xf] %v3973
          %4038 = vst [vmem:[%s751 + $0x2c] sm:$0xf] %v3974
          %4039 = vst [vmem:[%s751 + $0x30] sm:$0xf] %v3975
          %4040 = vst [vmem:[%s751 + $0x34] sm:$0xf] %v3976
          %4041 = vst [vmem:[%s751 + $0x38] sm:$0xf] %v3977
          %4042 = vst [vmem:[%s751 + $0x3c] sm:$0xf] %v3978
          %4043 = vst [vmem:[%s751 + $0x40] sm:$0xf] %v3979
          %4044 = vst [vmem:[%s751 + $0x44] sm:$0xf] %v3980
          %4045 = vst [vmem:[%s751 + $0x48] sm:$0xf] %v3981
          %4046 = vst [vmem:[%s751 + $0x4c] sm:$0xf] %v3982
          %4047 = vst [vmem:[%s751 + $0x50] sm:$0xf] %v3983
          %4048 = vst [vmem:[%s751 + $0x54] sm:$0xf] %v3984
          %4049 = vst [vmem:[%s751 + $0x58] sm:$0xf] %v3985
          %4050 = vst [vmem:[%s751 + $0x5c] sm:$0xf] %v3986
          %4051 = vst [vmem:[%s751 + $0x60] sm:$0xf] %v3987
          %4052 = vst [vmem:[%s751 + $0x64] sm:$0xf] %v3988
          %4053 = vst [vmem:[%s751 + $0x68] sm:$0xf] %v3989
          %4054 = vst [vmem:[%s751 + $0x6c] sm:$0xf] %v3990
          %4055 = vst [vmem:[%s751 + $0x70] sm:$0xf] %v3991
          %4056 = vst [vmem:[%s751 + $0x74] sm:$0xf] %v3992
          %4057 = vst [vmem:[%s751 + $0x78] sm:$0xf] %v3993
          %4058 = vst [vmem:[%s751 + $0x7c] sm:$0xf] %v3994
          %v4059 = vpack.c.bf16 %v2168, %v2164
          %v4060 = vpack.c.bf16 %v2178, %v2174
          %v4061 = vpack.c.bf16 %v2188, %v2184
          %v4062 = vpack.c.bf16 %v2198, %v2194
          %v4063 = vpack.c.bf16 %v2208, %v2204
          %v4064 = vpack.c.bf16 %v2218, %v2214
          %v4065 = vpack.c.bf16 %v2228, %v2224
          %v4066 = vpack.c.bf16 %v2238, %v2234
          %v4067 = vpack.c.bf16 %v2248, %v2244
          %v4068 = vpack.c.bf16 %v2258, %v2254
          %v4069 = vpack.c.bf16 %v2268, %v2264
          %v4070 = vpack.c.bf16 %v2278, %v2274
          %v4071 = vpack.c.bf16 %v2288, %v2284
          %v4072 = vpack.c.bf16 %v2298, %v2294
          %v4073 = vpack.c.bf16 %v2308, %v2304
          %v4074 = vpack.c.bf16 %v2318, %v2314
          %v4091 = vunpack.c.l.b16 %v4059
          %v4092 = vunpack.c.h.b16 %v4059
          %v4093 = vunpack.c.l.b16 %v4060
          %v4094 = vunpack.c.h.b16 %v4060
          %v4095 = vunpack.c.l.b16 %v4061
          %v4096 = vunpack.c.h.b16 %v4061
          %v4097 = vunpack.c.l.b16 %v4062
          %v4098 = vunpack.c.h.b16 %v4062
          %v4099 = vunpack.c.l.b16 %v4063
          %v4100 = vunpack.c.h.b16 %v4063
          %v4101 = vunpack.c.l.b16 %v4064
          %v4102 = vunpack.c.h.b16 %v4064
          %v4103 = vunpack.c.l.b16 %v4065
          %v4104 = vunpack.c.h.b16 %v4065
          %v4105 = vunpack.c.l.b16 %v4066
          %v4106 = vunpack.c.h.b16 %v4066
          %v4107 = vunpack.c.l.b16 %v4067
          %v4108 = vunpack.c.h.b16 %v4067
          %v4109 = vunpack.c.l.b16 %v4068
          %v4110 = vunpack.c.h.b16 %v4068
          %v4111 = vunpack.c.l.b16 %v4069
          %v4112 = vunpack.c.h.b16 %v4069
          %v4113 = vunpack.c.l.b16 %v4070
          %v4114 = vunpack.c.h.b16 %v4070
          %v4115 = vunpack.c.l.b16 %v4071
          %v4116 = vunpack.c.h.b16 %v4071
          %v4117 = vunpack.c.l.b16 %v4072
          %v4118 = vunpack.c.h.b16 %v4072
          %v4119 = vunpack.c.l.b16 %v4073
          %v4120 = vunpack.c.h.b16 %v4073
          %v4121 = vunpack.c.l.b16 %v4074
          %v4122 = vunpack.c.h.b16 %v4074
          %v4123 = vpack.c.b16 %v4091, %v4091
          %v4124 = vpack.c.b16 %v4092, %v4092
          %v4125 = vpack.c.b16 %v4093, %v4093
          %v4126 = vpack.c.b16 %v4094, %v4094
          %v4127 = vpack.c.b16 %v4095, %v4095
          %v4128 = vpack.c.b16 %v4096, %v4096
          %v4129 = vpack.c.b16 %v4097, %v4097
          %v4130 = vpack.c.b16 %v4098, %v4098
          %v4131 = vpack.c.b16 %v4099, %v4099
          %v4132 = vpack.c.b16 %v4100, %v4100
          %v4133 = vpack.c.b16 %v4101, %v4101
          %v4134 = vpack.c.b16 %v4102, %v4102
          %v4135 = vpack.c.b16 %v4103, %v4103
          %v4136 = vpack.c.b16 %v4104, %v4104
          %v4137 = vpack.c.b16 %v4105, %v4105
          %v4138 = vpack.c.b16 %v4106, %v4106
          %v4139 = vpack.c.b16 %v4107, %v4107
          %v4140 = vpack.c.b16 %v4108, %v4108
          %v4141 = vpack.c.b16 %v4109, %v4109
          %v4142 = vpack.c.b16 %v4110, %v4110
          %v4143 = vpack.c.b16 %v4111, %v4111
          %v4144 = vpack.c.b16 %v4112, %v4112
          %v4145 = vpack.c.b16 %v4113, %v4113
          %v4146 = vpack.c.b16 %v4114, %v4114
          %v4147 = vpack.c.b16 %v4115, %v4115
          %v4148 = vpack.c.b16 %v4116, %v4116
          %v4149 = vpack.c.b16 %v4117, %v4117
          %v4150 = vpack.c.b16 %v4118, %v4118
          %v4151 = vpack.c.b16 %v4119, %v4119
          %v4152 = vpack.c.b16 %v4120, %v4120
          %v4153 = vpack.c.b16 %v4121, %v4121
          %v4154 = vpack.c.b16 %v4122, %v4122
          %s4187 = scalar_lea.vmem %s751, 128 [#allocation19]
          %4188 = vst [vmem:[%s4187] sm:$0xf] %v4123
          %4189 = vst [vmem:[%s4187 + $0x4] sm:$0xf] %v4124
          %4190 = vst [vmem:[%s4187 + $0x8] sm:$0xf] %v4125
          %4191 = vst [vmem:[%s4187 + $0xc] sm:$0xf] %v4126
          %4192 = vst [vmem:[%s4187 + $0x10] sm:$0xf] %v4127
          %4193 = vst [vmem:[%s4187 + $0x14] sm:$0xf] %v4128
          %4194 = vst [vmem:[%s4187 + $0x18] sm:$0xf] %v4129
          %4195 = vst [vmem:[%s4187 + $0x1c] sm:$0xf] %v4130
          %4196 = vst [vmem:[%s4187 + $0x20] sm:$0xf] %v4131
          %4197 = vst [vmem:[%s4187 + $0x24] sm:$0xf] %v4132
          %4198 = vst [vmem:[%s4187 + $0x28] sm:$0xf] %v4133
          %4199 = vst [vmem:[%s4187 + $0x2c] sm:$0xf] %v4134
          %4200 = vst [vmem:[%s4187 + $0x30] sm:$0xf] %v4135
          %4201 = vst [vmem:[%s4187 + $0x34] sm:$0xf] %v4136
          %4202 = vst [vmem:[%s4187 + $0x38] sm:$0xf] %v4137
          %4203 = vst [vmem:[%s4187 + $0x3c] sm:$0xf] %v4138
          %4204 = vst [vmem:[%s4187 + $0x40] sm:$0xf] %v4139
          %4205 = vst [vmem:[%s4187 + $0x44] sm:$0xf] %v4140
          %4206 = vst [vmem:[%s4187 + $0x48] sm:$0xf] %v4141
          %4207 = vst [vmem:[%s4187 + $0x4c] sm:$0xf] %v4142
          %4208 = vst [vmem:[%s4187 + $0x50] sm:$0xf] %v4143
          %4209 = vst [vmem:[%s4187 + $0x54] sm:$0xf] %v4144
          %4210 = vst [vmem:[%s4187 + $0x58] sm:$0xf] %v4145
          %4211 = vst [vmem:[%s4187 + $0x5c] sm:$0xf] %v4146
          %4212 = vst [vmem:[%s4187 + $0x60] sm:$0xf] %v4147
          %4213 = vst [vmem:[%s4187 + $0x64] sm:$0xf] %v4148
          %4214 = vst [vmem:[%s4187 + $0x68] sm:$0xf] %v4149
          %4215 = vst [vmem:[%s4187 + $0x6c] sm:$0xf] %v4150
          %4216 = vst [vmem:[%s4187 + $0x70] sm:$0xf] %v4151
          %4217 = vst [vmem:[%s4187 + $0x74] sm:$0xf] %v4152
          %4218 = vst [vmem:[%s4187 + $0x78] sm:$0xf] %v4153
          %4219 = vst [vmem:[%s4187 + $0x7c] sm:$0xf] %v4154
        $region116: #{tpu_custom_call.1} parent=67 // pred_fallthru
          _
        %p4220 = scmp.eq.s32.totalorder %s49, 3
        // Predicated region
        $region117: #{tpu_custom_call.1} parent=67 // pred_check
          %p4221 = pneg %p4220
        $region118: #{tpu_custom_call.1} parent=67 // pred_check_branch
          %4223 = sbr.rel (%p4221) target = $region120
        $region119: #{tpu_custom_call.1} parent=67 // pred_region
          %v4224 = vld [vmem:[%s11] sm:$0x3]
          %v4226 = vlaneseq
          %v4227 = vshrl.u32 %v4226, 7
          %v4228 = vsub.s32 0, %v4227
          %v4229 = vrot.slane %v4224, %v4228
          %v4230 = vlaneseq
          %v4231 = vshrl.u32 %v4230, 7
          %v4232 = vsub.s32 1, %v4231
          %v4233 = vrot.slane %v4224, %v4232
          %v4236 = vadd.f32 %v4229, 0.0
          %v4237 = vadd.f32 %v4233, 0.0
          %4238 = vst [vmem:[#allocation3] sm:$0xff] %v4236
          %4239 = vst [vmem:[#allocation3 + $0x8] sm:$0xff] %v4237
          %4240 = vst [vmem:[#allocation3 + $0x10] sm:$0xff] %v4236
          %4241 = vst [vmem:[#allocation3 + $0x18] sm:$0xff] %v4237
          %4242 = vst [vmem:[#allocation3 + $0x20] sm:$0xff] %v4236
          %4243 = vst [vmem:[#allocation3 + $0x28] sm:$0xff] %v4237
          %4244 = vst [vmem:[#allocation3 + $0x30] sm:$0xff] %v4236
          %4245 = vst [vmem:[#allocation3 + $0x38] sm:$0xff] %v4237
          %4246 = vst [vmem:[#allocation3 + $0x40] sm:$0xff] %v4236
          %4247 = vst [vmem:[#allocation3 + $0x48] sm:$0xff] %v4237
          %4248 = vst [vmem:[#allocation3 + $0x50] sm:$0xff] %v4236
          %4249 = vst [vmem:[#allocation3 + $0x58] sm:$0xff] %v4237
          %4250 = vst [vmem:[#allocation3 + $0x60] sm:$0xff] %v4236
          %4251 = vst [vmem:[#allocation3 + $0x68] sm:$0xff] %v4237
          %4252 = vst [vmem:[#allocation3 + $0x70] sm:$0xff] %v4236
          %4253 = vst [vmem:[#allocation3 + $0x78] sm:$0xff] %v4237
          %4254 = vst [vmem:[#allocation3 + $0x80] sm:$0xff] %v4236
          %4255 = vst [vmem:[#allocation3 + $0x88] sm:$0xff] %v4237
          %4256 = vst [vmem:[#allocation3 + $0x90] sm:$0xff] %v4236
          %4257 = vst [vmem:[#allocation3 + $0x98] sm:$0xff] %v4237
          %4258 = vst [vmem:[#allocation3 + $0xa0] sm:$0xff] %v4236
          %4259 = vst [vmem:[#allocation3 + $0xa8] sm:$0xff] %v4237
          %4260 = vst [vmem:[#allocation3 + $0xb0] sm:$0xff] %v4236
          %4261 = vst [vmem:[#allocation3 + $0xb8] sm:$0xff] %v4237
          %4262 = vst [vmem:[#allocation3 + $0xc0] sm:$0xff] %v4236
          %4263 = vst [vmem:[#allocation3 + $0xc8] sm:$0xff] %v4237
          %4264 = vst [vmem:[#allocation3 + $0xd0] sm:$0xff] %v4236
          %4265 = vst [vmem:[#allocation3 + $0xd8] sm:$0xff] %v4237
          %4266 = vst [vmem:[#allocation3 + $0xe0] sm:$0xff] %v4236
          %4267 = vst [vmem:[#allocation3 + $0xe8] sm:$0xff] %v4237
          %4268 = vst [vmem:[#allocation3 + $0xf0] sm:$0xff] %v4236
          %4269 = vst [vmem:[#allocation3 + $0xf8] sm:$0xff] %v4237
          %4270 = vst [vmem:[#allocation3 + $0x100] sm:$0xff] %v4236
          %4271 = vst [vmem:[#allocation3 + $0x108] sm:$0xff] %v4237
          %4272 = vst [vmem:[#allocation3 + $0x110] sm:$0xff] %v4236
          %4273 = vst [vmem:[#allocation3 + $0x118] sm:$0xff] %v4237
          %4274 = vst [vmem:[#allocation3 + $0x120] sm:$0xff] %v4236
          %4275 = vst [vmem:[#allocation3 + $0x128] sm:$0xff] %v4237
          %4276 = vst [vmem:[#allocation3 + $0x130] sm:$0xff] %v4236
          %4277 = vst [vmem:[#allocation3 + $0x138] sm:$0xff] %v4237
          %4278 = vst [vmem:[#allocation3 + $0x140] sm:$0xff] %v4236
          %4279 = vst [vmem:[#allocation3 + $0x148] sm:$0xff] %v4237
          %4280 = vst [vmem:[#allocation3 + $0x150] sm:$0xff] %v4236
          %4281 = vst [vmem:[#allocation3 + $0x158] sm:$0xff] %v4237
          %4282 = vst [vmem:[#allocation3 + $0x160] sm:$0xff] %v4236
          %4283 = vst [vmem:[#allocation3 + $0x168] sm:$0xff] %v4237
          %4284 = vst [vmem:[#allocation3 + $0x170] sm:$0xff] %v4236
          %4285 = vst [vmem:[#allocation3 + $0x178] sm:$0xff] %v4237
          %4286 = vst [vmem:[#allocation3 + $0x180] sm:$0xff] %v4236
          %4287 = vst [vmem:[#allocation3 + $0x188] sm:$0xff] %v4237
          %4288 = vst [vmem:[#allocation3 + $0x190] sm:$0xff] %v4236
          %4289 = vst [vmem:[#allocation3 + $0x198] sm:$0xff] %v4237
          %4290 = vst [vmem:[#allocation3 + $0x1a0] sm:$0xff] %v4236
          %4291 = vst [vmem:[#allocation3 + $0x1a8] sm:$0xff] %v4237
          %4292 = vst [vmem:[#allocation3 + $0x1b0] sm:$0xff] %v4236
          %4293 = vst [vmem:[#allocation3 + $0x1b8] sm:$0xff] %v4237
          %4294 = vst [vmem:[#allocation3 + $0x1c0] sm:$0xff] %v4236
          %4295 = vst [vmem:[#allocation3 + $0x1c8] sm:$0xff] %v4237
          %4296 = vst [vmem:[#allocation3 + $0x1d0] sm:$0xff] %v4236
          %4297 = vst [vmem:[#allocation3 + $0x1d8] sm:$0xff] %v4237
          %4298 = vst [vmem:[#allocation3 + $0x1e0] sm:$0xff] %v4236
          %4299 = vst [vmem:[#allocation3 + $0x1e8] sm:$0xff] %v4237
          %4300 = vst [vmem:[#allocation3 + $0x1f0] sm:$0xff] %v4236
          %4301 = vst [vmem:[#allocation3 + $0x1f8] sm:$0xff] %v4237
        $region120: #{tpu_custom_call.1} parent=67 // pred_fallthru
          _
        %p4302 = scmp.ge.s32.totalorder %s49, 3
        // Predicated region
        $region121: #{tpu_custom_call.1} parent=67 // pred_check
          %p4303 = pneg %p4302
        $region122: #{tpu_custom_call.1} parent=67 // pred_check_branch
          %4305 = sbr.rel (%p4303) target = $region124
        $region123: #{tpu_custom_call.1} parent=67 // pred_region
          %v4306 = vmul.f32 %v2162, 0.5
          %v4307 = vmul.f32 %v2164, 0.5
          %v4308 = vmul.f32 %v2166, 0.5
          %v4309 = vmul.f32 %v2168, 0.5
          %v4310 = vmul.f32 %v2172, 0.5
          %v4311 = vmul.f32 %v2174, 0.5
          %v4312 = vmul.f32 %v2176, 0.5
          %v4313 = vmul.f32 %v2178, 0.5
          %v4314 = vmul.f32 %v2182, 0.5
          %v4315 = vmul.f32 %v2184, 0.5
          %v4316 = vmul.f32 %v2186, 0.5
          %v4317 = vmul.f32 %v2188, 0.5
          %v4318 = vmul.f32 %v2192, 0.5
          %v4319 = vmul.f32 %v2194, 0.5
          %v4320 = vmul.f32 %v2196, 0.5
          %v4321 = vmul.f32 %v2198, 0.5
          %v4322 = vmul.f32 %v2202, 0.5
          %v4323 = vmul.f32 %v2204, 0.5
          %v4324 = vmul.f32 %v2206, 0.5
          %v4325 = vmul.f32 %v2208, 0.5
          %v4326 = vmul.f32 %v2212, 0.5
          %v4327 = vmul.f32 %v2214, 0.5
          %v4328 = vmul.f32 %v2216, 0.5
          %v4329 = vmul.f32 %v2218, 0.5
          %v4330 = vmul.f32 %v2222, 0.5
          %v4331 = vmul.f32 %v2224, 0.5
          %v4332 = vmul.f32 %v2226, 0.5
          %v4333 = vmul.f32 %v2228, 0.5
          %v4334 = vmul.f32 %v2232, 0.5
          %v4335 = vmul.f32 %v2234, 0.5
          %v4336 = vmul.f32 %v2236, 0.5
          %v4337 = vmul.f32 %v2238, 0.5
          %v4338 = vmul.f32 %v2242, 0.5
          %v4339 = vmul.f32 %v2244, 0.5
          %v4340 = vmul.f32 %v2246, 0.5
          %v4341 = vmul.f32 %v2248, 0.5
          %v4342 = vmul.f32 %v2252, 0.5
          %v4343 = vmul.f32 %v2254, 0.5
          %v4344 = vmul.f32 %v2256, 0.5
          %v4345 = vmul.f32 %v2258, 0.5
          %v4346 = vmul.f32 %v2262, 0.5
          %v4347 = vmul.f32 %v2264, 0.5
          %v4348 = vmul.f32 %v2266, 0.5
          %v4349 = vmul.f32 %v2268, 0.5
          %v4350 = vmul.f32 %v2272, 0.5
          %v4351 = vmul.f32 %v2274, 0.5
          %v4352 = vmul.f32 %v2276, 0.5
          %v4353 = vmul.f32 %v2278, 0.5
          %v4354 = vmul.f32 %v2282, 0.5
          %v4355 = vmul.f32 %v2284, 0.5
          %v4356 = vmul.f32 %v2286, 0.5
          %v4357 = vmul.f32 %v2288, 0.5
          %v4358 = vmul.f32 %v2292, 0.5
          %v4359 = vmul.f32 %v2294, 0.5
          %v4360 = vmul.f32 %v2296, 0.5
          %v4361 = vmul.f32 %v2298, 0.5
          %v4362 = vmul.f32 %v2302, 0.5
          %v4363 = vmul.f32 %v2304, 0.5
          %v4364 = vmul.f32 %v2306, 0.5
          %v4365 = vmul.f32 %v2308, 0.5
          %v4366 = vmul.f32 %v2312, 0.5
          %v4367 = vmul.f32 %v2314, 0.5
          %v4368 = vmul.f32 %v2316, 0.5
          %v4369 = vmul.f32 %v2318, 0.5
          %v4370 = vmul.f32 %v2162, 0.044715
          %v4371 = vmul.f32 %v2164, 0.044715
          %v4372 = vmul.f32 %v2166, 0.044715
          %v4373 = vmul.f32 %v2168, 0.044715
          %v4374 = vmul.f32 %v2172, 0.044715
          %v4375 = vmul.f32 %v2174, 0.044715
          %v4376 = vmul.f32 %v2176, 0.044715
          %v4377 = vmul.f32 %v2178, 0.044715
          %v4378 = vmul.f32 %v2182, 0.044715
          %v4379 = vmul.f32 %v2184, 0.044715
          %v4380 = vmul.f32 %v2186, 0.044715
          %v4381 = vmul.f32 %v2188, 0.044715
          %v4382 = vmul.f32 %v2192, 0.044715
          %v4383 = vmul.f32 %v2194, 0.044715
          %v4384 = vmul.f32 %v2196, 0.044715
          %v4385 = vmul.f32 %v2198, 0.044715
          %v4386 = vmul.f32 %v2202, 0.044715
          %v4387 = vmul.f32 %v2204, 0.044715
          %v4388 = vmul.f32 %v2206, 0.044715
          %v4389 = vmul.f32 %v2208, 0.044715
          %v4390 = vmul.f32 %v2212, 0.044715
          %v4391 = vmul.f32 %v2214, 0.044715
          %v4392 = vmul.f32 %v2216, 0.044715
          %v4393 = vmul.f32 %v2218, 0.044715
          %v4394 = vmul.f32 %v2222, 0.044715
          %v4395 = vmul.f32 %v2224, 0.044715
          %v4396 = vmul.f32 %v2226, 0.044715
          %v4397 = vmul.f32 %v2228, 0.044715
          %v4398 = vmul.f32 %v2232, 0.044715
          %v4399 = vmul.f32 %v2234, 0.044715
          %v4400 = vmul.f32 %v2236, 0.044715
          %v4401 = vmul.f32 %v2238, 0.044715
          %v4402 = vmul.f32 %v2242, 0.044715
          %v4403 = vmul.f32 %v2244, 0.044715
          %v4404 = vmul.f32 %v2246, 0.044715
          %v4405 = vmul.f32 %v2248, 0.044715
          %v4406 = vmul.f32 %v2252, 0.044715
          %v4407 = vmul.f32 %v2254, 0.044715
          %v4408 = vmul.f32 %v2256, 0.044715
          %v4409 = vmul.f32 %v2258, 0.044715
          %v4410 = vmul.f32 %v2262, 0.044715
          %v4411 = vmul.f32 %v2264, 0.044715
          %v4412 = vmul.f32 %v2266, 0.044715
          %v4413 = vmul.f32 %v2268, 0.044715
          %v4414 = vmul.f32 %v2272, 0.044715
          %v4415 = vmul.f32 %v2274, 0.044715
          %v4416 = vmul.f32 %v2276, 0.044715
          %v4417 = vmul.f32 %v2278, 0.044715
          %v4418 = vmul.f32 %v2282, 0.044715
          %v4419 = vmul.f32 %v2284, 0.044715
          %v4420 = vmul.f32 %v2286, 0.044715
          %v4421 = vmul.f32 %v2288, 0.044715
          %v4422 = vmul.f32 %v2292, 0.044715
          %v4423 = vmul.f32 %v2294, 0.044715
          %v4424 = vmul.f32 %v2296, 0.044715
          %v4425 = vmul.f32 %v2298, 0.044715
          %v4426 = vmul.f32 %v2302, 0.044715
          %v4427 = vmul.f32 %v2304, 0.044715
          %v4428 = vmul.f32 %v2306, 0.044715
          %v4429 = vmul.f32 %v2308, 0.044715
          %v4430 = vmul.f32 %v2312, 0.044715
          %v4431 = vmul.f32 %v2314, 0.044715
          %v4432 = vmul.f32 %v2316, 0.044715
          %v4433 = vmul.f32 %v2318, 0.044715
          %v4434 = vmul.f32 %v4370, %v2162
          %v4435 = vmul.f32 %v4371, %v2164
          %v4436 = vmul.f32 %v4372, %v2166
          %v4437 = vmul.f32 %v4373, %v2168
          %v4438 = vmul.f32 %v4374, %v2172
          %v4439 = vmul.f32 %v4375, %v2174
          %v4440 = vmul.f32 %v4376, %v2176
          %v4441 = vmul.f32 %v4377, %v2178
          %v4442 = vmul.f32 %v4378, %v2182
          %v4443 = vmul.f32 %v4379, %v2184
          %v4444 = vmul.f32 %v4380, %v2186
          %v4445 = vmul.f32 %v4381, %v2188
          %v4446 = vmul.f32 %v4382, %v2192
          %v4447 = vmul.f32 %v4383, %v2194
          %v4448 = vmul.f32 %v4384, %v2196
          %v4449 = vmul.f32 %v4385, %v2198
          %v4450 = vmul.f32 %v4386, %v2202
          %v4451 = vmul.f32 %v4387, %v2204
          %v4452 = vmul.f32 %v4388, %v2206
          %v4453 = vmul.f32 %v4389, %v2208
          %v4454 = vmul.f32 %v4390, %v2212
          %v4455 = vmul.f32 %v4391, %v2214
          %v4456 = vmul.f32 %v4392, %v2216
          %v4457 = vmul.f32 %v4393, %v2218
          %v4458 = vmul.f32 %v4394, %v2222
          %v4459 = vmul.f32 %v4395, %v2224
          %v4460 = vmul.f32 %v4396, %v2226
          %v4461 = vmul.f32 %v4397, %v2228
          %v4462 = vmul.f32 %v4398, %v2232
          %v4463 = vmul.f32 %v4399, %v2234
          %v4464 = vmul.f32 %v4400, %v2236
          %v4465 = vmul.f32 %v4401, %v2238
          %v4466 = vmul.f32 %v4402, %v2242
          %v4467 = vmul.f32 %v4403, %v2244
          %v4468 = vmul.f32 %v4404, %v2246
          %v4469 = vmul.f32 %v4405, %v2248
          %v4470 = vmul.f32 %v4406, %v2252
          %v4471 = vmul.f32 %v4407, %v2254
          %v4472 = vmul.f32 %v4408, %v2256
          %v4473 = vmul.f32 %v4409, %v2258
          %v4474 = vmul.f32 %v4410, %v2262
          %v4475 = vmul.f32 %v4411, %v2264
          %v4476 = vmul.f32 %v4412, %v2266
          %v4477 = vmul.f32 %v4413, %v2268
          %v4478 = vmul.f32 %v4414, %v2272
          %v4479 = vmul.f32 %v4415, %v2274
          %v4480 = vmul.f32 %v4416, %v2276
          %v4481 = vmul.f32 %v4417, %v2278
          %v4482 = vmul.f32 %v4418, %v2282
          %v4483 = vmul.f32 %v4419, %v2284
          %v4484 = vmul.f32 %v4420, %v2286
          %v4485 = vmul.f32 %v4421, %v2288
          %v4486 = vmul.f32 %v4422, %v2292
          %v4487 = vmul.f32 %v4423, %v2294
          %v4488 = vmul.f32 %v4424, %v2296
          %v4489 = vmul.f32 %v4425, %v2298
          %v4490 = vmul.f32 %v4426, %v2302
          %v4491 = vmul.f32 %v4427, %v2304
          %v4492 = vmul.f32 %v4428, %v2306
          %v4493 = vmul.f32 %v4429, %v2308
          %v4494 = vmul.f32 %v4430, %v2312
          %v4495 = vmul.f32 %v4431, %v2314
          %v4496 = vmul.f32 %v4432, %v2316
          %v4497 = vmul.f32 %v4433, %v2318
          %v4498 = vmul.f32 %v4434, %v2162
          %v4499 = vmul.f32 %v4435, %v2164
          %v4500 = vmul.f32 %v4436, %v2166
          %v4501 = vmul.f32 %v4437, %v2168
          %v4502 = vmul.f32 %v4438, %v2172
          %v4503 = vmul.f32 %v4439, %v2174
          %v4504 = vmul.f32 %v4440, %v2176
          %v4505 = vmul.f32 %v4441, %v2178
          %v4506 = vmul.f32 %v4442, %v2182
          %v4507 = vmul.f32 %v4443, %v2184
          %v4508 = vmul.f32 %v4444, %v2186
          %v4509 = vmul.f32 %v4445, %v2188
          %v4510 = vmul.f32 %v4446, %v2192
          %v4511 = vmul.f32 %v4447, %v2194
          %v4512 = vmul.f32 %v4448, %v2196
          %v4513 = vmul.f32 %v4449, %v2198
          %v4514 = vmul.f32 %v4450, %v2202
          %v4515 = vmul.f32 %v4451, %v2204
          %v4516 = vmul.f32 %v4452, %v2206
          %v4517 = vmul.f32 %v4453, %v2208
          %v4518 = vmul.f32 %v4454, %v2212
          %v4519 = vmul.f32 %v4455, %v2214
          %v4520 = vmul.f32 %v4456, %v2216
          %v4521 = vmul.f32 %v4457, %v2218
          %v4522 = vmul.f32 %v4458, %v2222
          %v4523 = vmul.f32 %v4459, %v2224
          %v4524 = vmul.f32 %v4460, %v2226
          %v4525 = vmul.f32 %v4461, %v2228
          %v4526 = vmul.f32 %v4462, %v2232
          %v4527 = vmul.f32 %v4463, %v2234
          %v4528 = vmul.f32 %v4464, %v2236
          %v4529 = vmul.f32 %v4465, %v2238
          %v4530 = vmul.f32 %v4466, %v2242
          %v4531 = vmul.f32 %v4467, %v2244
          %v4532 = vmul.f32 %v4468, %v2246
          %v4533 = vmul.f32 %v4469, %v2248
          %v4534 = vmul.f32 %v4470, %v2252
          %v4535 = vmul.f32 %v4471, %v2254
          %v4536 = vmul.f32 %v4472, %v2256
          %v4537 = vmul.f32 %v4473, %v2258
          %v4538 = vmul.f32 %v4474, %v2262
          %v4539 = vmul.f32 %v4475, %v2264
          %v4540 = vmul.f32 %v4476, %v2266
          %v4541 = vmul.f32 %v4477, %v2268
          %v4542 = vmul.f32 %v4478, %v2272
          %v4543 = vmul.f32 %v4479, %v2274
          %v4544 = vmul.f32 %v4480, %v2276
          %v4545 = vmul.f32 %v4481, %v2278
          %v4546 = vmul.f32 %v4482, %v2282
          %v4547 = vmul.f32 %v4483, %v2284
          %v4548 = vmul.f32 %v4484, %v2286
          %v4549 = vmul.f32 %v4485, %v2288
          %v4550 = vmul.f32 %v4486, %v2292
          %v4551 = vmul.f32 %v4487, %v2294
          %v4552 = vmul.f32 %v4488, %v2296
          %v4553 = vmul.f32 %v4489, %v2298
          %v4554 = vmul.f32 %v4490, %v2302
          %v4555 = vmul.f32 %v4491, %v2304
          %v4556 = vmul.f32 %v4492, %v2306
          %v4557 = vmul.f32 %v4493, %v2308
          %v4558 = vmul.f32 %v4494, %v2312
          %v4559 = vmul.f32 %v4495, %v2314
          %v4560 = vmul.f32 %v4496, %v2316
          %v4561 = vmul.f32 %v4497, %v2318
          %v4562 = vadd.f32 %v2162, %v4498
          %v4563 = vadd.f32 %v2164, %v4499
          %v4564 = vadd.f32 %v2166, %v4500
          %v4565 = vadd.f32 %v2168, %v4501
          %v4566 = vadd.f32 %v2172, %v4502
          %v4567 = vadd.f32 %v2174, %v4503
          %v4568 = vadd.f32 %v2176, %v4504
          %v4569 = vadd.f32 %v2178, %v4505
          %v4570 = vadd.f32 %v2182, %v4506
          %v4571 = vadd.f32 %v2184, %v4507
          %v4572 = vadd.f32 %v2186, %v4508
          %v4573 = vadd.f32 %v2188, %v4509
          %v4574 = vadd.f32 %v2192, %v4510
          %v4575 = vadd.f32 %v2194, %v4511
          %v4576 = vadd.f32 %v2196, %v4512
          %v4577 = vadd.f32 %v2198, %v4513
          %v4578 = vadd.f32 %v2202, %v4514
          %v4579 = vadd.f32 %v2204, %v4515
          %v4580 = vadd.f32 %v2206, %v4516
          %v4581 = vadd.f32 %v2208, %v4517
          %v4582 = vadd.f32 %v2212, %v4518
          %v4583 = vadd.f32 %v2214, %v4519
          %v4584 = vadd.f32 %v2216, %v4520
          %v4585 = vadd.f32 %v2218, %v4521
          %v4586 = vadd.f32 %v2222, %v4522
          %v4587 = vadd.f32 %v2224, %v4523
          %v4588 = vadd.f32 %v2226, %v4524
          %v4589 = vadd.f32 %v2228, %v4525
          %v4590 = vadd.f32 %v2232, %v4526
          %v4591 = vadd.f32 %v2234, %v4527
          %v4592 = vadd.f32 %v2236, %v4528
          %v4593 = vadd.f32 %v2238, %v4529
          %v4594 = vadd.f32 %v2242, %v4530
          %v4595 = vadd.f32 %v2244, %v4531
          %v4596 = vadd.f32 %v2246, %v4532
          %v4597 = vadd.f32 %v2248, %v4533
          %v4598 = vadd.f32 %v2252, %v4534
          %v4599 = vadd.f32 %v2254, %v4535
          %v4600 = vadd.f32 %v2256, %v4536
          %v4601 = vadd.f32 %v2258, %v4537
          %v4602 = vadd.f32 %v2262, %v4538
          %v4603 = vadd.f32 %v2264, %v4539
          %v4604 = vadd.f32 %v2266, %v4540
          %v4605 = vadd.f32 %v2268, %v4541
          %v4606 = vadd.f32 %v2272, %v4542
          %v4607 = vadd.f32 %v2274, %v4543
          %v4608 = vadd.f32 %v2276, %v4544
          %v4609 = vadd.f32 %v2278, %v4545
          %v4610 = vadd.f32 %v2282, %v4546
          %v4611 = vadd.f32 %v2284, %v4547
          %v4612 = vadd.f32 %v2286, %v4548
          %v4613 = vadd.f32 %v2288, %v4549
          %v4614 = vadd.f32 %v2292, %v4550
          %v4615 = vadd.f32 %v2294, %v4551
          %v4616 = vadd.f32 %v2296, %v4552
          %v4617 = vadd.f32 %v2298, %v4553
          %v4618 = vadd.f32 %v2302, %v4554
          %v4619 = vadd.f32 %v2304, %v4555
          %v4620 = vadd.f32 %v2306, %v4556
          %v4621 = vadd.f32 %v2308, %v4557
          %v4622 = vadd.f32 %v2312, %v4558
          %v4623 = vadd.f32 %v2314, %v4559
          %v4624 = vadd.f32 %v2316, %v4560
          %v4625 = vadd.f32 %v2318, %v4561
          %v4626 = vmul.f32 %v4562, 0.7978846
          %v4627 = vmul.f32 %v4563, 0.7978846
          %v4628 = vmul.f32 %v4564, 0.7978846
          %v4629 = vmul.f32 %v4565, 0.7978846
          %v4630 = vmul.f32 %v4566, 0.7978846
          %v4631 = vmul.f32 %v4567, 0.7978846
          %v4632 = vmul.f32 %v4568, 0.7978846
          %v4633 = vmul.f32 %v4569, 0.7978846
          %v4634 = vmul.f32 %v4570, 0.7978846
          %v4635 = vmul.f32 %v4571, 0.7978846
          %v4636 = vmul.f32 %v4572, 0.7978846
          %v4637 = vmul.f32 %v4573, 0.7978846
          %v4638 = vmul.f32 %v4574, 0.7978846
          %v4639 = vmul.f32 %v4575, 0.7978846
          %v4640 = vmul.f32 %v4576, 0.7978846
          %v4641 = vmul.f32 %v4577, 0.7978846
          %v4642 = vmul.f32 %v4578, 0.7978846
          %v4643 = vmul.f32 %v4579, 0.7978846
          %v4644 = vmul.f32 %v4580, 0.7978846
          %v4645 = vmul.f32 %v4581, 0.7978846
          %v4646 = vmul.f32 %v4582, 0.7978846
          %v4647 = vmul.f32 %v4583, 0.7978846
          %v4648 = vmul.f32 %v4584, 0.7978846
          %v4649 = vmul.f32 %v4585, 0.7978846
          %v4650 = vmul.f32 %v4586, 0.7978846
          %v4651 = vmul.f32 %v4587, 0.7978846
          %v4652 = vmul.f32 %v4588, 0.7978846
          %v4653 = vmul.f32 %v4589, 0.7978846
          %v4654 = vmul.f32 %v4590, 0.7978846
          %v4655 = vmul.f32 %v4591, 0.7978846
          %v4656 = vmul.f32 %v4592, 0.7978846
          %v4657 = vmul.f32 %v4593, 0.7978846
          %v4658 = vmul.f32 %v4594, 0.7978846
          %v4659 = vmul.f32 %v4595, 0.7978846
          %v4660 = vmul.f32 %v4596, 0.7978846
          %v4661 = vmul.f32 %v4597, 0.7978846
          %v4662 = vmul.f32 %v4598, 0.7978846
          %v4663 = vmul.f32 %v4599, 0.7978846
          %v4664 = vmul.f32 %v4600, 0.7978846
          %v4665 = vmul.f32 %v4601, 0.7978846
          %v4666 = vmul.f32 %v4602, 0.7978846
          %v4667 = vmul.f32 %v4603, 0.7978846
          %v4668 = vmul.f32 %v4604, 0.7978846
          %v4669 = vmul.f32 %v4605, 0.7978846
          %v4670 = vmul.f32 %v4606, 0.7978846
          %v4671 = vmul.f32 %v4607, 0.7978846
          %v4672 = vmul.f32 %v4608, 0.7978846
          %v4673 = vmul.f32 %v4609, 0.7978846
          %v4674 = vmul.f32 %v4610, 0.7978846
          %v4675 = vmul.f32 %v4611, 0.7978846
          %v4676 = vmul.f32 %v4612, 0.7978846
          %v4677 = vmul.f32 %v4613, 0.7978846
          %v4678 = vmul.f32 %v4614, 0.7978846
          %v4679 = vmul.f32 %v4615, 0.7978846
          %v4680 = vmul.f32 %v4616, 0.7978846
          %v4681 = vmul.f32 %v4617, 0.7978846
          %v4682 = vmul.f32 %v4618, 0.7978846
          %v4683 = vmul.f32 %v4619, 0.7978846
          %v4684 = vmul.f32 %v4620, 0.7978846
          %v4685 = vmul.f32 %v4621, 0.7978846
          %v4686 = vmul.f32 %v4622, 0.7978846
          %v4687 = vmul.f32 %v4623, 0.7978846
          %v4688 = vmul.f32 %v4624, 0.7978846
          %v4689 = vmul.f32 %v4625, 0.7978846
          %v4690 = vtanh.pop %v4626
          %v4691 = vtanh.pop %v4627
          %v4692 = vtanh.pop %v4628
          %v4693 = vtanh.pop %v4629
          %v4694 = vtanh.pop %v4630
          %v4695 = vtanh.pop %v4631
          %v4696 = vtanh.pop %v4632
          %v4697 = vtanh.pop %v4633
          %v4698 = vtanh.pop %v4634
          %v4699 = vtanh.pop %v4635
          %v4700 = vtanh.pop %v4636
          %v4701 = vtanh.pop %v4637
          %v4702 = vtanh.pop %v4638
          %v4703 = vtanh.pop %v4639
          %v4704 = vtanh.pop %v4640
          %v4705 = vtanh.pop %v4641
          %v4706 = vtanh.pop %v4642
          %v4707 = vtanh.pop %v4643
          %v4708 = vtanh.pop %v4644
          %v4709 = vtanh.pop %v4645
          %v4710 = vtanh.pop %v4646
          %v4711 = vtanh.pop %v4647
          %v4712 = vtanh.pop %v4648
          %v4713 = vtanh.pop %v4649
          %v4714 = vtanh.pop %v4650
          %v4715 = vtanh.pop %v4651
          %v4716 = vtanh.pop %v4652
          %v4717 = vtanh.pop %v4653
          %v4718 = vtanh.pop %v4654
          %v4719 = vtanh.pop %v4655
          %v4720 = vtanh.pop %v4656
          %v4721 = vtanh.pop %v4657
          %v4722 = vtanh.pop %v4658
          %v4723 = vtanh.pop %v4659
          %v4724 = vtanh.pop %v4660
          %v4725 = vtanh.pop %v4661
          %v4726 = vtanh.pop %v4662
          %v4727 = vtanh.pop %v4663
          %v4728 = vtanh.pop %v4664
          %v4729 = vtanh.pop %v4665
          %v4730 = vtanh.pop %v4666
          %v4731 = vtanh.pop %v4667
          %v4732 = vtanh.pop %v4668
          %v4733 = vtanh.pop %v4669
          %v4734 = vtanh.pop %v4670
          %v4735 = vtanh.pop %v4671
          %v4736 = vtanh.pop %v4672
          %v4737 = vtanh.pop %v4673
          %v4738 = vtanh.pop %v4674
          %v4739 = vtanh.pop %v4675
          %v4740 = vtanh.pop %v4676
          %v4741 = vtanh.pop %v4677
          %v4742 = vtanh.pop %v4678
          %v4743 = vtanh.pop %v4679
          %v4744 = vtanh.pop %v4680
          %v4745 = vtanh.pop %v4681
          %v4746 = vtanh.pop %v4682
          %v4747 = vtanh.pop %v4683
          %v4748 = vtanh.pop %v4684
          %v4749 = vtanh.pop %v4685
          %v4750 = vtanh.pop %v4686
          %v4751 = vtanh.pop %v4687
          %v4752 = vtanh.pop %v4688
          %v4753 = vtanh.pop %v4689
          %v4754 = vadd.f32 %v4690, 1.0
          %v4755 = vadd.f32 %v4691, 1.0
          %v4756 = vadd.f32 %v4692, 1.0
          %v4757 = vadd.f32 %v4693, 1.0
          %v4758 = vadd.f32 %v4694, 1.0
          %v4759 = vadd.f32 %v4695, 1.0
          %v4760 = vadd.f32 %v4696, 1.0
          %v4761 = vadd.f32 %v4697, 1.0
          %v4762 = vadd.f32 %v4698, 1.0
          %v4763 = vadd.f32 %v4699, 1.0
          %v4764 = vadd.f32 %v4700, 1.0
          %v4765 = vadd.f32 %v4701, 1.0
          %v4766 = vadd.f32 %v4702, 1.0
          %v4767 = vadd.f32 %v4703, 1.0
          %v4768 = vadd.f32 %v4704, 1.0
          %v4769 = vadd.f32 %v4705, 1.0
          %v4770 = vadd.f32 %v4706, 1.0
          %v4771 = vadd.f32 %v4707, 1.0
          %v4772 = vadd.f32 %v4708, 1.0
          %v4773 = vadd.f32 %v4709, 1.0
          %v4774 = vadd.f32 %v4710, 1.0
          %v4775 = vadd.f32 %v4711, 1.0
          %v4776 = vadd.f32 %v4712, 1.0
          %v4777 = vadd.f32 %v4713, 1.0
          %v4778 = vadd.f32 %v4714, 1.0
          %v4779 = vadd.f32 %v4715, 1.0
          %v4780 = vadd.f32 %v4716, 1.0
          %v4781 = vadd.f32 %v4717, 1.0
          %v4782 = vadd.f32 %v4718, 1.0
          %v4783 = vadd.f32 %v4719, 1.0
          %v4784 = vadd.f32 %v4720, 1.0
          %v4785 = vadd.f32 %v4721, 1.0
          %v4786 = vadd.f32 %v4722, 1.0
          %v4787 = vadd.f32 %v4723, 1.0
          %v4788 = vadd.f32 %v4724, 1.0
          %v4789 = vadd.f32 %v4725, 1.0
          %v4790 = vadd.f32 %v4726, 1.0
          %v4791 = vadd.f32 %v4727, 1.0
          %v4792 = vadd.f32 %v4728, 1.0
          %v4793 = vadd.f32 %v4729, 1.0
          %v4794 = vadd.f32 %v4730, 1.0
          %v4795 = vadd.f32 %v4731, 1.0
          %v4796 = vadd.f32 %v4732, 1.0
          %v4797 = vadd.f32 %v4733, 1.0
          %v4798 = vadd.f32 %v4734, 1.0
          %v4799 = vadd.f32 %v4735, 1.0
          %v4800 = vadd.f32 %v4736, 1.0
          %v4801 = vadd.f32 %v4737, 1.0
          %v4802 = vadd.f32 %v4738, 1.0
          %v4803 = vadd.f32 %v4739, 1.0
          %v4804 = vadd.f32 %v4740, 1.0
          %v4805 = vadd.f32 %v4741, 1.0
          %v4806 = vadd.f32 %v4742, 1.0
          %v4807 = vadd.f32 %v4743, 1.0
          %v4808 = vadd.f32 %v4744, 1.0
          %v4809 = vadd.f32 %v4745, 1.0
          %v4810 = vadd.f32 %v4746, 1.0
          %v4811 = vadd.f32 %v4747, 1.0
          %v4812 = vadd.f32 %v4748, 1.0
          %v4813 = vadd.f32 %v4749, 1.0
          %v4814 = vadd.f32 %v4750, 1.0
          %v4815 = vadd.f32 %v4751, 1.0
          %v4816 = vadd.f32 %v4752, 1.0
          %v4817 = vadd.f32 %v4753, 1.0
          %v4818 = vmul.f32 %v4306, %v4754
          %v4819 = vmul.f32 %v4307, %v4755
          %v4820 = vmul.f32 %v4308, %v4756
          %v4821 = vmul.f32 %v4309, %v4757
          %v4822 = vmul.f32 %v4310, %v4758
          %v4823 = vmul.f32 %v4311, %v4759
          %v4824 = vmul.f32 %v4312, %v4760
          %v4825 = vmul.f32 %v4313, %v4761
          %v4826 = vmul.f32 %v4314, %v4762
          %v4827 = vmul.f32 %v4315, %v4763
          %v4828 = vmul.f32 %v4316, %v4764
          %v4829 = vmul.f32 %v4317, %v4765
          %v4830 = vmul.f32 %v4318, %v4766
          %v4831 = vmul.f32 %v4319, %v4767
          %v4832 = vmul.f32 %v4320, %v4768
          %v4833 = vmul.f32 %v4321, %v4769
          %v4834 = vmul.f32 %v4322, %v4770
          %v4835 = vmul.f32 %v4323, %v4771
          %v4836 = vmul.f32 %v4324, %v4772
          %v4837 = vmul.f32 %v4325, %v4773
          %v4838 = vmul.f32 %v4326, %v4774
          %v4839 = vmul.f32 %v4327, %v4775
          %v4840 = vmul.f32 %v4328, %v4776
          %v4841 = vmul.f32 %v4329, %v4777
          %v4842 = vmul.f32 %v4330, %v4778
          %v4843 = vmul.f32 %v4331, %v4779
          %v4844 = vmul.f32 %v4332, %v4780
          %v4845 = vmul.f32 %v4333, %v4781
          %v4846 = vmul.f32 %v4334, %v4782
          %v4847 = vmul.f32 %v4335, %v4783
          %v4848 = vmul.f32 %v4336, %v4784
          %v4849 = vmul.f32 %v4337, %v4785
          %v4850 = vmul.f32 %v4338, %v4786
          %v4851 = vmul.f32 %v4339, %v4787
          %v4852 = vmul.f32 %v4340, %v4788
          %v4853 = vmul.f32 %v4341, %v4789
          %v4854 = vmul.f32 %v4342, %v4790
          %v4855 = vmul.f32 %v4343, %v4791
          %v4856 = vmul.f32 %v4344, %v4792
          %v4857 = vmul.f32 %v4345, %v4793
          %v4858 = vmul.f32 %v4346, %v4794
          %v4859 = vmul.f32 %v4347, %v4795
          %v4860 = vmul.f32 %v4348, %v4796
          %v4861 = vmul.f32 %v4349, %v4797
          %v4862 = vmul.f32 %v4350, %v4798
          %v4863 = vmul.f32 %v4351, %v4799
          %v4864 = vmul.f32 %v4352, %v4800
          %v4865 = vmul.f32 %v4353, %v4801
          %v4866 = vmul.f32 %v4354, %v4802
          %v4867 = vmul.f32 %v4355, %v4803
          %v4868 = vmul.f32 %v4356, %v4804
          %v4869 = vmul.f32 %v4357, %v4805
          %v4870 = vmul.f32 %v4358, %v4806
          %v4871 = vmul.f32 %v4359, %v4807
          %v4872 = vmul.f32 %v4360, %v4808
          %v4873 = vmul.f32 %v4361, %v4809
          %v4874 = vmul.f32 %v4362, %v4810
          %v4875 = vmul.f32 %v4363, %v4811
          %v4876 = vmul.f32 %v4364, %v4812
          %v4877 = vmul.f32 %v4365, %v4813
          %v4878 = vmul.f32 %v4366, %v4814
          %v4879 = vmul.f32 %v4367, %v4815
          %v4880 = vmul.f32 %v4368, %v4816
          %v4881 = vmul.f32 %v4369, %v4817
          %v4882 = vld [vmem:[#allocation3] sm:$0xff]
          %v4883 = vld [vmem:[#allocation3 + $0x8] sm:$0xff]
          %v4884 = vld [vmem:[#allocation3 + $0x10] sm:$0xff]
          %v4885 = vld [vmem:[#allocation3 + $0x18] sm:$0xff]
          %v4886 = vld [vmem:[#allocation3 + $0x20] sm:$0xff]
          %v4887 = vld [vmem:[#allocation3 + $0x28] sm:$0xff]
          %v4888 = vld [vmem:[#allocation3 + $0x30] sm:$0xff]
          %v4889 = vld [vmem:[#allocation3 + $0x38] sm:$0xff]
          %v4890 = vld [vmem:[#allocation3 + $0x40] sm:$0xff]
          %v4891 = vld [vmem:[#allocation3 + $0x48] sm:$0xff]
          %v4892 = vld [vmem:[#allocation3 + $0x50] sm:$0xff]
          %v4893 = vld [vmem:[#allocation3 + $0x58] sm:$0xff]
          %v4894 = vld [vmem:[#allocation3 + $0x60] sm:$0xff]
          %v4895 = vld [vmem:[#allocation3 + $0x68] sm:$0xff]
          %v4896 = vld [vmem:[#allocation3 + $0x70] sm:$0xff]
          %v4897 = vld [vmem:[#allocation3 + $0x78] sm:$0xff]
          %v4898 = vld [vmem:[#allocation3 + $0x80] sm:$0xff]
          %v4899 = vld [vmem:[#allocation3 + $0x88] sm:$0xff]
          %v4900 = vld [vmem:[#allocation3 + $0x90] sm:$0xff]
          %v4901 = vld [vmem:[#allocation3 + $0x98] sm:$0xff]
          %v4902 = vld [vmem:[#allocation3 + $0xa0] sm:$0xff]
          %v4903 = vld [vmem:[#allocation3 + $0xa8] sm:$0xff]
          %v4904 = vld [vmem:[#allocation3 + $0xb0] sm:$0xff]
          %v4905 = vld [vmem:[#allocation3 + $0xb8] sm:$0xff]
          %v4906 = vld [vmem:[#allocation3 + $0xc0] sm:$0xff]
          %v4907 = vld [vmem:[#allocation3 + $0xc8] sm:$0xff]
          %v4908 = vld [vmem:[#allocation3 + $0xd0] sm:$0xff]
          %v4909 = vld [vmem:[#allocation3 + $0xd8] sm:$0xff]
          %v4910 = vld [vmem:[#allocation3 + $0xe0] sm:$0xff]
          %v4911 = vld [vmem:[#allocation3 + $0xe8] sm:$0xff]
          %v4912 = vld [vmem:[#allocation3 + $0xf0] sm:$0xff]
          %v4913 = vld [vmem:[#allocation3 + $0xf8] sm:$0xff]
          %v4914 = vld [vmem:[#allocation3 + $0x100] sm:$0xff]
          %v4915 = vld [vmem:[#allocation3 + $0x108] sm:$0xff]
          %v4916 = vld [vmem:[#allocation3 + $0x110] sm:$0xff]
          %v4917 = vld [vmem:[#allocation3 + $0x118] sm:$0xff]
          %v4918 = vld [vmem:[#allocation3 + $0x120] sm:$0xff]
          %v4919 = vld [vmem:[#allocation3 + $0x128] sm:$0xff]
          %v4920 = vld [vmem:[#allocation3 + $0x130] sm:$0xff]
          %v4921 = vld [vmem:[#allocation3 + $0x138] sm:$0xff]
          %v4922 = vld [vmem:[#allocation3 + $0x140] sm:$0xff]
          %v4923 = vld [vmem:[#allocation3 + $0x148] sm:$0xff]
          %v4924 = vld [vmem:[#allocation3 + $0x150] sm:$0xff]
          %v4925 = vld [vmem:[#allocation3 + $0x158] sm:$0xff]
          %v4926 = vld [vmem:[#allocation3 + $0x160] sm:$0xff]
          %v4927 = vld [vmem:[#allocation3 + $0x168] sm:$0xff]
          %v4928 = vld [vmem:[#allocation3 + $0x170] sm:$0xff]
          %v4929 = vld [vmem:[#allocation3 + $0x178] sm:$0xff]
          %v4930 = vld [vmem:[#allocation3 + $0x180] sm:$0xff]
          %v4931 = vld [vmem:[#allocation3 + $0x188] sm:$0xff]
          %v4932 = vld [vmem:[#allocation3 + $0x190] sm:$0xff]
          %v4933 = vld [vmem:[#allocation3 + $0x198] sm:$0xff]
          %v4934 = vld [vmem:[#allocation3 + $0x1a0] sm:$0xff]
          %v4935 = vld [vmem:[#allocation3 + $0x1a8] sm:$0xff]
          %v4936 = vld [vmem:[#allocation3 + $0x1b0] sm:$0xff]
          %v4937 = vld [vmem:[#allocation3 + $0x1b8] sm:$0xff]
          %v4938 = vld [vmem:[#allocation3 + $0x1c0] sm:$0xff]
          %v4939 = vld [vmem:[#allocation3 + $0x1c8] sm:$0xff]
          %v4940 = vld [vmem:[#allocation3 + $0x1d0] sm:$0xff]
          %v4941 = vld [vmem:[#allocation3 + $0x1d8] sm:$0xff]
          %v4942 = vld [vmem:[#allocation3 + $0x1e0] sm:$0xff]
          %v4943 = vld [vmem:[#allocation3 + $0x1e8] sm:$0xff]
          %v4944 = vld [vmem:[#allocation3 + $0x1f0] sm:$0xff]
          %v4945 = vld [vmem:[#allocation3 + $0x1f8] sm:$0xff]
          %v4946 = vpack.c.bf16 %v4820, %v4818
          %v4947 = vpack.c.bf16 %v4821, %v4819
          %v4948 = vpack.c.bf16 %v4824, %v4822
          %v4949 = vpack.c.bf16 %v4825, %v4823
          %v4950 = vpack.c.bf16 %v4828, %v4826
          %v4951 = vpack.c.bf16 %v4829, %v4827
          %v4952 = vpack.c.bf16 %v4832, %v4830
          %v4953 = vpack.c.bf16 %v4833, %v4831
          %v4954 = vpack.c.bf16 %v4836, %v4834
          %v4955 = vpack.c.bf16 %v4837, %v4835
          %v4956 = vpack.c.bf16 %v4840, %v4838
          %v4957 = vpack.c.bf16 %v4841, %v4839
          %v4958 = vpack.c.bf16 %v4844, %v4842
          %v4959 = vpack.c.bf16 %v4845, %v4843
          %v4960 = vpack.c.bf16 %v4848, %v4846
          %v4961 = vpack.c.bf16 %v4849, %v4847
          %v4962 = vpack.c.bf16 %v4852, %v4850
          %v4963 = vpack.c.bf16 %v4853, %v4851
          %v4964 = vpack.c.bf16 %v4856, %v4854
          %v4965 = vpack.c.bf16 %v4857, %v4855
          %v4966 = vpack.c.bf16 %v4860, %v4858
          %v4967 = vpack.c.bf16 %v4861, %v4859
          %v4968 = vpack.c.bf16 %v4864, %v4862
          %v4969 = vpack.c.bf16 %v4865, %v4863
          %v4970 = vpack.c.bf16 %v4868, %v4866
          %v4971 = vpack.c.bf16 %v4869, %v4867
          %v4972 = vpack.c.bf16 %v4872, %v4870
          %v4973 = vpack.c.bf16 %v4873, %v4871
          %v4974 = vpack.c.bf16 %v4876, %v4874
          %v4975 = vpack.c.bf16 %v4877, %v4875
          %v4976 = vpack.c.bf16 %v4880, %v4878
          %v4977 = vpack.c.bf16 %v4881, %v4879
          %v4978 = vld [vmem:[%s686] sm:$0xff]
          %v4979 = vld [vmem:[%s686 + $0x8] sm:$0xff]
          %v4980 = vld [vmem:[%s686 + $0x10] sm:$0xff]
          %v4981 = vld [vmem:[%s686 + $0x18] sm:$0xff]
          %v4982 = vld [vmem:[%s686 + $0x20] sm:$0xff]
          %v4983 = vld [vmem:[%s686 + $0x28] sm:$0xff]
          %v4984 = vld [vmem:[%s686 + $0x30] sm:$0xff]
          %v4985 = vld [vmem:[%s686 + $0x38] sm:$0xff]
          %v4986 = vld [vmem:[%s686 + $0x40] sm:$0xff]
          %v4987 = vld [vmem:[%s686 + $0x48] sm:$0xff]
          %v4988 = vld [vmem:[%s686 + $0x50] sm:$0xff]
          %v4989 = vld [vmem:[%s686 + $0x58] sm:$0xff]
          %v4990 = vld [vmem:[%s686 + $0x60] sm:$0xff]
          %v4991 = vld [vmem:[%s686 + $0x68] sm:$0xff]
          %v4992 = vld [vmem:[%s686 + $0x70] sm:$0xff]
          %v4993 = vld [vmem:[%s686 + $0x78] sm:$0xff]
          %v4994 = vld [vmem:[%s686 + $0x80] sm:$0xff]
          %v4995 = vld [vmem:[%s686 + $0x88] sm:$0xff]
          %v4996 = vld [vmem:[%s686 + $0x90] sm:$0xff]
          %v4997 = vld [vmem:[%s686 + $0x98] sm:$0xff]
          %v4998 = vld [vmem:[%s686 + $0xa0] sm:$0xff]
          %v4999 = vld [vmem:[%s686 + $0xa8] sm:$0xff]
          %v5000 = vld [vmem:[%s686 + $0xb0] sm:$0xff]
          %v5001 = vld [vmem:[%s686 + $0xb8] sm:$0xff]
          %v5002 = vld [vmem:[%s686 + $0xc0] sm:$0xff]
          %v5003 = vld [vmem:[%s686 + $0xc8] sm:$0xff]
          %v5004 = vld [vmem:[%s686 + $0xd0] sm:$0xff]
          %v5005 = vld [vmem:[%s686 + $0xd8] sm:$0xff]
          %v5006 = vld [vmem:[%s686 + $0xe0] sm:$0xff]
          %v5007 = vld [vmem:[%s686 + $0xe8] sm:$0xff]
          %v5008 = vld [vmem:[%s686 + $0xf0] sm:$0xff]
          %v5009 = vld [vmem:[%s686 + $0xf8] sm:$0xff]
          %v5042 = vunpack.c.l.b16 %v4978
          %v5043 = vunpack.c.h.b16 %v4978
          %v5044 = vunpack.c.l.b16 %v4979
          %v5045 = vunpack.c.h.b16 %v4979
          %v5046 = vunpack.c.l.b16 %v4980
          %v5047 = vunpack.c.h.b16 %v4980
          %v5048 = vunpack.c.l.b16 %v4981
          %v5049 = vunpack.c.h.b16 %v4981
          %v5050 = vunpack.c.l.b16 %v4982
          %v5051 = vunpack.c.h.b16 %v4982
          %v5052 = vunpack.c.l.b16 %v4983
          %v5053 = vunpack.c.h.b16 %v4983
          %v5054 = vunpack.c.l.b16 %v4984
          %v5055 = vunpack.c.h.b16 %v4984
          %v5056 = vunpack.c.l.b16 %v4985
          %v5057 = vunpack.c.h.b16 %v4985
          %v5058 = vunpack.c.l.b16 %v4986
          %v5059 = vunpack.c.h.b16 %v4986
          %v5060 = vunpack.c.l.b16 %v4987
          %v5061 = vunpack.c.h.b16 %v4987
          %v5062 = vunpack.c.l.b16 %v4988
          %v5063 = vunpack.c.h.b16 %v4988
          %v5064 = vunpack.c.l.b16 %v4989
          %v5065 = vunpack.c.h.b16 %v4989
          %v5066 = vunpack.c.l.b16 %v4990
          %v5067 = vunpack.c.h.b16 %v4990
          %v5068 = vunpack.c.l.b16 %v4991
          %v5069 = vunpack.c.h.b16 %v4991
          %v5070 = vunpack.c.l.b16 %v4992
          %v5071 = vunpack.c.h.b16 %v4992
          %v5072 = vunpack.c.l.b16 %v4993
          %v5073 = vunpack.c.h.b16 %v4993
          %v5074 = vunpack.c.l.b16 %v4994
          %v5075 = vunpack.c.h.b16 %v4994
          %v5076 = vunpack.c.l.b16 %v4995
          %v5077 = vunpack.c.h.b16 %v4995
          %v5078 = vunpack.c.l.b16 %v4996
          %v5079 = vunpack.c.h.b16 %v4996
          %v5080 = vunpack.c.l.b16 %v4997
          %v5081 = vunpack.c.h.b16 %v4997
          %v5082 = vunpack.c.l.b16 %v4998
          %v5083 = vunpack.c.h.b16 %v4998
          %v5084 = vunpack.c.l.b16 %v4999
          %v5085 = vunpack.c.h.b16 %v4999
          %v5086 = vunpack.c.l.b16 %v5000
          %v5087 = vunpack.c.h.b16 %v5000
          %v5088 = vunpack.c.l.b16 %v5001
          %v5089 = vunpack.c.h.b16 %v5001
          %v5090 = vunpack.c.l.b16 %v5002
          %v5091 = vunpack.c.h.b16 %v5002
          %v5092 = vunpack.c.l.b16 %v5003
          %v5093 = vunpack.c.h.b16 %v5003
          %v5094 = vunpack.c.l.b16 %v5004
          %v5095 = vunpack.c.h.b16 %v5004
          %v5096 = vunpack.c.l.b16 %v5005
          %v5097 = vunpack.c.h.b16 %v5005
          %v5098 = vunpack.c.l.b16 %v5006
          %v5099 = vunpack.c.h.b16 %v5006
          %v5100 = vunpack.c.l.b16 %v5007
          %v5101 = vunpack.c.h.b16 %v5007
          %v5102 = vunpack.c.l.b16 %v5008
          %v5103 = vunpack.c.h.b16 %v5008
          %v5104 = vunpack.c.l.b16 %v5009
          %v5105 = vunpack.c.h.b16 %v5009
          %v5106 = vpack.c.b16 %v5044, %v5042
          %v5107 = vpack.c.b16 %v5045, %v5043
          %v5108 = vpack.c.b16 %v5048, %v5046
          %v5109 = vpack.c.b16 %v5049, %v5047
          %v5110 = vpack.c.b16 %v5052, %v5050
          %v5111 = vpack.c.b16 %v5053, %v5051
          %v5112 = vpack.c.b16 %v5056, %v5054
          %v5113 = vpack.c.b16 %v5057, %v5055
          %v5114 = vpack.c.b16 %v5060, %v5058
          %v5115 = vpack.c.b16 %v5061, %v5059
          %v5116 = vpack.c.b16 %v5064, %v5062
          %v5117 = vpack.c.b16 %v5065, %v5063
          %v5118 = vpack.c.b16 %v5068, %v5066
          %v5119 = vpack.c.b16 %v5069, %v5067
          %v5120 = vpack.c.b16 %v5072, %v5070
          %v5121 = vpack.c.b16 %v5073, %v5071
          %v5122 = vpack.c.b16 %v5076, %v5074
          %v5123 = vpack.c.b16 %v5077, %v5075
          %v5124 = vpack.c.b16 %v5080, %v5078
          %v5125 = vpack.c.b16 %v5081, %v5079
          %v5126 = vpack.c.b16 %v5084, %v5082
          %v5127 = vpack.c.b16 %v5085, %v5083
          %v5128 = vpack.c.b16 %v5088, %v5086
          %v5129 = vpack.c.b16 %v5089, %v5087
          %v5130 = vpack.c.b16 %v5092, %v5090
          %v5131 = vpack.c.b16 %v5093, %v5091
          %v5132 = vpack.c.b16 %v5096, %v5094
          %v5133 = vpack.c.b16 %v5097, %v5095
          %v5134 = vpack.c.b16 %v5100, %v5098
          %v5135 = vpack.c.b16 %v5101, %v5099
          %v5136 = vpack.c.b16 %v5104, %v5102
          %v5137 = vpack.c.b16 %v5105, %v5103
          %5170 = vmatprep.subr.bf16.mxu0 %v5121
          %5171 = vmatpush1.bf16.msra.mxu0 %v5120
          %5172 = vmatprep.subr.bf16.mxu0 %v5119
          %5173 = vmatpush1.bf16.msra.mxu0 %v5118
          %5174 = vmatprep.subr.bf16.mxu0 %v5117
          %5175 = vmatpush1.bf16.msra.mxu0 %v5116
          %5176 = vmatprep.subr.bf16.mxu0 %v5115
          %5177 = vmatpush1.bf16.msra.mxu0 %v5114
          %5178 = vmatprep.subr.bf16.mxu0 %v5113
          %5179 = vmatpush1.bf16.msra.mxu0 %v5112
          %5180 = vmatprep.subr.bf16.mxu0 %v5111
          %5181 = vmatpush1.bf16.msra.mxu0 %v5110
          %5182 = vmatprep.subr.bf16.mxu0 %v5109
          %5183 = vmatpush1.bf16.msra.mxu0 %v5108
          %5184 = vmatprep.subr.bf16.mxu0 %v5107
          %5185 = vmatpush1.bf16.msra.mxu0 %v5106
          %5186 = vmatprep.subr.bf16.mxu0 %v5137
          %5187 = vmatpush2.bf16.msra.mxu0 %v5136
          %5188 = vmatprep.subr.bf16.mxu0 %v5135
          %5189 = vmatpush2.bf16.msra.mxu0 %v5134
          %5190 = vmatprep.subr.bf16.mxu0 %v5133
          %5191 = vmatpush2.bf16.msra.mxu0 %v5132
          %5192 = vmatprep.subr.bf16.mxu0 %v5131
          %5193 = vmatpush2.bf16.msra.mxu0 %v5130
          %5194 = vmatprep.subr.bf16.mxu0 %v5129
          %5195 = vmatpush2.bf16.msra.mxu0 %v5128
          %5196 = vmatprep.subr.bf16.mxu0 %v5127
          %5197 = vmatpush2.bf16.msra.mxu0 %v5126
          %5198 = vmatprep.subr.bf16.mxu0 %v5125
          %5199 = vmatpush2.bf16.msra.mxu0 %v5124
          %5200 = vmatprep.subr.bf16.mxu0 %v5123
          %5201 = vmatpush2.bf16.msra.mxu0 %v5122
          %5202 = vmatprep.mubr.bf16.mxu0 %v4947
          %5203 = vmatmul.mubr.bf16.gmra.mxu0 %v4946
          %v5204 = vpop.f32.mrf.mxu0
          %v5205 = vadd.f32 0.0, %v5204
          %v5206 = vpop.f32.mrf.mxu0
          %v5207 = vadd.f32 0.0, %v5206
          %v5208 = vpop.f32.mrf.mxu0
          %v5209 = vadd.f32 0.0, %v5208
          %v5210 = vpop.f32.mrf.mxu0
          %v5211 = vadd.f32 0.0, %v5210
          %5212 = vmatprep.mubr.bf16.mxu0 %v4949
          %5213 = vmatmul.mubr.bf16.gmra.mxu0 %v4948
          %v5214 = vpop.f32.mrf.mxu0
          %v5215 = vadd.f32 0.0, %v5214
          %v5216 = vpop.f32.mrf.mxu0
          %v5217 = vadd.f32 0.0, %v5216
          %v5218 = vpop.f32.mrf.mxu0
          %v5219 = vadd.f32 0.0, %v5218
          %v5220 = vpop.f32.mrf.mxu0
          %v5221 = vadd.f32 0.0, %v5220
          %5222 = vmatprep.mubr.bf16.mxu0 %v4951
          %5223 = vmatmul.mubr.bf16.gmra.mxu0 %v4950
          %v5224 = vpop.f32.mrf.mxu0
          %v5225 = vadd.f32 0.0, %v5224
          %v5226 = vpop.f32.mrf.mxu0
          %v5227 = vadd.f32 0.0, %v5226
          %v5228 = vpop.f32.mrf.mxu0
          %v5229 = vadd.f32 0.0, %v5228
          %v5230 = vpop.f32.mrf.mxu0
          %v5231 = vadd.f32 0.0, %v5230
          %5232 = vmatprep.mubr.bf16.mxu0 %v4953
          %5233 = vmatmul.mubr.bf16.gmra.mxu0 %v4952
          %v5234 = vpop.f32.mrf.mxu0
          %v5235 = vadd.f32 0.0, %v5234
          %v5236 = vpop.f32.mrf.mxu0
          %v5237 = vadd.f32 0.0, %v5236
          %v5238 = vpop.f32.mrf.mxu0
          %v5239 = vadd.f32 0.0, %v5238
          %v5240 = vpop.f32.mrf.mxu0
          %v5241 = vadd.f32 0.0, %v5240
          %5242 = vmatprep.mubr.bf16.mxu0 %v4955
          %5243 = vmatmul.mubr.bf16.gmra.mxu0 %v4954
          %v5244 = vpop.f32.mrf.mxu0
          %v5245 = vadd.f32 0.0, %v5244
          %v5246 = vpop.f32.mrf.mxu0
          %v5247 = vadd.f32 0.0, %v5246
          %v5248 = vpop.f32.mrf.mxu0
          %v5249 = vadd.f32 0.0, %v5248
          %v5250 = vpop.f32.mrf.mxu0
          %v5251 = vadd.f32 0.0, %v5250
          %5252 = vmatprep.mubr.bf16.mxu0 %v4957
          %5253 = vmatmul.mubr.bf16.gmra.mxu0 %v4956
          %v5254 = vpop.f32.mrf.mxu0
          %v5255 = vadd.f32 0.0, %v5254
          %v5256 = vpop.f32.mrf.mxu0
          %v5257 = vadd.f32 0.0, %v5256
          %v5258 = vpop.f32.mrf.mxu0
          %v5259 = vadd.f32 0.0, %v5258
          %v5260 = vpop.f32.mrf.mxu0
          %v5261 = vadd.f32 0.0, %v5260
          %5262 = vmatprep.mubr.bf16.mxu0 %v4959
          %5263 = vmatmul.mubr.bf16.gmra.mxu0 %v4958
          %v5264 = vpop.f32.mrf.mxu0
          %v5265 = vadd.f32 0.0, %v5264
          %v5266 = vpop.f32.mrf.mxu0
          %v5267 = vadd.f32 0.0, %v5266
          %v5268 = vpop.f32.mrf.mxu0
          %v5269 = vadd.f32 0.0, %v5268
          %v5270 = vpop.f32.mrf.mxu0
          %v5271 = vadd.f32 0.0, %v5270
          %5272 = vmatprep.mubr.bf16.mxu0 %v4961
          %5273 = vmatmul.mubr.bf16.gmra.mxu0 %v4960
          %v5274 = vpop.f32.mrf.mxu0
          %v5275 = vadd.f32 0.0, %v5274
          %v5276 = vpop.f32.mrf.mxu0
          %v5277 = vadd.f32 0.0, %v5276
          %v5278 = vpop.f32.mrf.mxu0
          %v5279 = vadd.f32 0.0, %v5278
          %v5280 = vpop.f32.mrf.mxu0
          %v5281 = vadd.f32 0.0, %v5280
          %5282 = vmatprep.mubr.bf16.mxu0 %v4963
          %5283 = vmatmul.mubr.bf16.gmra.mxu0 %v4962
          %v5284 = vpop.f32.mrf.mxu0
          %v5285 = vadd.f32 0.0, %v5284
          %v5286 = vpop.f32.mrf.mxu0
          %v5287 = vadd.f32 0.0, %v5286
          %v5288 = vpop.f32.mrf.mxu0
          %v5289 = vadd.f32 0.0, %v5288
          %v5290 = vpop.f32.mrf.mxu0
          %v5291 = vadd.f32 0.0, %v5290
          %5292 = vmatprep.mubr.bf16.mxu0 %v4965
          %5293 = vmatmul.mubr.bf16.gmra.mxu0 %v4964
          %v5294 = vpop.f32.mrf.mxu0
          %v5295 = vadd.f32 0.0, %v5294
          %v5296 = vpop.f32.mrf.mxu0
          %v5297 = vadd.f32 0.0, %v5296
          %v5298 = vpop.f32.mrf.mxu0
          %v5299 = vadd.f32 0.0, %v5298
          %v5300 = vpop.f32.mrf.mxu0
          %v5301 = vadd.f32 0.0, %v5300
          %5302 = vmatprep.mubr.bf16.mxu0 %v4967
          %5303 = vmatmul.mubr.bf16.gmra.mxu0 %v4966
          %v5304 = vpop.f32.mrf.mxu0
          %v5305 = vadd.f32 0.0, %v5304
          %v5306 = vpop.f32.mrf.mxu0
          %v5307 = vadd.f32 0.0, %v5306
          %v5308 = vpop.f32.mrf.mxu0
          %v5309 = vadd.f32 0.0, %v5308
          %v5310 = vpop.f32.mrf.mxu0
          %v5311 = vadd.f32 0.0, %v5310
          %5312 = vmatprep.mubr.bf16.mxu0 %v4969
          %5313 = vmatmul.mubr.bf16.gmra.mxu0 %v4968
          %v5314 = vpop.f32.mrf.mxu0
          %v5315 = vadd.f32 0.0, %v5314
          %v5316 = vpop.f32.mrf.mxu0
          %v5317 = vadd.f32 0.0, %v5316
          %v5318 = vpop.f32.mrf.mxu0
          %v5319 = vadd.f32 0.0, %v5318
          %v5320 = vpop.f32.mrf.mxu0
          %v5321 = vadd.f32 0.0, %v5320
          %5322 = vmatprep.mubr.bf16.mxu0 %v4971
          %5323 = vmatmul.mubr.bf16.gmra.mxu0 %v4970
          %v5324 = vpop.f32.mrf.mxu0
          %v5325 = vadd.f32 0.0, %v5324
          %v5326 = vpop.f32.mrf.mxu0
          %v5327 = vadd.f32 0.0, %v5326
          %v5328 = vpop.f32.mrf.mxu0
          %v5329 = vadd.f32 0.0, %v5328
          %v5330 = vpop.f32.mrf.mxu0
          %v5331 = vadd.f32 0.0, %v5330
          %5332 = vmatprep.mubr.bf16.mxu0 %v4973
          %5333 = vmatmul.mubr.bf16.gmra.mxu0 %v4972
          %v5334 = vpop.f32.mrf.mxu0
          %v5335 = vadd.f32 0.0, %v5334
          %v5336 = vpop.f32.mrf.mxu0
          %v5337 = vadd.f32 0.0, %v5336
          %v5338 = vpop.f32.mrf.mxu0
          %v5339 = vadd.f32 0.0, %v5338
          %v5340 = vpop.f32.mrf.mxu0
          %v5341 = vadd.f32 0.0, %v5340
          %5342 = vmatprep.mubr.bf16.mxu0 %v4975
          %5343 = vmatmul.mubr.bf16.gmra.mxu0 %v4974
          %v5344 = vpop.f32.mrf.mxu0
          %v5345 = vadd.f32 0.0, %v5344
          %v5346 = vpop.f32.mrf.mxu0
          %v5347 = vadd.f32 0.0, %v5346
          %v5348 = vpop.f32.mrf.mxu0
          %v5349 = vadd.f32 0.0, %v5348
          %v5350 = vpop.f32.mrf.mxu0
          %v5351 = vadd.f32 0.0, %v5350
          %5352 = vmatprep.mubr.bf16.mxu0 %v4977
          %5353 = vmatmul.mubr.bf16.gmra.mxu0 %v4976
          %v5354 = vpop.f32.mrf.mxu0
          %v5355 = vadd.f32 0.0, %v5354
          %v5356 = vpop.f32.mrf.mxu0
          %v5357 = vadd.f32 0.0, %v5356
          %v5358 = vpop.f32.mrf.mxu0
          %v5359 = vadd.f32 0.0, %v5358
          %v5360 = vpop.f32.mrf.mxu0
          %v5361 = vadd.f32 0.0, %v5360
          %5362 = vdwg.mxu0
          %v5363 = vadd.f32 %v4882, %v5205
          %v5364 = vadd.f32 %v4883, %v5207
          %v5365 = vadd.f32 %v4884, %v5209
          %v5366 = vadd.f32 %v4885, %v5211
          %v5367 = vadd.f32 %v4886, %v5215
          %v5368 = vadd.f32 %v4887, %v5217
          %v5369 = vadd.f32 %v4888, %v5219
          %v5370 = vadd.f32 %v4889, %v5221
          %v5371 = vadd.f32 %v4890, %v5225
          %v5372 = vadd.f32 %v4891, %v5227
          %v5373 = vadd.f32 %v4892, %v5229
          %v5374 = vadd.f32 %v4893, %v5231
          %v5375 = vadd.f32 %v4894, %v5235
          %v5376 = vadd.f32 %v4895, %v5237
          %v5377 = vadd.f32 %v4896, %v5239
          %v5378 = vadd.f32 %v4897, %v5241
          %v5379 = vadd.f32 %v4898, %v5245
          %v5380 = vadd.f32 %v4899, %v5247
          %v5381 = vadd.f32 %v4900, %v5249
          %v5382 = vadd.f32 %v4901, %v5251
          %v5383 = vadd.f32 %v4902, %v5255
          %v5384 = vadd.f32 %v4903, %v5257
          %v5385 = vadd.f32 %v4904, %v5259
          %v5386 = vadd.f32 %v4905, %v5261
          %v5387 = vadd.f32 %v4906, %v5265
          %v5388 = vadd.f32 %v4907, %v5267
          %v5389 = vadd.f32 %v4908, %v5269
          %v5390 = vadd.f32 %v4909, %v5271
          %v5391 = vadd.f32 %v4910, %v5275
          %v5392 = vadd.f32 %v4911, %v5277
          %v5393 = vadd.f32 %v4912, %v5279
          %v5394 = vadd.f32 %v4913, %v5281
          %v5395 = vadd.f32 %v4914, %v5285
          %v5396 = vadd.f32 %v4915, %v5287
          %v5397 = vadd.f32 %v4916, %v5289
          %v5398 = vadd.f32 %v4917, %v5291
          %v5399 = vadd.f32 %v4918, %v5295
          %v5400 = vadd.f32 %v4919, %v5297
          %v5401 = vadd.f32 %v4920, %v5299
          %v5402 = vadd.f32 %v4921, %v5301
          %v5403 = vadd.f32 %v4922, %v5305
          %v5404 = vadd.f32 %v4923, %v5307
          %v5405 = vadd.f32 %v4924, %v5309
          %v5406 = vadd.f32 %v4925, %v5311
          %v5407 = vadd.f32 %v4926, %v5315
          %v5408 = vadd.f32 %v4927, %v5317
          %v5409 = vadd.f32 %v4928, %v5319
          %v5410 = vadd.f32 %v4929, %v5321
          %v5411 = vadd.f32 %v4930, %v5325
          %v5412 = vadd.f32 %v4931, %v5327
          %v5413 = vadd.f32 %v4932, %v5329
          %v5414 = vadd.f32 %v4933, %v5331
          %v5415 = vadd.f32 %v4934, %v5335
          %v5416 = vadd.f32 %v4935, %v5337
          %v5417 = vadd.f32 %v4936, %v5339
          %v5418 = vadd.f32 %v4937, %v5341
          %v5419 = vadd.f32 %v4938, %v5345
          %v5420 = vadd.f32 %v4939, %v5347
          %v5421 = vadd.f32 %v4940, %v5349
          %v5422 = vadd.f32 %v4941, %v5351
          %v5423 = vadd.f32 %v4942, %v5355
          %v5424 = vadd.f32 %v4943, %v5357
          %v5425 = vadd.f32 %v4944, %v5359
          %v5426 = vadd.f32 %v4945, %v5361
          %5427 = vst [vmem:[#allocation3] sm:$0xff] %v5363
          %5428 = vst [vmem:[#allocation3 + $0x8] sm:$0xff] %v5364
          %5429 = vst [vmem:[#allocation3 + $0x10] sm:$0xff] %v5365
          %5430 = vst [vmem:[#allocation3 + $0x18] sm:$0xff] %v5366
          %5431 = vst [vmem:[#allocation3 + $0x20] sm:$0xff] %v5367
          %5432 = vst [vmem:[#allocation3 + $0x28] sm:$0xff] %v5368
          %5433 = vst [vmem:[#allocation3 + $0x30] sm:$0xff] %v5369
          %5434 = vst [vmem:[#allocation3 + $0x38] sm:$0xff] %v5370
          %5435 = vst [vmem:[#allocation3 + $0x40] sm:$0xff] %v5371
          %5436 = vst [vmem:[#allocation3 + $0x48] sm:$0xff] %v5372
          %5437 = vst [vmem:[#allocation3 + $0x50] sm:$0xff] %v5373
          %5438 = vst [vmem:[#allocation3 + $0x58] sm:$0xff] %v5374
          %5439 = vst [vmem:[#allocation3 + $0x60] sm:$0xff] %v5375
          %5440 = vst [vmem:[#allocation3 + $0x68] sm:$0xff] %v5376
          %5441 = vst [vmem:[#allocation3 + $0x70] sm:$0xff] %v5377
          %5442 = vst [vmem:[#allocation3 + $0x78] sm:$0xff] %v5378
          %5443 = vst [vmem:[#allocation3 + $0x80] sm:$0xff] %v5379
          %5444 = vst [vmem:[#allocation3 + $0x88] sm:$0xff] %v5380
          %5445 = vst [vmem:[#allocation3 + $0x90] sm:$0xff] %v5381
          %5446 = vst [vmem:[#allocation3 + $0x98] sm:$0xff] %v5382
          %5447 = vst [vmem:[#allocation3 + $0xa0] sm:$0xff] %v5383
          %5448 = vst [vmem:[#allocation3 + $0xa8] sm:$0xff] %v5384
          %5449 = vst [vmem:[#allocation3 + $0xb0] sm:$0xff] %v5385
          %5450 = vst [vmem:[#allocation3 + $0xb8] sm:$0xff] %v5386
          %5451 = vst [vmem:[#allocation3 + $0xc0] sm:$0xff] %v5387
          %5452 = vst [vmem:[#allocation3 + $0xc8] sm:$0xff] %v5388
          %5453 = vst [vmem:[#allocation3 + $0xd0] sm:$0xff] %v5389
          %5454 = vst [vmem:[#allocation3 + $0xd8] sm:$0xff] %v5390
          %5455 = vst [vmem:[#allocation3 + $0xe0] sm:$0xff] %v5391
          %5456 = vst [vmem:[#allocation3 + $0xe8] sm:$0xff] %v5392
          %5457 = vst [vmem:[#allocation3 + $0xf0] sm:$0xff] %v5393
          %5458 = vst [vmem:[#allocation3 + $0xf8] sm:$0xff] %v5394
          %5459 = vst [vmem:[#allocation3 + $0x100] sm:$0xff] %v5395
          %5460 = vst [vmem:[#allocation3 + $0x108] sm:$0xff] %v5396
          %5461 = vst [vmem:[#allocation3 + $0x110] sm:$0xff] %v5397
          %5462 = vst [vmem:[#allocation3 + $0x118] sm:$0xff] %v5398
          %5463 = vst [vmem:[#allocation3 + $0x120] sm:$0xff] %v5399
          %5464 = vst [vmem:[#allocation3 + $0x128] sm:$0xff] %v5400
          %5465 = vst [vmem:[#allocation3 + $0x130] sm:$0xff] %v5401
          %5466 = vst [vmem:[#allocation3 + $0x138] sm:$0xff] %v5402
          %5467 = vst [vmem:[#allocation3 + $0x140] sm:$0xff] %v5403
          %5468 = vst [vmem:[#allocation3 + $0x148] sm:$0xff] %v5404
          %5469 = vst [vmem:[#allocation3 + $0x150] sm:$0xff] %v5405
          %5470 = vst [vmem:[#allocation3 + $0x158] sm:$0xff] %v5406
          %5471 = vst [vmem:[#allocation3 + $0x160] sm:$0xff] %v5407
          %5472 = vst [vmem:[#allocation3 + $0x168] sm:$0xff] %v5408
          %5473 = vst [vmem:[#allocation3 + $0x170] sm:$0xff] %v5409
          %5474 = vst [vmem:[#allocation3 + $0x178] sm:$0xff] %v5410
          %5475 = vst [vmem:[#allocation3 + $0x180] sm:$0xff] %v5411
          %5476 = vst [vmem:[#allocation3 + $0x188] sm:$0xff] %v5412
          %5477 = vst [vmem:[#allocation3 + $0x190] sm:$0xff] %v5413
          %5478 = vst [vmem:[#allocation3 + $0x198] sm:$0xff] %v5414
          %5479 = vst [vmem:[#allocation3 + $0x1a0] sm:$0xff] %v5415
          %5480 = vst [vmem:[#allocation3 + $0x1a8] sm:$0xff] %v5416
          %5481 = vst [vmem:[#allocation3 + $0x1b0] sm:$0xff] %v5417
          %5482 = vst [vmem:[#allocation3 + $0x1b8] sm:$0xff] %v5418
          %5483 = vst [vmem:[#allocation3 + $0x1c0] sm:$0xff] %v5419
          %5484 = vst [vmem:[#allocation3 + $0x1c8] sm:$0xff] %v5420
          %5485 = vst [vmem:[#allocation3 + $0x1d0] sm:$0xff] %v5421
          %5486 = vst [vmem:[#allocation3 + $0x1d8] sm:$0xff] %v5422
          %5487 = vst [vmem:[#allocation3 + $0x1e0] sm:$0xff] %v5423
          %5488 = vst [vmem:[#allocation3 + $0x1e8] sm:$0xff] %v5424
          %5489 = vst [vmem:[#allocation3 + $0x1f0] sm:$0xff] %v5425
          %5490 = vst [vmem:[#allocation3 + $0x1f8] sm:$0xff] %v5426
        $region124: #{tpu_custom_call.1} parent=67 // pred_fallthru
          _
        %p5491 = scmp.eq.s32.totalorder %s49, 6
        // Predicated region
        $region125: #{tpu_custom_call.1} parent=67 // pred_check
          %p5492 = pneg %p5491
        $region126: #{tpu_custom_call.1} parent=67 // pred_check_branch
          %5494 = sbr.rel (%p5492) target = $region128
        $region127: #{tpu_custom_call.1} parent=67 // pred_region
          %v5495 = vld [vmem:[#allocation3] sm:$0xff]
          %v5496 = vld [vmem:[#allocation3 + $0x8] sm:$0xff]
          %v5497 = vld [vmem:[#allocation3 + $0x10] sm:$0xff]
          %v5498 = vld [vmem:[#allocation3 + $0x18] sm:$0xff]
          %v5499 = vld [vmem:[#allocation3 + $0x20] sm:$0xff]
          %v5500 = vld [vmem:[#allocation3 + $0x28] sm:$0xff]
          %v5501 = vld [vmem:[#allocation3 + $0x30] sm:$0xff]
          %v5502 = vld [vmem:[#allocation3 + $0x38] sm:$0xff]
          %v5503 = vld [vmem:[#allocation3 + $0x40] sm:$0xff]
          %v5504 = vld [vmem:[#allocation3 + $0x48] sm:$0xff]
          %v5505 = vld [vmem:[#allocation3 + $0x50] sm:$0xff]
          %v5506 = vld [vmem:[#allocation3 + $0x58] sm:$0xff]
          %v5507 = vld [vmem:[#allocation3 + $0x60] sm:$0xff]
          %v5508 = vld [vmem:[#allocation3 + $0x68] sm:$0xff]
          %v5509 = vld [vmem:[#allocation3 + $0x70] sm:$0xff]
          %v5510 = vld [vmem:[#allocation3 + $0x78] sm:$0xff]
          %v5511 = vld [vmem:[#allocation3 + $0x80] sm:$0xff]
          %v5512 = vld [vmem:[#allocation3 + $0x88] sm:$0xff]
          %v5513 = vld [vmem:[#allocation3 + $0x90] sm:$0xff]
          %v5514 = vld [vmem:[#allocation3 + $0x98] sm:$0xff]
          %v5515 = vld [vmem:[#allocation3 + $0xa0] sm:$0xff]
          %v5516 = vld [vmem:[#allocation3 + $0xa8] sm:$0xff]
          %v5517 = vld [vmem:[#allocation3 + $0xb0] sm:$0xff]
          %v5518 = vld [vmem:[#allocation3 + $0xb8] sm:$0xff]
          %v5519 = vld [vmem:[#allocation3 + $0xc0] sm:$0xff]
          %v5520 = vld [vmem:[#allocation3 + $0xc8] sm:$0xff]
          %v5521 = vld [vmem:[#allocation3 + $0xd0] sm:$0xff]
          %v5522 = vld [vmem:[#allocation3 + $0xd8] sm:$0xff]
          %v5523 = vld [vmem:[#allocation3 + $0xe0] sm:$0xff]
          %v5524 = vld [vmem:[#allocation3 + $0xe8] sm:$0xff]
          %v5525 = vld [vmem:[#allocation3 + $0xf0] sm:$0xff]
          %v5526 = vld [vmem:[#allocation3 + $0xf8] sm:$0xff]
          %v5527 = vld [vmem:[#allocation3 + $0x100] sm:$0xff]
          %v5528 = vld [vmem:[#allocation3 + $0x108] sm:$0xff]
          %v5529 = vld [vmem:[#allocation3 + $0x110] sm:$0xff]
          %v5530 = vld [vmem:[#allocation3 + $0x118] sm:$0xff]
          %v5531 = vld [vmem:[#allocation3 + $0x120] sm:$0xff]
          %v5532 = vld [vmem:[#allocation3 + $0x128] sm:$0xff]
          %v5533 = vld [vmem:[#allocation3 + $0x130] sm:$0xff]
          %v5534 = vld [vmem:[#allocation3 + $0x138] sm:$0xff]
          %v5535 = vld [vmem:[#allocation3 + $0x140] sm:$0xff]
          %v5536 = vld [vmem:[#allocation3 + $0x148] sm:$0xff]
          %v5537 = vld [vmem:[#allocation3 + $0x150] sm:$0xff]
          %v5538 = vld [vmem:[#allocation3 + $0x158] sm:$0xff]
          %v5539 = vld [vmem:[#allocation3 + $0x160] sm:$0xff]
          %v5540 = vld [vmem:[#allocation3 + $0x168] sm:$0xff]
          %v5541 = vld [vmem:[#allocation3 + $0x170] sm:$0xff]
          %v5542 = vld [vmem:[#allocation3 + $0x178] sm:$0xff]
          %v5543 = vld [vmem:[#allocation3 + $0x180] sm:$0xff]
          %v5544 = vld [vmem:[#allocation3 + $0x188] sm:$0xff]
          %v5545 = vld [vmem:[#allocation3 + $0x190] sm:$0xff]
          %v5546 = vld [vmem:[#allocation3 + $0x198] sm:$0xff]
          %v5547 = vld [vmem:[#allocation3 + $0x1a0] sm:$0xff]
          %v5548 = vld [vmem:[#allocation3 + $0x1a8] sm:$0xff]
          %v5549 = vld [vmem:[#allocation3 + $0x1b0] sm:$0xff]
          %v5550 = vld [vmem:[#allocation3 + $0x1b8] sm:$0xff]
          %v5551 = vld [vmem:[#allocation3 + $0x1c0] sm:$0xff]
          %v5552 = vld [vmem:[#allocation3 + $0x1c8] sm:$0xff]
          %v5553 = vld [vmem:[#allocation3 + $0x1d0] sm:$0xff]
          %v5554 = vld [vmem:[#allocation3 + $0x1d8] sm:$0xff]
          %v5555 = vld [vmem:[#allocation3 + $0x1e0] sm:$0xff]
          %v5556 = vld [vmem:[#allocation3 + $0x1e8] sm:$0xff]
          %v5557 = vld [vmem:[#allocation3 + $0x1f0] sm:$0xff]
          %v5558 = vld [vmem:[#allocation3 + $0x1f8] sm:$0xff]
          %v5559 = vpack.c.bf16 %v5497, %v5495
          %v5560 = vpack.c.bf16 %v5498, %v5496
          %v5561 = vpack.c.bf16 %v5501, %v5499
          %v5562 = vpack.c.bf16 %v5502, %v5500
          %v5563 = vpack.c.bf16 %v5505, %v5503
          %v5564 = vpack.c.bf16 %v5506, %v5504
          %v5565 = vpack.c.bf16 %v5509, %v5507
          %v5566 = vpack.c.bf16 %v5510, %v5508
          %v5567 = vpack.c.bf16 %v5513, %v5511
          %v5568 = vpack.c.bf16 %v5514, %v5512
          %v5569 = vpack.c.bf16 %v5517, %v5515
          %v5570 = vpack.c.bf16 %v5518, %v5516
          %v5571 = vpack.c.bf16 %v5521, %v5519
          %v5572 = vpack.c.bf16 %v5522, %v5520
          %v5573 = vpack.c.bf16 %v5525, %v5523
          %v5574 = vpack.c.bf16 %v5526, %v5524
          %v5575 = vpack.c.bf16 %v5529, %v5527
          %v5576 = vpack.c.bf16 %v5530, %v5528
          %v5577 = vpack.c.bf16 %v5533, %v5531
          %v5578 = vpack.c.bf16 %v5534, %v5532
          %v5579 = vpack.c.bf16 %v5537, %v5535
          %v5580 = vpack.c.bf16 %v5538, %v5536
          %v5581 = vpack.c.bf16 %v5541, %v5539
          %v5582 = vpack.c.bf16 %v5542, %v5540
          %v5583 = vpack.c.bf16 %v5545, %v5543
          %v5584 = vpack.c.bf16 %v5546, %v5544
          %v5585 = vpack.c.bf16 %v5549, %v5547
          %v5586 = vpack.c.bf16 %v5550, %v5548
          %v5587 = vpack.c.bf16 %v5553, %v5551
          %v5588 = vpack.c.bf16 %v5554, %v5552
          %v5589 = vpack.c.bf16 %v5557, %v5555
          %v5590 = vpack.c.bf16 %v5558, %v5556
          %v5623 = vunpack.c.l.b16 %v5559
          %v5624 = vunpack.c.l.b16 %v5560
          %v5625 = vunpack.c.h.b16 %v5559
          %v5626 = vunpack.c.h.b16 %v5560
          %v5627 = vunpack.c.l.b16 %v5561
          %v5628 = vunpack.c.l.b16 %v5562
          %v5629 = vunpack.c.h.b16 %v5561
          %v5630 = vunpack.c.h.b16 %v5562
          %v5631 = vunpack.c.l.b16 %v5563
          %v5632 = vunpack.c.l.b16 %v5564
          %v5633 = vunpack.c.h.b16 %v5563
          %v5634 = vunpack.c.h.b16 %v5564
          %v5635 = vunpack.c.l.b16 %v5565
          %v5636 = vunpack.c.l.b16 %v5566
          %v5637 = vunpack.c.h.b16 %v5565
          %v5638 = vunpack.c.h.b16 %v5566
          %v5639 = vunpack.c.l.b16 %v5567
          %v5640 = vunpack.c.l.b16 %v5568
          %v5641 = vunpack.c.h.b16 %v5567
          %v5642 = vunpack.c.h.b16 %v5568
          %v5643 = vunpack.c.l.b16 %v5569
          %v5644 = vunpack.c.l.b16 %v5570
          %v5645 = vunpack.c.h.b16 %v5569
          %v5646 = vunpack.c.h.b16 %v5570
          %v5647 = vunpack.c.l.b16 %v5571
          %v5648 = vunpack.c.l.b16 %v5572
          %v5649 = vunpack.c.h.b16 %v5571
          %v5650 = vunpack.c.h.b16 %v5572
          %v5651 = vunpack.c.l.b16 %v5573
          %v5652 = vunpack.c.l.b16 %v5574
          %v5653 = vunpack.c.h.b16 %v5573
          %v5654 = vunpack.c.h.b16 %v5574
          %v5655 = vunpack.c.l.b16 %v5575
          %v5656 = vunpack.c.l.b16 %v5576
          %v5657 = vunpack.c.h.b16 %v5575
          %v5658 = vunpack.c.h.b16 %v5576
          %v5659 = vunpack.c.l.b16 %v5577
          %v5660 = vunpack.c.l.b16 %v5578
          %v5661 = vunpack.c.h.b16 %v5577
          %v5662 = vunpack.c.h.b16 %v5578
          %v5663 = vunpack.c.l.b16 %v5579
          %v5664 = vunpack.c.l.b16 %v5580
          %v5665 = vunpack.c.h.b16 %v5579
          %v5666 = vunpack.c.h.b16 %v5580
          %v5667 = vunpack.c.l.b16 %v5581
          %v5668 = vunpack.c.l.b16 %v5582
          %v5669 = vunpack.c.h.b16 %v5581
          %v5670 = vunpack.c.h.b16 %v5582
          %v5671 = vunpack.c.l.b16 %v5583
          %v5672 = vunpack.c.l.b16 %v5584
          %v5673 = vunpack.c.h.b16 %v5583
          %v5674 = vunpack.c.h.b16 %v5584
          %v5675 = vunpack.c.l.b16 %v5585
          %v5676 = vunpack.c.l.b16 %v5586
          %v5677 = vunpack.c.h.b16 %v5585
          %v5678 = vunpack.c.h.b16 %v5586
          %v5679 = vunpack.c.l.b16 %v5587
          %v5680 = vunpack.c.l.b16 %v5588
          %v5681 = vunpack.c.h.b16 %v5587
          %v5682 = vunpack.c.h.b16 %v5588
          %v5683 = vunpack.c.l.b16 %v5589
          %v5684 = vunpack.c.l.b16 %v5590
          %v5685 = vunpack.c.h.b16 %v5589
          %v5686 = vunpack.c.h.b16 %v5590
          %v5687 = vpack.c.b16 %v5624, %v5623
          %v5688 = vpack.c.b16 %v5626, %v5625
          %v5689 = vpack.c.b16 %v5628, %v5627
          %v5690 = vpack.c.b16 %v5630, %v5629
          %v5691 = vpack.c.b16 %v5632, %v5631
          %v5692 = vpack.c.b16 %v5634, %v5633
          %v5693 = vpack.c.b16 %v5636, %v5635
          %v5694 = vpack.c.b16 %v5638, %v5637
          %v5695 = vpack.c.b16 %v5640, %v5639
          %v5696 = vpack.c.b16 %v5642, %v5641
          %v5697 = vpack.c.b16 %v5644, %v5643
          %v5698 = vpack.c.b16 %v5646, %v5645
          %v5699 = vpack.c.b16 %v5648, %v5647
          %v5700 = vpack.c.b16 %v5650, %v5649
          %v5701 = vpack.c.b16 %v5652, %v5651
          %v5702 = vpack.c.b16 %v5654, %v5653
          %v5703 = vpack.c.b16 %v5656, %v5655
          %v5704 = vpack.c.b16 %v5658, %v5657
          %v5705 = vpack.c.b16 %v5660, %v5659
          %v5706 = vpack.c.b16 %v5662, %v5661
          %v5707 = vpack.c.b16 %v5664, %v5663
          %v5708 = vpack.c.b16 %v5666, %v5665
          %v5709 = vpack.c.b16 %v5668, %v5667
          %v5710 = vpack.c.b16 %v5670, %v5669
          %v5711 = vpack.c.b16 %v5672, %v5671
          %v5712 = vpack.c.b16 %v5674, %v5673
          %v5713 = vpack.c.b16 %v5676, %v5675
          %v5714 = vpack.c.b16 %v5678, %v5677
          %v5715 = vpack.c.b16 %v5680, %v5679
          %v5716 = vpack.c.b16 %v5682, %v5681
          %v5717 = vpack.c.b16 %v5684, %v5683
          %v5718 = vpack.c.b16 %v5686, %v5685
          %5751 = vst [vmem:[%s758] sm:$0xff] %v5687
          %5752 = vst [vmem:[%s758 + $0x8] sm:$0xff] %v5688
          %5753 = vst [vmem:[%s758 + $0x10] sm:$0xff] %v5689
          %5754 = vst [vmem:[%s758 + $0x18] sm:$0xff] %v5690
          %5755 = vst [vmem:[%s758 + $0x20] sm:$0xff] %v5691
          %5756 = vst [vmem:[%s758 + $0x28] sm:$0xff] %v5692
          %5757 = vst [vmem:[%s758 + $0x30] sm:$0xff] %v5693
          %5758 = vst [vmem:[%s758 + $0x38] sm:$0xff] %v5694
          %5759 = vst [vmem:[%s758 + $0x40] sm:$0xff] %v5695
          %5760 = vst [vmem:[%s758 + $0x48] sm:$0xff] %v5696
          %5761 = vst [vmem:[%s758 + $0x50] sm:$0xff] %v5697
          %5762 = vst [vmem:[%s758 + $0x58] sm:$0xff] %v5698
          %5763 = vst [vmem:[%s758 + $0x60] sm:$0xff] %v5699
          %5764 = vst [vmem:[%s758 + $0x68] sm:$0xff] %v5700
          %5765 = vst [vmem:[%s758 + $0x70] sm:$0xff] %v5701
          %5766 = vst [vmem:[%s758 + $0x78] sm:$0xff] %v5702
          %5767 = vst [vmem:[%s758 + $0x80] sm:$0xff] %v5703
          %5768 = vst [vmem:[%s758 + $0x88] sm:$0xff] %v5704
          %5769 = vst [vmem:[%s758 + $0x90] sm:$0xff] %v5705
          %5770 = vst [vmem:[%s758 + $0x98] sm:$0xff] %v5706
          %5771 = vst [vmem:[%s758 + $0xa0] sm:$0xff] %v5707
          %5772 = vst [vmem:[%s758 + $0xa8] sm:$0xff] %v5708
          %5773 = vst [vmem:[%s758 + $0xb0] sm:$0xff] %v5709
          %5774 = vst [vmem:[%s758 + $0xb8] sm:$0xff] %v5710
          %5775 = vst [vmem:[%s758 + $0xc0] sm:$0xff] %v5711
          %5776 = vst [vmem:[%s758 + $0xc8] sm:$0xff] %v5712
          %5777 = vst [vmem:[%s758 + $0xd0] sm:$0xff] %v5713
          %5778 = vst [vmem:[%s758 + $0xd8] sm:$0xff] %v5714
          %5779 = vst [vmem:[%s758 + $0xe0] sm:$0xff] %v5715
          %5780 = vst [vmem:[%s758 + $0xe8] sm:$0xff] %v5716
          %5781 = vst [vmem:[%s758 + $0xf0] sm:$0xff] %v5717
          %5782 = vst [vmem:[%s758 + $0xf8] sm:$0xff] %v5718
        $region128: #{tpu_custom_call.1} parent=67 // pred_fallthru
          _
        %s5783 = sand.u32 %s377, 1
        %s5784 = scalar_lea.sflag [#allocation6], %s5783
        %s5785 = sand.u32 %s377, 1
        %s5786 = smul.addr %s5785, 256
        %s5787 = scalar_lea.vmem [#allocation19], %s5786
        %s5788 = sand.u32 %s405, 1
        %s5789 = scalar_lea.sflag [#allocation21], %s5788
        %s5790 = sand.u32 %s405, 1
        %s5791 = smul.addr %s5790, 256
        %s5792 = scalar_lea.vmem [#allocation20], %s5791
        // Predicated region
        $region129: #{tpu_custom_call.1} parent=67 // pred_check
          %p5793 = pneg %p387
        $region130: #{tpu_custom_call.1} parent=67 // pred_check_branch
          %5795 = sbr.rel (%p5793) target = $region132
        $region131: #{tpu_custom_call.1} parent=67 // pred_region
          %p5796 = scmp.lt.s32.totalorder %s49, 2
          %s5797 = scalar_select %p5796, %s49, 2
          %s5798 = smul.u32 2, %s5797
          %s5799 = smul.u32 32, %s48
          %s5801 = ssub.s32 4096, 4096
          %5802 = vsyncadd %s5784, %s5801
          %s5803 = smul.addr %s5798, 32
          %s5804 = sadd.s32 %s5799, %s5803
          %s5805 = smul.addr %s47, 192
          %s5806 = sadd.s32 %s5804, %s5805
          %s5807 = smul.addr %s5806, 64
          %s5808 = scalar_lea.hbm %s12, %s5807
          %s5809 = sshll.u32 %s5787, 4
          %s5810 = int_to_ptr.vmem [resolvable:$true] %s5809
          %5815 = dma.vmem_to_hbm [thread:$0]  %s5810, 4096, %s5808, %s5784, 64, 64, 4
        $region132: #{tpu_custom_call.1} parent=67 // pred_fallthru
          _
        // Predicated region
        $region133: #{tpu_custom_call.1} parent=67 // pred_check
          %p5816 = pneg %p415
        $region134: #{tpu_custom_call.1} parent=67 // pred_check_branch
          %5818 = sbr.rel (%p5816) target = $region136
        $region135: #{tpu_custom_call.1} parent=67 // pred_region
          %s5819 = smul.u32 32, %s48
          %s5821 = ssub.s32 4096, 4096
          %5822 = vsyncadd %s5789, %s5821
          %s5823 = smul.addr %s5819, 2
          %s5824 = smul.addr %s47, 64
          %s5825 = sadd.s32 %s5823, %s5824
          %s5826 = smul.addr %s5825, 64
          %s5827 = scalar_lea.hbm %s13, %s5826
          %s5828 = sshll.u32 %s5792, 4
          %s5829 = int_to_ptr.vmem [resolvable:$true] %s5828
          %5834 = dma.vmem_to_hbm [thread:$0]  %s5829, 4096, %s5827, %s5789, 128, 128, 8
        $region136: #{tpu_custom_call.1} parent=67 // pred_fallthru
          _
      $region68: #{tpu_custom_call.1} parent=5 // pred_fallthru
        _
      %p5835 = scmp.le.s32.totalorder 2, %s37
      // Predicated region
      $region137: #{tpu_custom_call.1} parent=5 // pred_check
        %p5836 = pneg %p5835
      $region138: #{tpu_custom_call.1} parent=5 // pred_check_branch
        %5838 = sbr.rel (%p5836) target = $region140
      $region139: #{tpu_custom_call.1} parent=5 // pred_region
        %s5839 = ssub.s32 %s37, 2
        // Predicated region
        $region141: #{tpu_custom_call.1} parent=139 // pred_check
          %p5840 = pneg %p393
        $region142: #{tpu_custom_call.1} parent=139 // pred_check_branch
          %5842 = sbr.rel (%p5840) target = $region144
        $region143: #{tpu_custom_call.1} parent=139 // pred_region
          %s5843 = sand.u32 %s378, 1
          %s5844 = scalar_lea.sflag [#allocation6], %s5843
          %s5845 = sand.u32 %s378, 1
          %s5846 = smul.addr %s5845, 256
          %s5847 = scalar_lea.vmem [#allocation19], %s5846
          %5848 = dma.done %s5844, 4096
        $region144: #{tpu_custom_call.1} parent=139 // pred_fallthru
          _
        // Predicated region
        $region145: #{tpu_custom_call.1} parent=139 // pred_check
          %p5849 = pneg %p421
        $region146: #{tpu_custom_call.1} parent=139 // pred_check_branch
          %5851 = sbr.rel (%p5849) target = $region148
        $region147: #{tpu_custom_call.1} parent=139 // pred_region
          %s5852 = sand.u32 %s406, 1
          %s5853 = scalar_lea.sflag [#allocation21], %s5852
          %s5854 = sand.u32 %s406, 1
          %s5855 = smul.addr %s5854, 256
          %s5856 = scalar_lea.vmem [#allocation20], %s5855
          %5857 = dma.done %s5853, 4096
        $region148: #{tpu_custom_call.1} parent=139 // pred_fallthru
          _
      $region140: #{tpu_custom_call.1} parent=5 // pred_fallthru
        _
    $region6: #{tpu_custom_call.1} parent=1 // loop_footer
      %s41 = sadd.s32 1, %s37
    $region7: #{tpu_custom_call.1} parent=1 // loop_footer_branch
      %36 = sbr.rel target = $region3
    $region8: #{tpu_custom_call.1} parent=1 // loop_exit
      _
    %5858 = vsyncpa [#allocation5], 1
    %s5859 = scalar_lea.sflag [#allocation5], 1
    %5860 = vsyncpa %s5859, 1
    %5861 = vsyncpa [#allocation8], 1
    %s5862 = scalar_lea.sflag [#allocation8], 1
    %5863 = vsyncpa %s5862, 1
    %5864 = vsyncpa [#allocation11], 1
    %s5865 = scalar_lea.sflag [#allocation11], 1
    %5866 = vsyncpa %s5865, 1
    %5867 = vsyncpa [#allocation14], 1
    %5868 = vsyncpa [#allocation17], 1
    %5869 = vsyncpa [#allocation6], 1
    %s5870 = scalar_lea.sflag [#allocation6], 1
    %5871 = vsyncpa %s5870, 1
    %5872 = vsyncpa [#allocation21], 1
    %s5873 = scalar_lea.sflag [#allocation21], 1
    %5874 = vsyncpa %s5873, 1

</llo_original>
